<compile_context>
chip_gen: v7x
topology: tpu7x:2x2x1
jax: 0.10.0
libtpu: 0.0.40
codegen_flags: <defaults>
</compile_context>

<pallas_src>
import functools

import jax
import jax.numpy as jnp
from jax.experimental import pallas as pl
from jax.experimental.pallas import tpu as pltpu

NEG_SLOPE = 0.01
LANE = 128
SUBLANE = 8


def _round_up(n, m):
    return ((n + m - 1) // m) * m


def _vmem_capacity_bytes(default=64 * 1024 * 1024):
    try:
        return int(pltpu.get_tpu_info().vmem_capacity_bytes)
    except Exception:
        return default


# --------------------------------------------------------------------------- #
# Kernel
# --------------------------------------------------------------------------- #
def mlp_kernel(x_ref, w0_ref, w1_ref, w2_ref, w3_ref, w4_ref, b_ref, out_ref,
               *, out_dims):
    """Fused MLP: five (h @ W + b) -> LeakyReLU stages.

    x_ref   : (TB, Din)            input dtype (cast to bf16 in-kernel)
    w*_ref  : (din, dout_pad)      bf16, out-features zero padded to 128 mult.
    b_ref   : (8, Dmax)            f32, row i = bias of layer i (zero padded)
    out_ref : (TB, Dout_pad)       f32
    """
    w_refs = (w0_ref, w1_ref, w2_ref, w3_ref, w4_ref)
    b_all = b_ref[...]                        # f32, lane-dense, loaded once
    h = x_ref[...].astype(jnp.bfloat16)       # in-kernel cast (MXU operand)
    for i, w_ref in enumerate(w_refs):
        d = out_dims[i]                       # static python int, multiple of 128
        acc = jnp.dot(h, w_ref[...], preferred_element_type=jnp.float32)
        acc = acc + b_all[i, :d][None, :]     # f32 bias add
        acc = jnp.where(acc > 0, acc, NEG_SLOPE * acc)   # LeakyReLU (VPU, f32)
        if i + 1 < len(w_refs):
            h = acc.astype(jnp.bfloat16)      # keep MXU operands bf16
        else:
            out_ref[...] = acc.astype(out_ref.dtype)


# --------------------------------------------------------------------------- #
# One-time parameter preparation (off the per-call hot path)
# --------------------------------------------------------------------------- #
def prepare_params(params):
    """Pad out-features to multiples of 128, cast weights to bf16, pack biases.

    Layer-0 rows stay at in_features (x is fed un-padded); layers >=1 get zero
    rows so they line up with the padded hidden width of the previous layer.
    Returns (padded_weights_tuple, bias_block).
    """
    padded_weights, bias_rows, out_dims = [], [], []
    prev = int(params[0][0].shape[0])                 # in_features
    for (w, b) in params:
        din, dout = int(w.shape[0]), int(w.shape[1])
        dout_pad = _round_up(dout, LANE)
        wp = jnp.zeros((prev, dout_pad), jnp.float32)
        wp = wp.at[:din, :dout].set(w.astype(jnp.float32))
        padded_weights.append(wp.astype(jnp.bfloat16))
        bias_rows.append(
            jnp.zeros((dout_pad,), jnp.float32).at[:dout].set(b.astype(jnp.float32)))
        out_dims.append(dout_pad)
        prev = dout_pad

    dmax = max(out_dims)
    bias_block = jnp.zeros((SUBLANE, dmax), jnp.float32)
    for i, bp in enumerate(bias_rows):
        bias_block = bias_block.at[i, : bp.shape[0]].set(bp)
    return tuple(padded_weights), bias_block


# --------------------------------------------------------------------------- #
# Forward wrapper
# --------------------------------------------------------------------------- #
def baselinemlp_forward(x, padded_weights, bias_block, *, output_size,
                        batch_tile=None, single_buffer_weights=True):
    """Fused MLP forward. Returns (y, y, y, y, y) like the torch module."""
    B, in_features = x.shape
    assert int(padded_weights[0].shape[0]) == in_features, "x / W0 mismatch"
    out_dims = tuple(int(w.shape[1]) for w in padded_weights)
    dout_final = out_dims[-1]

    # --- generation-aware tile / VMEM choices --------------------------------
    cap = _vmem_capacity_bytes()
    if batch_tile is None:
        batch_tile = 512 if cap >= 100 * 1024 * 1024 else 256   # v5e/v6e vs v7x

    # >= 2 grid programs when possible (v7x megacore), bt multiple of 8,
    # no batch padding (cdiv grid; last partial tile is masked on store).
    bt = min(batch_tile, _round_up(pl.cdiv(B, 2), SUBLANE))
    bt = max(SUBLANE, _round_up(bt, SUBLANE))
    grid = (pl.cdiv(B, bt),)

    x_itemsize = jnp.dtype(x.dtype).itemsize
    w_bytes = sum(w.size * jnp.dtype(w.dtype).itemsize for w in padded_weights)
    b_bytes = bias_block.size * jnp.dtype(bias_block.dtype).itemsize
    x_tile_bytes = bt * in_features * x_itemsize
    out_tile_bytes = bt * dout_final * 4
    weight_copies = 1 if single_buffer_weights else 2
    needed = (2 * x_tile_bytes + 2 * out_tile_bytes
              + weight_copies * (w_bytes + b_bytes) + 4 * 1024 * 1024)
    vmem_limit = int(max(16 * 1024 * 1024, min(needed, int(0.9 * cap))))

    # --- BlockSpecs -----------------------------------------------------------
    def resident_spec(arr):
        # Grid-invariant operand: single-buffer it (double-buffering only burns VMEM).
        if single_buffer_weights:
            return pl.BlockSpec(arr.shape, lambda i: (0, 0),
                                pipeline_mode=pl.Buffered(1))
        return pl.BlockSpec(arr.shape, lambda i: (0, 0))

    x_spec = pl.BlockSpec((bt, in_features), lambda i: (i, 0))
    out_spec = pl.BlockSpec((bt, dout_final), lambda i: (i, 0))

    flops = 2 * B * sum(w.shape[0] * w.shape[1] for w in padded_weights)
    bytes_accessed = (B * in_features * x_itemsize + w_bytes + b_bytes
                      + B * dout_final * 4)

    kernel = functools.partial(mlp_kernel, out_dims=out_dims)

    out = pl.pallas_call(
        kernel,
        out_shape=jax.ShapeDtypeStruct((B, dout_final), jnp.float32),
        grid_spec=pl.GridSpec(
            grid=grid,
            in_specs=[x_spec]
                     + [resident_spec(w) for w in padded_weights]
                     + [resident_spec(bias_block)],
            out_specs=out_spec,
        ),
        compiler_params=pltpu.CompilerParams(
            dimension_semantics=("parallel",),
            vmem_limit_bytes=vmem_limit,
        ),
        cost_estimate=pl.CostEstimate(
            flops=flops, transcendentals=0, bytes_accessed=bytes_accessed),
    )(x, *padded_weights, bias_block)

    y = out[:, :output_size]
    return (y, y, y, y, y)


# --------------------------------------------------------------------------- #
# Params init + reference
# --------------------------------------------------------------------------- #
def init_params(key, in_features, median_size, output_size, dtype=jnp.float32):
    """nn.Linear-style shapes; weights stored as (in, out) = W_torch.T."""
    dims = [
        (in_features, median_size),            # Linear_0
        (median_size, median_size),            # Linear_1
        (median_size, median_size // 2),       # Linear_2
        (median_size // 2, median_size // 4),  # Linear_3
        (median_size // 4, output_size),       # output
    ]
    params = []
    for (din, dout) in dims:
        key, kw, kb = jax.random.split(key, 3)
        bound = 1.0 / jnp.sqrt(jnp.asarray(din, dtype=jnp.float32))
        w = jax.random.uniform(kw, (din, dout), dtype, -bound, bound)
        b = jax.random.uniform(kb, (dout,), dtype, -bound, bound)
        params.append((w, b))
    return params


def reference_forward(x, params):
    """Plain-JAX reference mimicking the kernel math (bf16 MXU operands, f32
    accumulate / bias / LeakyReLU), incl. the final LeakyReLU like the module."""
    h = x
    for (w, b) in params:
        h = jnp.dot(h.astype(jnp.bfloat16), w.astype(jnp.bfloat16),
                    preferred_element_type=jnp.float32) + b.astype(jnp.float32)
        h = jnp.where(h > 0, h, NEG_SLOPE * h)
    return h


# --------------------------------------------------------------------------- #
if __name__ == "__main__":
    # Scaled-down version of (in_features=13501, median_size=512, output_size=3).
    # B=512 gives a 2-program grid so both v7x TensorCores are used.
    B = 512
    in_features = 200
    median_size = 64
    output_size = 3

    key = jax.random.PRNGKey(0)
    kx, kp = jax.random.split(key)
    x = jax.random.normal(kx, (B, in_features), dtype=jnp.float32)
    params = init_params(kp, in_features, median_size, output_size)

    # One-time pad/cast -- stays out of the per-call hot path.
    weights, bias_block = prepare_params(params)

    def run(single_buffer):
        fwd = jax.jit(functools.partial(
            baselinemlp_forward, output_size=output_size,
            single_buffer_weights=single_buffer))
        outs = fwd(x, weights, bias_block)
        jax.block_until_ready(outs)
        return outs

    try:
        outs = run(True)
    except Exception:
        # Fallback if this JAX build rejects pl.Buffered(1) on pallas_call specs.
        outs = run(False)

    ref = reference_forward(x, params)
    for o in outs:
        assert o.shape == (B, output_size)
        assert jnp.allclose(o, ref, atol=2e-3, rtol=2e-3), "mismatch vs reference"

    print("KERNEL_OK")
</pallas_src>

<mosaic_0001>
module attributes {stable_mosaic.version = 11 : i64} {
  func.func @mlp_kernel(%arg0: i32, %arg1: memref<256x200xf32, #tpu.memory_space<vmem>>, %arg2: memref<200x128xbf16, #tpu.memory_space<vmem>>, %arg3: memref<128x128xbf16, #tpu.memory_space<vmem>>, %arg4: memref<128x128xbf16, #tpu.memory_space<vmem>>, %arg5: memref<128x128xbf16, #tpu.memory_space<vmem>>, %arg6: memref<128x128xbf16, #tpu.memory_space<vmem>>, %arg7: memref<8x128xf32, #tpu.memory_space<vmem>>, %arg8: memref<256x128xf32, #tpu.memory_space<vmem>>) attributes {dimension_semantics = [#tpu.dimension_semantics<parallel>], iteration_bounds = array<i64: 2>, scalar_prefetch = 0 : i64, scratch_operands = 0 : i64, tpu.core_type = #tpu.core_type<tc>, window_params = [{transform_indices = @transform_0, window_bounds = array<i64: 256, 200>}, {pipeline_mode = #tpu.pipeline_mode<synchronous>, transform_indices = @transform_1, window_bounds = array<i64: 200, 128>}, {pipeline_mode = #tpu.pipeline_mode<synchronous>, transform_indices = @transform_2, window_bounds = array<i64: 128, 128>}, {pipeline_mode = #tpu.pipeline_mode<synchronous>, transform_indices = @transform_3, window_bounds = array<i64: 128, 128>}, {pipeline_mode = #tpu.pipeline_mode<synchronous>, transform_indices = @transform_4, window_bounds = array<i64: 128, 128>}, {pipeline_mode = #tpu.pipeline_mode<synchronous>, transform_indices = @transform_5, window_bounds = array<i64: 128, 128>}, {pipeline_mode = #tpu.pipeline_mode<synchronous>, transform_indices = @transform_6, window_bounds = array<i64: 8, 128>}, {transform_indices = @transform_7, window_bounds = array<i64: 256, 128>}]} {
    %c0 = arith.constant 0 : index
    %c0_0 = arith.constant 0 : index
    %0 = vector.load %arg7[%c0, %c0_0] : memref<8x128xf32, #tpu.memory_space<vmem>>, vector<8x128xf32>
    %c0_1 = arith.constant 0 : index
    %c0_2 = arith.constant 0 : index
    %1 = vector.load %arg1[%c0_1, %c0_2] : memref<256x200xf32, #tpu.memory_space<vmem>>, vector<256x200xf32>
    %2 = arith.truncf %1 : vector<256x200xf32> to vector<256x200xbf16>
    %c0_3 = arith.constant 0 : index
    %c0_4 = arith.constant 0 : index
    %3 = vector.load %arg2[%c0_3, %c0_4] : memref<200x128xbf16, #tpu.memory_space<vmem>>, vector<200x128xbf16>
    %cst = arith.constant dense<0.000000e+00> : vector<256x128xf32>
    %4 = tpu.matmul %2, %3, %cst {dimension_numbers = #tpu.dot_dimension_numbers<[1], [0], [0], [1], [0, 0, 1, 1], [], []>} : vector<256x200xbf16>, vector<200x128xbf16>, vector<256x128xf32> -> vector<256x128xf32>
    %5 = vector.extract_strided_slice %0 {offsets = [0, 0], sizes = [1, 128], strides = [1, 1]} : vector<8x128xf32> to vector<1x128xf32>
    %6 = vector.shape_cast %5 : vector<1x128xf32> to vector<128xf32>
    %7 = vector.shape_cast %6 : vector<128xf32> to vector<1x128xf32>
    %8 = vector.broadcast %7 : vector<1x128xf32> to vector<256x128xf32>
    %9 = arith.addf %4, %8 : vector<256x128xf32>
    %cst_5 = arith.constant 0.000000e+00 : f32
    %10 = vector.broadcast %cst_5 : f32 to vector<256x128xf32>
    %11 = arith.cmpf ogt, %9, %10 : vector<256x128xf32>
    %cst_6 = arith.constant 0.00999999977 : f32
    %12 = vector.broadcast %cst_6 : f32 to vector<256x128xf32>
    %13 = arith.mulf %12, %9 : vector<256x128xf32>
    %14 = arith.select %11, %9, %13 : vector<256x128xi1>, vector<256x128xf32>
    %15 = arith.truncf %14 : vector<256x128xf32> to vector<256x128xbf16>
    %c0_7 = arith.constant 0 : index
    %c0_8 = arith.constant 0 : index
    %16 = vector.load %arg3[%c0_7, %c0_8] : memref<128x128xbf16, #tpu.memory_space<vmem>>, vector<128x128xbf16>
    %cst_9 = arith.constant dense<0.000000e+00> : vector<256x128xf32>
    %17 = tpu.matmul %15, %16, %cst_9 {dimension_numbers = #tpu.dot_dimension_numbers<[1], [0], [0], [1], [0, 0, 1, 1], [], []>} : vector<256x128xbf16>, vector<128x128xbf16>, vector<256x128xf32> -> vector<256x128xf32>
    %18 = vector.extract_strided_slice %0 {offsets = [1, 0], sizes = [1, 128], strides = [1, 1]} : vector<8x128xf32> to vector<1x128xf32>
    %19 = vector.shape_cast %18 : vector<1x128xf32> to vector<128xf32>
    %20 = vector.shape_cast %19 : vector<128xf32> to vector<1x128xf32>
    %21 = vector.broadcast %20 : vector<1x128xf32> to vector<256x128xf32>
    %22 = arith.addf %17, %21 : vector<256x128xf32>
    %cst_10 = arith.constant 0.000000e+00 : f32
    %23 = vector.broadcast %cst_10 : f32 to vector<256x128xf32>
    %24 = arith.cmpf ogt, %22, %23 : vector<256x128xf32>
    %cst_11 = arith.constant 0.00999999977 : f32
    %25 = vector.broadcast %cst_11 : f32 to vector<256x128xf32>
    %26 = arith.mulf %25, %22 : vector<256x128xf32>
    %27 = arith.select %24, %22, %26 : vector<256x128xi1>, vector<256x128xf32>
    %28 = arith.truncf %27 : vector<256x128xf32> to vector<256x128xbf16>
    %c0_12 = arith.constant 0 : index
    %c0_13 = arith.constant 0 : index
    %29 = vector.load %arg4[%c0_12, %c0_13] : memref<128x128xbf16, #tpu.memory_space<vmem>>, vector<128x128xbf16>
    %cst_14 = arith.constant dense<0.000000e+00> : vector<256x128xf32>
    %30 = tpu.matmul %28, %29, %cst_14 {dimension_numbers = #tpu.dot_dimension_numbers<[1], [0], [0], [1], [0, 0, 1, 1], [], []>} : vector<256x128xbf16>, vector<128x128xbf16>, vector<256x128xf32> -> vector<256x128xf32>
    %31 = vector.extract_strided_slice %0 {offsets = [2, 0], sizes = [1, 128], strides = [1, 1]} : vector<8x128xf32> to vector<1x128xf32>
    %32 = vector.shape_cast %31 : vector<1x128xf32> to vector<128xf32>
    %33 = vector.shape_cast %32 : vector<128xf32> to vector<1x128xf32>
    %34 = vector.broadcast %33 : vector<1x128xf32> to vector<256x128xf32>
    %35 = arith.addf %30, %34 : vector<256x128xf32>
    %cst_15 = arith.constant 0.000000e+00 : f32
    %36 = vector.broadcast %cst_15 : f32 to vector<256x128xf32>
    %37 = arith.cmpf ogt, %35, %36 : vector<256x128xf32>
    %cst_16 = arith.constant 0.00999999977 : f32
    %38 = vector.broadcast %cst_16 : f32 to vector<256x128xf32>
    %39 = arith.mulf %38, %35 : vector<256x128xf32>
    %40 = arith.select %37, %35, %39 : vector<256x128xi1>, vector<256x128xf32>
    %41 = arith.truncf %40 : vector<256x128xf32> to vector<256x128xbf16>
    %c0_17 = arith.constant 0 : index
    %c0_18 = arith.constant 0 : index
    %42 = vector.load %arg5[%c0_17, %c0_18] : memref<128x128xbf16, #tpu.memory_space<vmem>>, vector<128x128xbf16>
    %cst_19 = arith.constant dense<0.000000e+00> : vector<256x128xf32>
    %43 = tpu.matmul %41, %42, %cst_19 {dimension_numbers = #tpu.dot_dimension_numbers<[1], [0], [0], [1], [0, 0, 1, 1], [], []>} : vector<256x128xbf16>, vector<128x128xbf16>, vector<256x128xf32> -> vector<256x128xf32>
    %44 = vector.extract_strided_slice %0 {offsets = [3, 0], sizes = [1, 128], strides = [1, 1]} : vector<8x128xf32> to vector<1x128xf32>
    %45 = vector.shape_cast %44 : vector<1x128xf32> to vector<128xf32>
    %46 = vector.shape_cast %45 : vector<128xf32> to vector<1x128xf32>
    %47 = vector.broadcast %46 : vector<1x128xf32> to vector<256x128xf32>
    %48 = arith.addf %43, %47 : vector<256x128xf32>
    %cst_20 = arith.constant 0.000000e+00 : f32
    %49 = vector.broadcast %cst_20 : f32 to vector<256x128xf32>
    %50 = arith.cmpf ogt, %48, %49 : vector<256x128xf32>
    %cst_21 = arith.constant 0.00999999977 : f32
    %51 = vector.broadcast %cst_21 : f32 to vector<256x128xf32>
    %52 = arith.mulf %51, %48 : vector<256x128xf32>
    %53 = arith.select %50, %48, %52 : vector<256x128xi1>, vector<256x128xf32>
    %54 = arith.truncf %53 : vector<256x128xf32> to vector<256x128xbf16>
    %c0_22 = arith.constant 0 : index
    %c0_23 = arith.constant 0 : index
    %55 = vector.load %arg6[%c0_22, %c0_23] : memref<128x128xbf16, #tpu.memory_space<vmem>>, vector<128x128xbf16>
    %cst_24 = arith.constant dense<0.000000e+00> : vector<256x128xf32>
    %56 = tpu.matmul %54, %55, %cst_24 {dimension_numbers = #tpu.dot_dimension_numbers<[1], [0], [0], [1], [0, 0, 1, 1], [], []>} : vector<256x128xbf16>, vector<128x128xbf16>, vector<256x128xf32> -> vector<256x128xf32>
    %57 = vector.extract_strided_slice %0 {offsets = [4, 0], sizes = [1, 128], strides = [1, 1]} : vector<8x128xf32> to vector<1x128xf32>
    %58 = vector.shape_cast %57 : vector<1x128xf32> to vector<128xf32>
    %59 = vector.shape_cast %58 : vector<128xf32> to vector<1x128xf32>
    %60 = vector.broadcast %59 : vector<1x128xf32> to vector<256x128xf32>
    %61 = arith.addf %56, %60 : vector<256x128xf32>
    %cst_25 = arith.constant 0.000000e+00 : f32
    %62 = vector.broadcast %cst_25 : f32 to vector<256x128xf32>
    %63 = arith.cmpf ogt, %61, %62 : vector<256x128xf32>
    %cst_26 = arith.constant 0.00999999977 : f32
    %64 = vector.broadcast %cst_26 : f32 to vector<256x128xf32>
    %65 = arith.mulf %64, %61 : vector<256x128xf32>
    %66 = arith.select %63, %61, %65 : vector<256x128xi1>, vector<256x128xf32>
    %c0_27 = arith.constant 0 : index
    %c0_28 = arith.constant 0 : index
    %67 = vector.load %arg8[%c0_27, %c0_28] : memref<256x128xf32, #tpu.memory_space<vmem>>, vector<256x128xf32>
    tpu.vector_store %arg8[%c0_27, %c0_28], %66 {strides = array<i32>} : memref<256x128xf32, #tpu.memory_space<vmem>>, vector<256x128xf32>,
    return
  }
  func.func @transform_0(%arg0: i32) -> (i32, i32) {
    %c0_i32 = arith.constant 0 : i32
    %c0_i32_0 = arith.constant 0 : i32
    return %arg0, %c0_i32 : i32, i32
  }
  func.func @transform_1(%arg0: i32) -> (i32, i32) {
    %c0_i32 = arith.constant 0 : i32
    %c0_i32_0 = arith.constant 0 : i32
    %c0_i32_1 = arith.constant 0 : i32
    return %c0_i32, %c0_i32_0 : i32, i32
  }
  func.func @transform_2(%arg0: i32) -> (i32, i32) {
    %c0_i32 = arith.constant 0 : i32
    %c0_i32_0 = arith.constant 0 : i32
    %c0_i32_1 = arith.constant 0 : i32
    return %c0_i32, %c0_i32_0 : i32, i32
  }
  func.func @transform_3(%arg0: i32) -> (i32, i32) {
    %c0_i32 = arith.constant 0 : i32
    %c0_i32_0 = arith.constant 0 : i32
    %c0_i32_1 = arith.constant 0 : i32
    return %c0_i32, %c0_i32_0 : i32, i32
  }
  func.func @transform_4(%arg0: i32) -> (i32, i32) {
    %c0_i32 = arith.constant 0 : i32
    %c0_i32_0 = arith.constant 0 : i32
    %c0_i32_1 = arith.constant 0 : i32
    return %c0_i32, %c0_i32_0 : i32, i32
  }
  func.func @transform_5(%arg0: i32) -> (i32, i32) {
    %c0_i32 = arith.constant 0 : i32
    %c0_i32_0 = arith.constant 0 : i32
    %c0_i32_1 = arith.constant 0 : i32
    return %c0_i32, %c0_i32_0 : i32, i32
  }
  func.func @transform_6(%arg0: i32) -> (i32, i32) {
    %c0_i32 = arith.constant 0 : i32
    %c0_i32_0 = arith.constant 0 : i32
    %c0_i32_1 = arith.constant 0 : i32
    return %c0_i32, %c0_i32_0 : i32, i32
  }
  func.func @transform_7(%arg0: i32) -> (i32, i32) {
    %c0_i32 = arith.constant 0 : i32
    %c0_i32_0 = arith.constant 0 : i32
    return %arg0, %c0_i32 : i32, i32
  }
}

module attributes {stable_mosaic.version = 11 : i64} {
  func.func @mlp_kernel(%arg0: i32, %arg1: memref<256x200xf32, #tpu.memory_space<vmem>>, %arg2: memref<200x128xbf16, #tpu.memory_space<vmem>>, %arg3: memref<128x128xbf16, #tpu.memory_space<vmem>>, %arg4: memref<128x128xbf16, #tpu.memory_space<vmem>>, %arg5: memref<128x128xbf16, #tpu.memory_space<vmem>>, %arg6: memref<128x128xbf16, #tpu.memory_space<vmem>>, %arg7: memref<8x128xf32, #tpu.memory_space<vmem>>, %arg8: memref<256x128xf32, #tpu.memory_space<vmem>>) attributes {dimension_semantics = [#tpu.dimension_semantics<parallel>], iteration_bounds = array<i64: 2>, scalar_prefetch = 0 : i64, scratch_operands = 0 : i64, tpu.core_type = #tpu.core_type<tc>, window_params = [{transform_indices = @transform_0, window_bounds = array<i64: 256, 200>}, {pipeline_mode = #tpu.pipeline_mode<synchronous>, transform_indices = @transform_1, window_bounds = array<i64: 200, 128>}, {pipeline_mode = #tpu.pipeline_mode<synchronous>, transform_indices = @transform_2, window_bounds = array<i64: 128, 128>}, {pipeline_mode = #tpu.pipeline_mode<synchronous>, transform_indices = @transform_3, window_bounds = array<i64: 128, 128>}, {pipeline_mode = #tpu.pipeline_mode<synchronous>, transform_indices = @transform_4, window_bounds = array<i64: 128, 128>}, {pipeline_mode = #tpu.pipeline_mode<synchronous>, transform_indices = @transform_5, window_bounds = array<i64: 128, 128>}, {pipeline_mode = #tpu.pipeline_mode<synchronous>, transform_indices = @transform_6, window_bounds = array<i64: 8, 128>}, {transform_indices = @transform_7, window_bounds = array<i64: 256, 128>}]} {
    %c0 = arith.constant 0 : index
    %c0_0 = arith.constant 0 : index
    %0 = vector.load %arg7[%c0, %c0_0] : memref<8x128xf32, #tpu.memory_space<vmem>>, vector<8x128xf32>
    %c0_1 = arith.constant 0 : index
    %c0_2 = arith.constant 0 : index
    %1 = vector.load %arg1[%c0_1, %c0_2] : memref<256x200xf32, #tpu.memory_space<vmem>>, vector<256x200xf32>
    %2 = arith.truncf %1 : vector<256x200xf32> to vector<256x200xbf16>
    %c0_3 = arith.constant 0 : index
    %c0_4 = arith.constant 0 : index
    %3 = vector.load %arg2[%c0_3, %c0_4] : memref<200x128xbf16, #tpu.memory_space<vmem>>, vector<200x128xbf16>
    %cst = arith.constant dense<0.000000e+00> : vector<256x128xf32>
    %4 = tpu.matmul %2, %3, %cst {dimension_numbers = #tpu.dot_dimension_numbers<[1], [0], [0], [1], [0, 0, 1, 1], [], []>} : vector<256x200xbf16>, vector<200x128xbf16>, vector<256x128xf32> -> vector<256x128xf32>
    %5 = vector.extract_strided_slice %0 {offsets = [0, 0], sizes = [1, 128], strides = [1, 1]} : vector<8x128xf32> to vector<1x128xf32>
    %6 = vector.shape_cast %5 : vector<1x128xf32> to vector<128xf32>
    %7 = vector.shape_cast %6 : vector<128xf32> to vector<1x128xf32>
    %8 = vector.broadcast %7 : vector<1x128xf32> to vector<256x128xf32>
    %9 = arith.addf %4, %8 : vector<256x128xf32>
    %cst_5 = arith.constant 0.000000e+00 : f32
    %10 = vector.broadcast %cst_5 : f32 to vector<256x128xf32>
    %11 = arith.cmpf ogt, %9, %10 : vector<256x128xf32>
    %cst_6 = arith.constant 0.00999999977 : f32
    %12 = vector.broadcast %cst_6 : f32 to vector<256x128xf32>
    %13 = arith.mulf %12, %9 : vector<256x128xf32>
    %14 = arith.select %11, %9, %13 : vector<256x128xi1>, vector<256x128xf32>
    %15 = arith.truncf %14 : vector<256x128xf32> to vector<256x128xbf16>
    %c0_7 = arith.constant 0 : index
    %c0_8 = arith.constant 0 : index
    %16 = vector.load %arg3[%c0_7, %c0_8] : memref<128x128xbf16, #tpu.memory_space<vmem>>, vector<128x128xbf16>
    %cst_9 = arith.constant dense<0.000000e+00> : vector<256x128xf32>
    %17 = tpu.matmul %15, %16, %cst_9 {dimension_numbers = #tpu.dot_dimension_numbers<[1], [0], [0], [1], [0, 0, 1, 1], [], []>} : vector<256x128xbf16>, vector<128x128xbf16>, vector<256x128xf32> -> vector<256x128xf32>
    %18 = vector.extract_strided_slice %0 {offsets = [1, 0], sizes = [1, 128], strides = [1, 1]} : vector<8x128xf32> to vector<1x128xf32>
    %19 = vector.shape_cast %18 : vector<1x128xf32> to vector<128xf32>
    %20 = vector.shape_cast %19 : vector<128xf32> to vector<1x128xf32>
    %21 = vector.broadcast %20 : vector<1x128xf32> to vector<256x128xf32>
    %22 = arith.addf %17, %21 : vector<256x128xf32>
    %cst_10 = arith.constant 0.000000e+00 : f32
    %23 = vector.broadcast %cst_10 : f32 to vector<256x128xf32>
    %24 = arith.cmpf ogt, %22, %23 : vector<256x128xf32>
    %cst_11 = arith.constant 0.00999999977 : f32
    %25 = vector.broadcast %cst_11 : f32 to vector<256x128xf32>
    %26 = arith.mulf %25, %22 : vector<256x128xf32>
    %27 = arith.select %24, %22, %26 : vector<256x128xi1>, vector<256x128xf32>
    %28 = arith.truncf %27 : vector<256x128xf32> to vector<256x128xbf16>
    %c0_12 = arith.constant 0 : index
    %c0_13 = arith.constant 0 : index
    %29 = vector.load %arg4[%c0_12, %c0_13] : memref<128x128xbf16, #tpu.memory_space<vmem>>, vector<128x128xbf16>
    %cst_14 = arith.constant dense<0.000000e+00> : vector<256x128xf32>
    %30 = tpu.matmul %28, %29, %cst_14 {dimension_numbers = #tpu.dot_dimension_numbers<[1], [0], [0], [1], [0, 0, 1, 1], [], []>} : vector<256x128xbf16>, vector<128x128xbf16>, vector<256x128xf32> -> vector<256x128xf32>
    %31 = vector.extract_strided_slice %0 {offsets = [2, 0], sizes = [1, 128], strides = [1, 1]} : vector<8x128xf32> to vector<1x128xf32>
    %32 = vector.shape_cast %31 : vector<1x128xf32> to vector<128xf32>
    %33 = vector.shape_cast %32 : vector<128xf32> to vector<1x128xf32>
    %34 = vector.broadcast %33 : vector<1x128xf32> to vector<256x128xf32>
    %35 = arith.addf %30, %34 : vector<256x128xf32>
    %cst_15 = arith.constant 0.000000e+00 : f32
    %36 = vector.broadcast %cst_15 : f32 to vector<256x128xf32>
    %37 = arith.cmpf ogt, %35, %36 : vector<256x128xf32>
    %cst_16 = arith.constant 0.00999999977 : f32
    %38 = vector.broadcast %cst_16 : f32 to vector<256x128xf32>
    %39 = arith.mulf %38, %35 : vector<256x128xf32>
    %40 = arith.select %37, %35, %39 : vector<256x128xi1>, vector<256x128xf32>
    %41 = arith.truncf %40 : vector<256x128xf32> to vector<256x128xbf16>
    %c0_17 = arith.constant 0 : index
    %c0_18 = arith.constant 0 : index
    %42 = vector.load %arg5[%c0_17, %c0_18] : memref<128x128xbf16, #tpu.memory_space<vmem>>, vector<128x128xbf16>
    %cst_19 = arith.constant dense<0.000000e+00> : vector<256x128xf32>
    %43 = tpu.matmul %41, %42, %cst_19 {dimension_numbers = #tpu.dot_dimension_numbers<[1], [0], [0], [1], [0, 0, 1, 1], [], []>} : vector<256x128xbf16>, vector<128x128xbf16>, vector<256x128xf32> -> vector<256x128xf32>
    %44 = vector.extract_strided_slice %0 {offsets = [3, 0], sizes = [1, 128], strides = [1, 1]} : vector<8x128xf32> to vector<1x128xf32>
    %45 = vector.shape_cast %44 : vector<1x128xf32> to vector<128xf32>
    %46 = vector.shape_cast %45 : vector<128xf32> to vector<1x128xf32>
    %47 = vector.broadcast %46 : vector<1x128xf32> to vector<256x128xf32>
    %48 = arith.addf %43, %47 : vector<256x128xf32>
    %cst_20 = arith.constant 0.000000e+00 : f32
    %49 = vector.broadcast %cst_20 : f32 to vector<256x128xf32>
    %50 = arith.cmpf ogt, %48, %49 : vector<256x128xf32>
    %cst_21 = arith.constant 0.00999999977 : f32
    %51 = vector.broadcast %cst_21 : f32 to vector<256x128xf32>
    %52 = arith.mulf %51, %48 : vector<256x128xf32>
    %53 = arith.select %50, %48, %52 : vector<256x128xi1>, vector<256x128xf32>
    %54 = arith.truncf %53 : vector<256x128xf32> to vector<256x128xbf16>
    %c0_22 = arith.constant 0 : index
    %c0_23 = arith.constant 0 : index
    %55 = vector.load %arg6[%c0_22, %c0_23] : memref<128x128xbf16, #tpu.memory_space<vmem>>, vector<128x128xbf16>
    %cst_24 = arith.constant dense<0.000000e+00> : vector<256x128xf32>
    %56 = tpu.matmul %54, %55, %cst_24 {dimension_numbers = #tpu.dot_dimension_numbers<[1], [0], [0], [1], [0, 0, 1, 1], [], []>} : vector<256x128xbf16>, vector<128x128xbf16>, vector<256x128xf32> -> vector<256x128xf32>
    %57 = vector.extract_strided_slice %0 {offsets = [4, 0], sizes = [1, 128], strides = [1, 1]} : vector<8x128xf32> to vector<1x128xf32>
    %58 = vector.shape_cast %57 : vector<1x128xf32> to vector<128xf32>
    %59 = vector.shape_cast %58 : vector<128xf32> to vector<1x128xf32>
    %60 = vector.broadcast %59 : vector<1x128xf32> to vector<256x128xf32>
    %61 = arith.addf %56, %60 : vector<256x128xf32>
    %cst_25 = arith.constant 0.000000e+00 : f32
    %62 = vector.broadcast %cst_25 : f32 to vector<256x128xf32>
    %63 = arith.cmpf ogt, %61, %62 : vector<256x128xf32>
    %cst_26 = arith.constant 0.00999999977 : f32
    %64 = vector.broadcast %cst_26 : f32 to vector<256x128xf32>
    %65 = arith.mulf %64, %61 : vector<256x128xf32>
    %66 = arith.select %63, %61, %65 : vector<256x128xi1>, vector<256x128xf32>
    %c0_27 = arith.constant 0 : index
    %c0_28 = arith.constant 0 : index
    %67 = vector.load %arg8[%c0_27, %c0_28] : memref<256x128xf32, #tpu.memory_space<vmem>>, vector<256x128xf32>
    tpu.vector_store %arg8[%c0_27, %c0_28], %66 {strides = array<i32>} : memref<256x128xf32, #tpu.memory_space<vmem>>, vector<256x128xf32>,
    return
  }
  func.func @transform_0(%arg0: i32) -> (i32, i32) {
    %c0_i32 = arith.constant 0 : i32
    %c0_i32_0 = arith.constant 0 : i32
    return %arg0, %c0_i32 : i32, i32
  }
  func.func @transform_1(%arg0: i32) -> (i32, i32) {
    %c0_i32 = arith.constant 0 : i32
    %c0_i32_0 = arith.constant 0 : i32
    %c0_i32_1 = arith.constant 0 : i32
    return %c0_i32, %c0_i32_0 : i32, i32
  }
  func.func @transform_2(%arg0: i32) -> (i32, i32) {
    %c0_i32 = arith.constant 0 : i32
    %c0_i32_0 = arith.constant 0 : i32
    %c0_i32_1 = arith.constant 0 : i32
    return %c0_i32, %c0_i32_0 : i32, i32
  }
  func.func @transform_3(%arg0: i32) -> (i32, i32) {
    %c0_i32 = arith.constant 0 : i32
    %c0_i32_0 = arith.constant 0 : i32
    %c0_i32_1 = arith.constant 0 : i32
    return %c0_i32, %c0_i32_0 : i32, i32
  }
  func.func @transform_4(%arg0: i32) -> (i32, i32) {
    %c0_i32 = arith.constant 0 : i32
    %c0_i32_0 = arith.constant 0 : i32
    %c0_i32_1 = arith.constant 0 : i32
    return %c0_i32, %c0_i32_0 : i32, i32
  }
  func.func @transform_5(%arg0: i32) -> (i32, i32) {
    %c0_i32 = arith.constant 0 : i32
    %c0_i32_0 = arith.constant 0 : i32
    %c0_i32_1 = arith.constant 0 : i32
    return %c0_i32, %c0_i32_0 : i32, i32
  }
  func.func @transform_6(%arg0: i32) -> (i32, i32) {
    %c0_i32 = arith.constant 0 : i32
    %c0_i32_0 = arith.constant 0 : i32
    %c0_i32_1 = arith.constant 0 : i32
    return %c0_i32, %c0_i32_0 : i32, i32
  }
  func.func @transform_7(%arg0: i32) -> (i32, i32) {
    %c0_i32 = arith.constant 0 : i32
    %c0_i32_0 = arith.constant 0 : i32
    return %arg0, %c0_i32 : i32, i32
  }
}

</mosaic_0001>

<llo_original>
// kernel: baselinemlp_forward.1
$region0: #{baselinemlp_forward.1}
  #allocation0 [shape = 'u32[]', space=smem, size = 0x4, offset = 0x4, fixed_abs, tag = 'smem constant byte address 0x4 - core index']
  #allocation1 [shape = 'u32[144,128]{1,0:T(1,128)}', space=vmem, size = 0x12000, scoped, tag = 'internal scratch']
  %s0 = inlined_call_operand.vmem [shape: f32[512,200], index: 0, kind: input, shape index: {}]
  %s1 = inlined_call_operand.vmem [shape: bf16[200,128], index: 1, kind: input, shape index: {}]
  %s2 = inlined_call_operand.vmem [shape: bf16[128,128], index: 2, kind: input, shape index: {}]
  %s3 = inlined_call_operand.vmem [shape: bf16[128,128], index: 3, kind: input, shape index: {}]
  %s4 = inlined_call_operand.vmem [shape: bf16[128,128], index: 4, kind: input, shape index: {}]
  %s5 = inlined_call_operand.vmem [shape: bf16[128,128], index: 5, kind: input, shape index: {}]
  %s6 = inlined_call_operand.vmem [shape: f32[8,128], index: 6, kind: input, shape index: {}]
  %s7 = inlined_call_operand.vmem [shape: f32[512,128], index: 7, kind: output, shape index: {}]
  %s8 = sld [smem:[#allocation0]]
  $region61: #{baselinemlp_forward.1} parent=0
    _
  %s10 = ssub.s32 1, %s8
  %s11 = scalar_select 0, %s10, %s8
  loop: start=0, step=1, limit=4
  $region2: #{baselinemlp_forward.1} parent=0 // loop_pre_header
    _
  $region3: #{baselinemlp_forward.1} parent=0 // loop_header
    %s13 = sphi 0, %s17
    %p14 = scmp.ge.s32.totalorder %s13, 4
    %s23 = sphi 0, %s25
    %s26 = sphi 0, %s23
    %s27 = sphi 0, %s26
    %s43 = sphi 0, %s27
    %s47 = sphi 0, %s47
    %s49 = sphi 0, %s47
    %s50 = sphi 0, %s49
    %s64 = sphi 0, %s50
    %s68 = sphi 0, %s68
    %s70 = sphi 0, %s68
    %s71 = sphi 0, %s70
    %s85 = sphi 0, %s71
    %s89 = sphi 0, %s89
    %s91 = sphi 0, %s89
    %s92 = sphi 0, %s91
    %s106 = sphi 0, %s92
    %s110 = sphi 0, %s110
    %s112 = sphi 0, %s110
    %s113 = sphi 0, %s112
    %s127 = sphi 0, %s113
    %s131 = sphi 0, %s131
    %s133 = sphi 0, %s131
    %s134 = sphi 0, %s133
    %s148 = sphi 0, %s134
    %s152 = sphi 0, %s152
    %s154 = sphi 0, %s152
    %s155 = sphi 0, %s154
    %s169 = sphi 0, %s155
    %s175 = sphi 0, %s177
    %s178 = sphi 0, %s175
    %s179 = sphi 0, %s178
    %s195 = sphi 0, %s179
  $region4: #{baselinemlp_forward.1} parent=0 // loop_header_branch
    %16 = sbr.rel (%p14) target = $region8
  $region5: #{baselinemlp_forward.1} parent=0 // loop_body
    %s18 = ssub.s32 %s13, 1
    %s19 = ssub.s32 %s13, 2
    %s20 = sadd.s32 %s13, 1
    %s21 = ssub.s32 %s13, %s20
    %p22 = scmp.eq.s32.totalorder %s21, 0
    %s24 = sadd.s32 %s23, 1
    %s25 = scalar_select %p22, %s23, %s24
    %p28 = pneg %p22
    %p29 = scmp.eq.s32.totalorder %s13, 1
    %p30 = por %p28, %p29
    %p31 = scmp.ne.s32.totalorder %s23, %s26
    %p32 = scmp.eq.s32.totalorder %s13, 0
    %p33 = por %p31, %p32
    %p34 = scmp.ne.s32.totalorder %s23, %s26
    %p35 = scmp.eq.s32.totalorder %s18, 1
    %p36 = por %p34, %p35
    %p37 = scmp.ne.s32.totalorder %s26, %s27
    %p38 = scmp.eq.s32.totalorder %s18, 0
    %p39 = por %p37, %p38
    %p40 = scmp.ne.s32.totalorder %s26, %s27
    %p41 = scmp.eq.s32.totalorder %s19, 1
    %p42 = por %p40, %p41
    %p44 = scmp.ne.s32.totalorder %s27, %s43
    %p45 = scmp.eq.s32.totalorder %s19, 0
    %p46 = por %p44, %p45
    %s48 = sadd.s32 %s47, 1
    %p51 = scmp.eq.s32.totalorder %s13, 1
    %p52 = scmp.ne.s32.totalorder %s47, %s49
    %p53 = scmp.eq.s32.totalorder %s13, 0
    %p54 = por %p52, %p53
    %p55 = scmp.ne.s32.totalorder %s47, %s49
    %p56 = scmp.eq.s32.totalorder %s18, 1
    %p57 = por %p55, %p56
    %p58 = scmp.ne.s32.totalorder %s49, %s50
    %p59 = scmp.eq.s32.totalorder %s18, 0
    %p60 = por %p58, %p59
    %p61 = scmp.ne.s32.totalorder %s49, %s50
    %p62 = scmp.eq.s32.totalorder %s19, 1
    %p63 = por %p61, %p62
    %p65 = scmp.ne.s32.totalorder %s50, %s64
    %p66 = scmp.eq.s32.totalorder %s19, 0
    %p67 = por %p65, %p66
    %s69 = sadd.s32 %s68, 1
    %p72 = scmp.eq.s32.totalorder %s13, 1
    %p73 = scmp.ne.s32.totalorder %s68, %s70
    %p74 = scmp.eq.s32.totalorder %s13, 0
    %p75 = por %p73, %p74
    %p76 = scmp.ne.s32.totalorder %s68, %s70
    %p77 = scmp.eq.s32.totalorder %s18, 1
    %p78 = por %p76, %p77
    %p79 = scmp.ne.s32.totalorder %s70, %s71
    %p80 = scmp.eq.s32.totalorder %s18, 0
    %p81 = por %p79, %p80
    %p82 = scmp.ne.s32.totalorder %s70, %s71
    %p83 = scmp.eq.s32.totalorder %s19, 1
    %p84 = por %p82, %p83
    %p86 = scmp.ne.s32.totalorder %s71, %s85
    %p87 = scmp.eq.s32.totalorder %s19, 0
    %p88 = por %p86, %p87
    %s90 = sadd.s32 %s89, 1
    %p93 = scmp.eq.s32.totalorder %s13, 1
    %p94 = scmp.ne.s32.totalorder %s89, %s91
    %p95 = scmp.eq.s32.totalorder %s13, 0
    %p96 = por %p94, %p95
    %p97 = scmp.ne.s32.totalorder %s89, %s91
    %p98 = scmp.eq.s32.totalorder %s18, 1
    %p99 = por %p97, %p98
    %p100 = scmp.ne.s32.totalorder %s91, %s92
    %p101 = scmp.eq.s32.totalorder %s18, 0
    %p102 = por %p100, %p101
    %p103 = scmp.ne.s32.totalorder %s91, %s92
    %p104 = scmp.eq.s32.totalorder %s19, 1
    %p105 = por %p103, %p104
    %p107 = scmp.ne.s32.totalorder %s92, %s106
    %p108 = scmp.eq.s32.totalorder %s19, 0
    %p109 = por %p107, %p108
    %s111 = sadd.s32 %s110, 1
    %p114 = scmp.eq.s32.totalorder %s13, 1
    %p115 = scmp.ne.s32.totalorder %s110, %s112
    %p116 = scmp.eq.s32.totalorder %s13, 0
    %p117 = por %p115, %p116
    %p118 = scmp.ne.s32.totalorder %s110, %s112
    %p119 = scmp.eq.s32.totalorder %s18, 1
    %p120 = por %p118, %p119
    %p121 = scmp.ne.s32.totalorder %s112, %s113
    %p122 = scmp.eq.s32.totalorder %s18, 0
    %p123 = por %p121, %p122
    %p124 = scmp.ne.s32.totalorder %s112, %s113
    %p125 = scmp.eq.s32.totalorder %s19, 1
    %p126 = por %p124, %p125
    %p128 = scmp.ne.s32.totalorder %s113, %s127
    %p129 = scmp.eq.s32.totalorder %s19, 0
    %p130 = por %p128, %p129
    %s132 = sadd.s32 %s131, 1
    %p135 = scmp.eq.s32.totalorder %s13, 1
    %p136 = scmp.ne.s32.totalorder %s131, %s133
    %p137 = scmp.eq.s32.totalorder %s13, 0
    %p138 = por %p136, %p137
    %p139 = scmp.ne.s32.totalorder %s131, %s133
    %p140 = scmp.eq.s32.totalorder %s18, 1
    %p141 = por %p139, %p140
    %p142 = scmp.ne.s32.totalorder %s133, %s134
    %p143 = scmp.eq.s32.totalorder %s18, 0
    %p144 = por %p142, %p143
    %p145 = scmp.ne.s32.totalorder %s133, %s134
    %p146 = scmp.eq.s32.totalorder %s19, 1
    %p147 = por %p145, %p146
    %p149 = scmp.ne.s32.totalorder %s134, %s148
    %p150 = scmp.eq.s32.totalorder %s19, 0
    %p151 = por %p149, %p150
    %s153 = sadd.s32 %s152, 1
    %p156 = scmp.eq.s32.totalorder %s13, 1
    %p157 = scmp.ne.s32.totalorder %s152, %s154
    %p158 = scmp.eq.s32.totalorder %s13, 0
    %p159 = por %p157, %p158
    %p160 = scmp.ne.s32.totalorder %s152, %s154
    %p161 = scmp.eq.s32.totalorder %s18, 1
    %p162 = por %p160, %p161
    %p163 = scmp.ne.s32.totalorder %s154, %s155
    %p164 = scmp.eq.s32.totalorder %s18, 0
    %p165 = por %p163, %p164
    %p166 = scmp.ne.s32.totalorder %s154, %s155
    %p167 = scmp.eq.s32.totalorder %s19, 1
    %p168 = por %p166, %p167
    %p170 = scmp.ne.s32.totalorder %s155, %s169
    %p171 = scmp.eq.s32.totalorder %s19, 0
    %p172 = por %p170, %p171
    %s173 = ssub.s32 %s13, %s20
    %p174 = scmp.eq.s32.totalorder %s173, 0
    %s176 = sadd.s32 %s175, 1
    %s177 = scalar_select %p174, %s175, %s176
    %p180 = pneg %p174
    %p181 = scmp.eq.s32.totalorder %s13, 1
    %p182 = por %p180, %p181
    %p183 = scmp.ne.s32.totalorder %s175, %s178
    %p184 = scmp.eq.s32.totalorder %s13, 0
    %p185 = por %p183, %p184
    %p186 = scmp.ne.s32.totalorder %s175, %s178
    %p187 = scmp.eq.s32.totalorder %s18, 1
    %p188 = por %p186, %p187
    %p189 = scmp.ne.s32.totalorder %s178, %s179
    %p190 = scmp.eq.s32.totalorder %s18, 0
    %p191 = por %p189, %p190
    %p192 = scmp.ne.s32.totalorder %s178, %s179
    %p193 = scmp.eq.s32.totalorder %s19, 1
    %p194 = por %p192, %p193
    %p196 = scmp.ne.s32.totalorder %s179, %s195
    %p197 = scmp.eq.s32.totalorder %s19, 0
    %p198 = por %p196, %p197
    %p199 = scmp.le.s32.totalorder 1, %s13
    %p200 = scmp.lt.s32.totalorder %s13, 3
    %p201 = pnand %p199, %p200
    %p202 = pneg %p201
    // Predicated region
    $region9: #{baselinemlp_forward.1} parent=5 // pred_check
      _
    $region10: #{baselinemlp_forward.1} parent=5 // pred_check_branch
      %204 = sbr.rel (%p201) target = $region12
    $region11: #{baselinemlp_forward.1} parent=5 // pred_region
      %s205 = ssub.s32 %s13, 1
      // Predicated region
      $region13: #{baselinemlp_forward.1} parent=11 // pred_check
        %p206 = pneg %p60
      $region14: #{baselinemlp_forward.1} parent=11 // pred_check_branch
        %208 = sbr.rel (%p206) target = $region16
      $region15: #{baselinemlp_forward.1} parent=11 // pred_region
        _
      $region16: #{baselinemlp_forward.1} parent=11 // pred_fallthru
        _
      // Predicated region
      $region17: #{baselinemlp_forward.1} parent=11 // pred_check
        %p209 = pneg %p81
      $region18: #{baselinemlp_forward.1} parent=11 // pred_check_branch
        %211 = sbr.rel (%p209) target = $region20
      $region19: #{baselinemlp_forward.1} parent=11 // pred_region
        _
      $region20: #{baselinemlp_forward.1} parent=11 // pred_fallthru
        _
      // Predicated region
      $region21: #{baselinemlp_forward.1} parent=11 // pred_check
        %p212 = pneg %p102
      $region22: #{baselinemlp_forward.1} parent=11 // pred_check_branch
        %214 = sbr.rel (%p212) target = $region24
      $region23: #{baselinemlp_forward.1} parent=11 // pred_region
        _
      $region24: #{baselinemlp_forward.1} parent=11 // pred_fallthru
        _
      // Predicated region
      $region25: #{baselinemlp_forward.1} parent=11 // pred_check
        %p215 = pneg %p123
      $region26: #{baselinemlp_forward.1} parent=11 // pred_check_branch
        %217 = sbr.rel (%p215) target = $region28
      $region27: #{baselinemlp_forward.1} parent=11 // pred_region
        _
      $region28: #{baselinemlp_forward.1} parent=11 // pred_fallthru
        _
      // Predicated region
      $region29: #{baselinemlp_forward.1} parent=11 // pred_check
        %p218 = pneg %p144
      $region30: #{baselinemlp_forward.1} parent=11 // pred_check_branch
        %220 = sbr.rel (%p218) target = $region32
      $region31: #{baselinemlp_forward.1} parent=11 // pred_region
        _
      $region32: #{baselinemlp_forward.1} parent=11 // pred_fallthru
        _
      // Predicated region
      $region33: #{baselinemlp_forward.1} parent=11 // pred_check
        %p221 = pneg %p165
      $region34: #{baselinemlp_forward.1} parent=11 // pred_check_branch
        %223 = sbr.rel (%p221) target = $region36
      $region35: #{baselinemlp_forward.1} parent=11 // pred_region
        _
      $region36: #{baselinemlp_forward.1} parent=11 // pred_fallthru
        _
    $region12: #{baselinemlp_forward.1} parent=5 // pred_fallthru
      _
    %p224 = scmp.lt.s32.totalorder %s13, 2
    // Predicated region
    $region37: #{baselinemlp_forward.1} parent=5 // pred_check
      %p225 = pneg %p224
    $region38: #{baselinemlp_forward.1} parent=5 // pred_check_branch
      %227 = sbr.rel (%p225) target = $region40
    $region39: #{baselinemlp_forward.1} parent=5 // pred_region
      // Predicated region
      $region41: #{baselinemlp_forward.1} parent=39 // pred_check
        %p228 = pneg %p33
      $region42: #{baselinemlp_forward.1} parent=39 // pred_check_branch
        %230 = sbr.rel (%p228) target = $region44
      $region43: #{baselinemlp_forward.1} parent=39 // pred_region
        %s231 = smul.u32 32, %s13
        %p232 = scmp.lt.s32.totalorder %s231, 63
        %s233 = scalar_select %p232, %s231, 63
        %s234 = smul.addr %s233, 2
        %s235 = smul.addr %s234, 8
        %s236 = scalar_lea.vmem %s0, %s235
        %s237 = smul.u32 32, %s13
      $region44: #{baselinemlp_forward.1} parent=39 // pred_fallthru
        _
    $region40: #{baselinemlp_forward.1} parent=5 // pred_fallthru
      _
    %p238 = scmp.le.s32.totalorder 1, %s13
    %p239 = scmp.lt.s32.totalorder %s13, 3
    %p240 = pnand %p238, %p239
    %p241 = pneg %p240
    // Predicated region
    $region45: #{baselinemlp_forward.1} parent=5 // pred_check
      _
    $region46: #{baselinemlp_forward.1} parent=5 // pred_check_branch
      %243 = sbr.rel (%p240) target = $region48
    $region47: #{baselinemlp_forward.1} parent=5 // pred_region
      %s244 = ssub.s32 %s13, 1
      %s245 = smul.u32 32, %s18
      %p246 = scmp.lt.s32.totalorder %s245, 63
      %s247 = scalar_select %p246, %s245, 63
      %s248 = smul.addr %s247, 2
      %s249 = smul.addr %s248, 8
      %s250 = scalar_lea.vmem %s0, %s249
      %p251 = pneg %p39
      %p252 = pneg %p36
      %p253 = pneg %p60
      %p254 = pneg %p57
      %p255 = pneg %p81
      %p256 = pneg %p78
      %p257 = pneg %p102
      %p258 = pneg %p99
      %p259 = pneg %p123
      %p260 = pneg %p120
      %p261 = pneg %p144
      %p262 = pneg %p141
      %p263 = pneg %p165
      %p264 = pneg %p162
      %p265 = pneg %p191
      %p266 = pneg %p188
      %s267 = smul.u32 32, %s18
      %p268 = scmp.lt.s32.totalorder %s267, 63
      %s269 = scalar_select %p268, %s267, 63
      %s270 = smul.addr %s269, 8
      %s271 = scalar_lea.vmem %s7, %s270
      %s272 = smul.u32 32, %s18
      %p273 = scmp.lt.s32.totalorder %s272, 63
      %s274 = scalar_select %p273, %s272, 63
      %s275 = smul.addr %s274, 2
      %s276 = smul.addr %s275, 8
      %s277 = scalar_lea.vmem %s0, %s276
      %s278 = smul.u32 32, %s18
      %s279 = smul.u32 32, %s18
      %p280 = scmp.lt.s32.totalorder %s279, 63
      %s281 = scalar_select %p280, %s279, 63
      %s282 = smul.addr %s281, 8
      %s283 = scalar_lea.vmem %s7, %s282
      %s284 = smul.u32 32, %s18
      %v286 = vld [vmem:[%s6] sm:$0xff]
      %v287 = vld [vmem:[%s277] sm:$0xff]
      %v288 = vld [vmem:[%s277 + $0x8] sm:$0xff]
      %v289 = vld [vmem:[%s277 + $0x10] sm:$0xff]
      %v290 = vld [vmem:[%s277 + $0x18] sm:$0xff]
      %v291 = vld [vmem:[%s277 + $0x20] sm:$0xff]
      %v292 = vld [vmem:[%s277 + $0x28] sm:$0xff]
      %v293 = vld [vmem:[%s277 + $0x30] sm:$0xff]
      %v294 = vld [vmem:[%s277 + $0x38] sm:$0xff]
      %v295 = vld [vmem:[%s277 + $0x40] sm:$0xff]
      %v296 = vld [vmem:[%s277 + $0x48] sm:$0xff]
      %v297 = vld [vmem:[%s277 + $0x50] sm:$0xff]
      %v298 = vld [vmem:[%s277 + $0x58] sm:$0xff]
      %v299 = vld [vmem:[%s277 + $0x60] sm:$0xff]
      %v300 = vld [vmem:[%s277 + $0x68] sm:$0xff]
      %v301 = vld [vmem:[%s277 + $0x70] sm:$0xff]
      %v302 = vld [vmem:[%s277 + $0x78] sm:$0xff]
      %v303 = vld [vmem:[%s277 + $0x80] sm:$0xff]
      %v304 = vld [vmem:[%s277 + $0x88] sm:$0xff]
      %v305 = vld [vmem:[%s277 + $0x90] sm:$0xff]
      %v306 = vld [vmem:[%s277 + $0x98] sm:$0xff]
      %v307 = vld [vmem:[%s277 + $0xa0] sm:$0xff]
      %v308 = vld [vmem:[%s277 + $0xa8] sm:$0xff]
      %v309 = vld [vmem:[%s277 + $0xb0] sm:$0xff]
      %v310 = vld [vmem:[%s277 + $0xb8] sm:$0xff]
      %v311 = vld [vmem:[%s277 + $0xc0] sm:$0xff]
      %v312 = vld [vmem:[%s277 + $0xc8] sm:$0xff]
      %v313 = vld [vmem:[%s277 + $0xd0] sm:$0xff]
      %v314 = vld [vmem:[%s277 + $0xd8] sm:$0xff]
      %v315 = vld [vmem:[%s277 + $0xe0] sm:$0xff]
      %v316 = vld [vmem:[%s277 + $0xe8] sm:$0xff]
      %v317 = vld [vmem:[%s277 + $0xf0] sm:$0xff]
      %v318 = vld [vmem:[%s277 + $0xf8] sm:$0xff]
      %v319 = vld [vmem:[%s277 + $0x100] sm:$0xff]
      %v320 = vld [vmem:[%s277 + $0x108] sm:$0xff]
      %v321 = vld [vmem:[%s277 + $0x110] sm:$0xff]
      %v322 = vld [vmem:[%s277 + $0x118] sm:$0xff]
      %v323 = vld [vmem:[%s277 + $0x120] sm:$0xff]
      %v324 = vld [vmem:[%s277 + $0x128] sm:$0xff]
      %v325 = vld [vmem:[%s277 + $0x130] sm:$0xff]
      %v326 = vld [vmem:[%s277 + $0x138] sm:$0xff]
      %v327 = vld [vmem:[%s277 + $0x140] sm:$0xff]
      %v328 = vld [vmem:[%s277 + $0x148] sm:$0xff]
      %v329 = vld [vmem:[%s277 + $0x150] sm:$0xff]
      %v330 = vld [vmem:[%s277 + $0x158] sm:$0xff]
      %v331 = vld [vmem:[%s277 + $0x160] sm:$0xff]
      %v332 = vld [vmem:[%s277 + $0x168] sm:$0xff]
      %v333 = vld [vmem:[%s277 + $0x170] sm:$0xff]
      %v334 = vld [vmem:[%s277 + $0x178] sm:$0xff]
      %v335 = vld [vmem:[%s277 + $0x180] sm:$0xff]
      %v336 = vld [vmem:[%s277 + $0x188] sm:$0xff]
      %v337 = vld [vmem:[%s277 + $0x190] sm:$0xff]
      %v338 = vld [vmem:[%s277 + $0x198] sm:$0xff]
      %v339 = vld [vmem:[%s277 + $0x1a0] sm:$0xff]
      %v340 = vld [vmem:[%s277 + $0x1a8] sm:$0xff]
      %v341 = vld [vmem:[%s277 + $0x1b0] sm:$0xff]
      %v342 = vld [vmem:[%s277 + $0x1b8] sm:$0xff]
      %v343 = vld [vmem:[%s277 + $0x1c0] sm:$0xff]
      %v344 = vld [vmem:[%s277 + $0x1c8] sm:$0xff]
      %v345 = vld [vmem:[%s277 + $0x1d0] sm:$0xff]
      %v346 = vld [vmem:[%s277 + $0x1d8] sm:$0xff]
      %v347 = vld [vmem:[%s277 + $0x1e0] sm:$0xff]
      %v348 = vld [vmem:[%s277 + $0x1e8] sm:$0xff]
      %v349 = vld [vmem:[%s277 + $0x1f0] sm:$0xff]
      %v350 = vld [vmem:[%s277 + $0x1f8] sm:$0xff]
      %v351 = vpack.c.bf16 %v289, %v287
      %v352 = vpack.c.bf16 %v290, %v288
      %v353 = vpack.c.bf16 %v293, %v291
      %v354 = vpack.c.bf16 %v294, %v292
      %v355 = vpack.c.bf16 %v297, %v295
      %v356 = vpack.c.bf16 %v298, %v296
      %v357 = vpack.c.bf16 %v301, %v299
      %v358 = vpack.c.bf16 %v302, %v300
      %v359 = vpack.c.bf16 %v305, %v303
      %v360 = vpack.c.bf16 %v306, %v304
      %v361 = vpack.c.bf16 %v309, %v307
      %v362 = vpack.c.bf16 %v310, %v308
      %v363 = vpack.c.bf16 %v313, %v311
      %v364 = vpack.c.bf16 %v314, %v312
      %v365 = vpack.c.bf16 %v317, %v315
      %v366 = vpack.c.bf16 %v318, %v316
      %v367 = vpack.c.bf16 %v321, %v319
      %v368 = vpack.c.bf16 %v322, %v320
      %v369 = vpack.c.bf16 %v325, %v323
      %v370 = vpack.c.bf16 %v326, %v324
      %v371 = vpack.c.bf16 %v329, %v327
      %v372 = vpack.c.bf16 %v330, %v328
      %v373 = vpack.c.bf16 %v333, %v331
      %v374 = vpack.c.bf16 %v334, %v332
      %v375 = vpack.c.bf16 %v337, %v335
      %v376 = vpack.c.bf16 %v338, %v336
      %v377 = vpack.c.bf16 %v341, %v339
      %v378 = vpack.c.bf16 %v342, %v340
      %v379 = vpack.c.bf16 %v345, %v343
      %v380 = vpack.c.bf16 %v346, %v344
      %v381 = vpack.c.bf16 %v349, %v347
      %v382 = vpack.c.bf16 %v350, %v348
      %v383 = vld [vmem:[%s1] sm:$0xf]
      %v384 = vld [vmem:[%s1 + $0x4] sm:$0xf]
      %v385 = vld [vmem:[%s1 + $0x8] sm:$0xf]
      %v386 = vld [vmem:[%s1 + $0xc] sm:$0xf]
      %v387 = vld [vmem:[%s1 + $0x10] sm:$0xf]
      %v388 = vld [vmem:[%s1 + $0x14] sm:$0xf]
      %v389 = vld [vmem:[%s1 + $0x18] sm:$0xf]
      %v390 = vld [vmem:[%s1 + $0x1c] sm:$0xf]
      %v391 = vld [vmem:[%s1 + $0x20] sm:$0xf]
      %v392 = vld [vmem:[%s1 + $0x24] sm:$0xf]
      %v393 = vld [vmem:[%s1 + $0x28] sm:$0xf]
      %v394 = vld [vmem:[%s1 + $0x2c] sm:$0xf]
      %v395 = vld [vmem:[%s1 + $0x30] sm:$0xf]
      %v396 = vld [vmem:[%s1 + $0x34] sm:$0xf]
      %v397 = vld [vmem:[%s1 + $0x38] sm:$0xf]
      %v398 = vld [vmem:[%s1 + $0x3c] sm:$0xf]
      %v399 = vld [vmem:[%s1 + $0x40] sm:$0xf]
      %v400 = vld [vmem:[%s1 + $0x44] sm:$0xf]
      %v401 = vld [vmem:[%s1 + $0x48] sm:$0xf]
      %v402 = vld [vmem:[%s1 + $0x4c] sm:$0xf]
      %v403 = vld [vmem:[%s1 + $0x50] sm:$0xf]
      %v404 = vld [vmem:[%s1 + $0x54] sm:$0xf]
      %v405 = vld [vmem:[%s1 + $0x58] sm:$0xf]
      %v406 = vld [vmem:[%s1 + $0x5c] sm:$0xf]
      %v407 = vld [vmem:[%s1 + $0x60] sm:$0xf]
      %v408 = vlaneseq
      %v409 = vshrl.u32 %v408, 7
      %v410 = vsub.s32 0, %v409
      %v411 = vrot.slane %v286, %v410
      %v437 = vunpack.c.l.b16 %v383
      %v438 = vunpack.c.l.b16 %v384
      %v439 = vunpack.c.l.b16 %v385
      %v440 = vunpack.c.l.b16 %v386
      %v441 = vunpack.c.l.b16 %v387
      %v442 = vunpack.c.l.b16 %v388
      %v443 = vunpack.c.l.b16 %v389
      %v444 = vunpack.c.l.b16 %v390
      %v445 = vunpack.c.l.b16 %v391
      %v446 = vunpack.c.l.b16 %v392
      %v447 = vunpack.c.l.b16 %v393
      %v448 = vunpack.c.l.b16 %v394
      %v449 = vunpack.c.l.b16 %v395
      %v450 = vunpack.c.l.b16 %v396
      %v451 = vunpack.c.l.b16 %v397
      %v452 = vunpack.c.l.b16 %v398
      %v453 = vunpack.c.l.b16 %v399
      %v454 = vunpack.c.l.b16 %v400
      %v455 = vunpack.c.l.b16 %v401
      %v456 = vunpack.c.l.b16 %v402
      %v457 = vunpack.c.l.b16 %v403
      %v458 = vunpack.c.l.b16 %v404
      %v459 = vunpack.c.l.b16 %v405
      %v460 = vunpack.c.l.b16 %v406
      %v461 = vunpack.c.l.b16 %v407
      %v462 = vpack.c.b16 %v438, %v437
      %v463 = vpack.c.b16 %v440, %v439
      %v464 = vpack.c.b16 %v442, %v441
      %v465 = vpack.c.b16 %v444, %v443
      %v466 = vpack.c.b16 %v446, %v445
      %v467 = vpack.c.b16 %v448, %v447
      %v468 = vpack.c.b16 %v450, %v449
      %v469 = vpack.c.b16 %v452, %v451
      %v470 = vpack.c.b16 %v454, %v453
      %v471 = vpack.c.b16 %v456, %v455
      %v472 = vpack.c.b16 %v458, %v457
      %v473 = vpack.c.b16 %v460, %v459
      %v474 = vpack.c.b16 %v461, %v461
      %vm487 = vcmask 588800
      %v489 = vsel %vm487, %v352, 0
      %v492 = vsel %vm487, %v354, 0
      %v495 = vsel %vm487, %v356, 0
      %v498 = vsel %vm487, %v358, 0
      %v501 = vsel %vm487, %v360, 0
      %v504 = vsel %vm487, %v362, 0
      %v507 = vsel %vm487, %v364, 0
      %v510 = vsel %vm487, %v366, 0
      %v513 = vsel %vm487, %v368, 0
      %v516 = vsel %vm487, %v370, 0
      %v519 = vsel %vm487, %v372, 0
      %v522 = vsel %vm487, %v374, 0
      %v525 = vsel %vm487, %v376, 0
      %v528 = vsel %vm487, %v378, 0
      %v531 = vsel %vm487, %v380, 0
      %v534 = vsel %vm487, %v382, 0
      %vm536 = vcmask 1043456
      %v538 = vsel %vm536, %v474, 0
      %540 = vmatprep.subr.bf16.mxu0 0
      %541 = vmatpush1.bf16.msra.mxu0 %v462
      %542 = vmatprep.subr.bf16.mxu0 0
      %543 = vmatpush1.bf16.msra.mxu0 %v463
      %544 = vmatprep.subr.bf16.mxu0 0
      %545 = vmatpush1.bf16.msra.mxu0 %v464
      %546 = vmatprep.subr.bf16.mxu0 0
      %547 = vmatpush1.bf16.msra.mxu0 %v465
      %548 = vmatprep.subr.bf16.mxu0 0
      %549 = vmatpush1.bf16.msra.mxu0 %v466
      %550 = vmatprep.subr.bf16.mxu0 0
      %551 = vmatpush1.bf16.msra.mxu0 %v467
      %552 = vmatprep.subr.bf16.mxu0 0
      %553 = vmatpush1.bf16.msra.mxu0 %v468
      %554 = vmatprep.subr.bf16.mxu0 0
      %555 = vmatpush1.bf16.msra.mxu0 %v469
      %556 = vmatprep.subr.bf16.mxu0 0
      %557 = vmatpush1.bf16.msra.mxu0 %v470
      %558 = vmatprep.subr.bf16.mxu0 0
      %559 = vmatpush1.bf16.msra.mxu0 %v471
      %560 = vmatprep.subr.bf16.mxu0 0
      %561 = vmatpush1.bf16.msra.mxu0 %v472
      %562 = vmatprep.subr.bf16.mxu0 0
      %563 = vmatpush1.bf16.msra.mxu0 %v473
      %564 = vmatprep.subr.bf16.mxu0 0
      %565 = vmatpush1.bf16.msra.mxu0 %v538
      %566 = vmatprep.subr.bf16.mxu0 0
      %567 = vmatpush1.bf16.msra.mxu0 0
      %568 = vmatprep.subr.bf16.mxu0 0
      %569 = vmatpush1.bf16.msra.mxu0 0
      %570 = vmatprep.subr.bf16.mxu0 0
      %571 = vmatpush1.bf16.msra.mxu0 0
      %572 = vmatprep.mubr.bf16.mxu0 %v489
      %573 = vmatmul.mubr.bf16.gmra.mrb[0].mxu0 %v351
      %v574 = vpop.f32.mrb[0].mxu0
      %v575 = vadd.f32 %v411, %v574
      %v576 = vpop.f32.mrb[0].mxu0
      %v577 = vpop.f32.mrb[0].mxu0
      %v578 = vadd.f32 %v411, %v577
      %v579 = vpop.f32.mrb[0].mxu0
      %580 = vmatprep.mubr.bf16.mxu0 %v492
      %581 = vmatmul.mubr.bf16.gmra.mrb[0].mxu0 %v353
      %v582 = vpop.f32.mrb[0].mxu0
      %v583 = vadd.f32 %v411, %v582
      %v584 = vpop.f32.mrb[0].mxu0
      %v585 = vpop.f32.mrb[0].mxu0
      %v586 = vadd.f32 %v411, %v585
      %v587 = vpop.f32.mrb[0].mxu0
      %588 = vmatprep.mubr.bf16.mxu0 %v495
      %589 = vmatmul.mubr.bf16.gmra.mrb[0].mxu0 %v355
      %v590 = vpop.f32.mrb[0].mxu0
      %v591 = vadd.f32 %v411, %v590
      %v592 = vpop.f32.mrb[0].mxu0
      %v593 = vpop.f32.mrb[0].mxu0
      %v594 = vadd.f32 %v411, %v593
      %v595 = vpop.f32.mrb[0].mxu0
      %596 = vmatprep.mubr.bf16.mxu0 %v498
      %597 = vmatmul.mubr.bf16.gmra.mrb[0].mxu0 %v357
      %v598 = vpop.f32.mrb[0].mxu0
      %v599 = vadd.f32 %v411, %v598
      %v600 = vpop.f32.mrb[0].mxu0
      %v601 = vpop.f32.mrb[0].mxu0
      %v602 = vadd.f32 %v411, %v601
      %v603 = vpop.f32.mrb[0].mxu0
      %604 = vmatprep.mubr.bf16.mxu0 %v501
      %605 = vmatmul.mubr.bf16.gmra.mrb[0].mxu0 %v359
      %v606 = vpop.f32.mrb[0].mxu0
      %v607 = vadd.f32 %v411, %v606
      %v608 = vpop.f32.mrb[0].mxu0
      %v609 = vpop.f32.mrb[0].mxu0
      %v610 = vadd.f32 %v411, %v609
      %v611 = vpop.f32.mrb[0].mxu0
      %612 = vmatprep.mubr.bf16.mxu0 %v504
      %613 = vmatmul.mubr.bf16.gmra.mrb[0].mxu0 %v361
      %v614 = vpop.f32.mrb[0].mxu0
      %v615 = vadd.f32 %v411, %v614
      %v616 = vpop.f32.mrb[0].mxu0
      %v617 = vpop.f32.mrb[0].mxu0
      %v618 = vadd.f32 %v411, %v617
      %v619 = vpop.f32.mrb[0].mxu0
      %620 = vmatprep.mubr.bf16.mxu0 %v507
      %621 = vmatmul.mubr.bf16.gmra.mrb[0].mxu0 %v363
      %v622 = vpop.f32.mrb[0].mxu0
      %v623 = vadd.f32 %v411, %v622
      %v624 = vpop.f32.mrb[0].mxu0
      %v625 = vpop.f32.mrb[0].mxu0
      %v626 = vadd.f32 %v411, %v625
      %v627 = vpop.f32.mrb[0].mxu0
      %628 = vmatprep.mubr.bf16.mxu0 %v510
      %629 = vmatmul.mubr.bf16.gmra.mrb[0].mxu0 %v365
      %v630 = vpop.f32.mrb[0].mxu0
      %v631 = vadd.f32 %v411, %v630
      %v632 = vpop.f32.mrb[0].mxu0
      %v633 = vpop.f32.mrb[0].mxu0
      %v634 = vadd.f32 %v411, %v633
      %v635 = vpop.f32.mrb[0].mxu0
      %636 = vmatprep.mubr.bf16.mxu0 %v513
      %637 = vmatmul.mubr.bf16.gmra.mrb[0].mxu0 %v367
      %v638 = vpop.f32.mrb[0].mxu0
      %v639 = vadd.f32 %v411, %v638
      %v640 = vpop.f32.mrb[0].mxu0
      %v641 = vpop.f32.mrb[0].mxu0
      %v642 = vadd.f32 %v411, %v641
      %v643 = vpop.f32.mrb[0].mxu0
      %644 = vmatprep.mubr.bf16.mxu0 %v516
      %645 = vmatmul.mubr.bf16.gmra.mrb[0].mxu0 %v369
      %v646 = vpop.f32.mrb[0].mxu0
      %v647 = vadd.f32 %v411, %v646
      %v648 = vpop.f32.mrb[0].mxu0
      %v649 = vpop.f32.mrb[0].mxu0
      %v650 = vadd.f32 %v411, %v649
      %v651 = vpop.f32.mrb[0].mxu0
      %652 = vmatprep.mubr.bf16.mxu0 %v519
      %653 = vmatmul.mubr.bf16.gmra.mrb[0].mxu0 %v371
      %v654 = vpop.f32.mrb[0].mxu0
      %v655 = vadd.f32 %v411, %v654
      %v656 = vpop.f32.mrb[0].mxu0
      %v657 = vpop.f32.mrb[0].mxu0
      %v658 = vadd.f32 %v411, %v657
      %v659 = vpop.f32.mrb[0].mxu0
      %660 = vmatprep.mubr.bf16.mxu0 %v522
      %661 = vmatmul.mubr.bf16.gmra.mrb[0].mxu0 %v373
      %v662 = vpop.f32.mrb[0].mxu0
      %v663 = vadd.f32 %v411, %v662
      %v664 = vpop.f32.mrb[0].mxu0
      %v665 = vpop.f32.mrb[0].mxu0
      %v666 = vadd.f32 %v411, %v665
      %v667 = vpop.f32.mrb[0].mxu0
      %668 = vmatprep.mubr.bf16.mxu0 %v525
      %669 = vmatmul.mubr.bf16.gmra.mrb[0].mxu0 %v375
      %v670 = vpop.f32.mrb[0].mxu0
      %v671 = vadd.f32 %v411, %v670
      %v672 = vpop.f32.mrb[0].mxu0
      %v673 = vpop.f32.mrb[0].mxu0
      %v674 = vadd.f32 %v411, %v673
      %v675 = vpop.f32.mrb[0].mxu0
      %676 = vmatprep.mubr.bf16.mxu0 %v528
      %677 = vmatmul.mubr.bf16.gmra.mrb[0].mxu0 %v377
      %v678 = vpop.f32.mrb[0].mxu0
      %v679 = vadd.f32 %v411, %v678
      %v680 = vpop.f32.mrb[0].mxu0
      %v681 = vpop.f32.mrb[0].mxu0
      %v682 = vadd.f32 %v411, %v681
      %v683 = vpop.f32.mrb[0].mxu0
      %684 = vmatprep.mubr.bf16.mxu0 %v531
      %685 = vmatmul.mubr.bf16.gmra.mrb[0].mxu0 %v379
      %v686 = vpop.f32.mrb[0].mxu0
      %v687 = vadd.f32 %v411, %v686
      %v688 = vpop.f32.mrb[0].mxu0
      %v689 = vpop.f32.mrb[0].mxu0
      %v690 = vadd.f32 %v411, %v689
      %v691 = vpop.f32.mrb[0].mxu0
      %692 = vmatprep.mubr.bf16.mxu0 %v534
      %693 = vmatmul.mubr.bf16.gmra.mrb[0].mxu0 %v381
      %v694 = vpop.f32.mrb[0].mxu0
      %v695 = vadd.f32 %v411, %v694
      %v696 = vpop.f32.mrb[0].mxu0
      %v697 = vpop.f32.mrb[0].mxu0
      %v698 = vadd.f32 %v411, %v697
      %v699 = vpop.f32.mrb[0].mxu0
      %700 = vdwg.mxu0
      %vm701 = vcmp.gt.f32.partialorder %v575, 0.0
      %vm702 = vcmp.gt.f32.partialorder %v578, 0.0
      %vm703 = vcmp.gt.f32.partialorder %v583, 0.0
      %vm704 = vcmp.gt.f32.partialorder %v586, 0.0
      %vm705 = vcmp.gt.f32.partialorder %v591, 0.0
      %vm706 = vcmp.gt.f32.partialorder %v594, 0.0
      %vm707 = vcmp.gt.f32.partialorder %v599, 0.0
      %vm708 = vcmp.gt.f32.partialorder %v602, 0.0
      %vm709 = vcmp.gt.f32.partialorder %v607, 0.0
      %vm710 = vcmp.gt.f32.partialorder %v610, 0.0
      %vm711 = vcmp.gt.f32.partialorder %v615, 0.0
      %vm712 = vcmp.gt.f32.partialorder %v618, 0.0
      %vm713 = vcmp.gt.f32.partialorder %v623, 0.0
      %vm714 = vcmp.gt.f32.partialorder %v626, 0.0
      %vm715 = vcmp.gt.f32.partialorder %v631, 0.0
      %vm716 = vcmp.gt.f32.partialorder %v634, 0.0
      %vm717 = vcmp.gt.f32.partialorder %v639, 0.0
      %vm718 = vcmp.gt.f32.partialorder %v642, 0.0
      %vm719 = vcmp.gt.f32.partialorder %v647, 0.0
      %vm720 = vcmp.gt.f32.partialorder %v650, 0.0
      %vm721 = vcmp.gt.f32.partialorder %v655, 0.0
      %vm722 = vcmp.gt.f32.partialorder %v658, 0.0
      %vm723 = vcmp.gt.f32.partialorder %v663, 0.0
      %vm724 = vcmp.gt.f32.partialorder %v666, 0.0
      %vm725 = vcmp.gt.f32.partialorder %v671, 0.0
      %vm726 = vcmp.gt.f32.partialorder %v674, 0.0
      %vm727 = vcmp.gt.f32.partialorder %v679, 0.0
      %vm728 = vcmp.gt.f32.partialorder %v682, 0.0
      %vm729 = vcmp.gt.f32.partialorder %v687, 0.0
      %vm730 = vcmp.gt.f32.partialorder %v690, 0.0
      %vm731 = vcmp.gt.f32.partialorder %v695, 0.0
      %vm732 = vcmp.gt.f32.partialorder %v698, 0.0
      %v733 = vmul.f32 %v575, 0.01
      %v734 = vmul.f32 %v578, 0.01
      %v735 = vmul.f32 %v583, 0.01
      %v736 = vmul.f32 %v586, 0.01
      %v737 = vmul.f32 %v591, 0.01
      %v738 = vmul.f32 %v594, 0.01
      %v739 = vmul.f32 %v599, 0.01
      %v740 = vmul.f32 %v602, 0.01
      %v741 = vmul.f32 %v607, 0.01
      %v742 = vmul.f32 %v610, 0.01
      %v743 = vmul.f32 %v615, 0.01
      %v744 = vmul.f32 %v618, 0.01
      %v745 = vmul.f32 %v623, 0.01
      %v746 = vmul.f32 %v626, 0.01
      %v747 = vmul.f32 %v631, 0.01
      %v748 = vmul.f32 %v634, 0.01
      %v749 = vmul.f32 %v639, 0.01
      %v750 = vmul.f32 %v642, 0.01
      %v751 = vmul.f32 %v647, 0.01
      %v752 = vmul.f32 %v650, 0.01
      %v753 = vmul.f32 %v655, 0.01
      %v754 = vmul.f32 %v658, 0.01
      %v755 = vmul.f32 %v663, 0.01
      %v756 = vmul.f32 %v666, 0.01
      %v757 = vmul.f32 %v671, 0.01
      %v758 = vmul.f32 %v674, 0.01
      %v759 = vmul.f32 %v679, 0.01
      %v760 = vmul.f32 %v682, 0.01
      %v761 = vmul.f32 %v687, 0.01
      %v762 = vmul.f32 %v690, 0.01
      %v763 = vmul.f32 %v695, 0.01
      %v764 = vmul.f32 %v698, 0.01
      %v765 = vsel %vm701, %v575, %v733
      %v766 = vsel %vm702, %v578, %v734
      %v767 = vsel %vm703, %v583, %v735
      %v768 = vsel %vm704, %v586, %v736
      %v769 = vsel %vm705, %v591, %v737
      %v770 = vsel %vm706, %v594, %v738
      %v771 = vsel %vm707, %v599, %v739
      %v772 = vsel %vm708, %v602, %v740
      %v773 = vsel %vm709, %v607, %v741
      %v774 = vsel %vm710, %v610, %v742
      %v775 = vsel %vm711, %v615, %v743
      %v776 = vsel %vm712, %v618, %v744
      %v777 = vsel %vm713, %v623, %v745
      %v778 = vsel %vm714, %v626, %v746
      %v779 = vsel %vm715, %v631, %v747
      %v780 = vsel %vm716, %v634, %v748
      %v781 = vsel %vm717, %v639, %v749
      %v782 = vsel %vm718, %v642, %v750
      %v783 = vsel %vm719, %v647, %v751
      %v784 = vsel %vm720, %v650, %v752
      %v785 = vsel %vm721, %v655, %v753
      %v786 = vsel %vm722, %v658, %v754
      %v787 = vsel %vm723, %v663, %v755
      %v788 = vsel %vm724, %v666, %v756
      %v789 = vsel %vm725, %v671, %v757
      %v790 = vsel %vm726, %v674, %v758
      %v791 = vsel %vm727, %v679, %v759
      %v792 = vsel %vm728, %v682, %v760
      %v793 = vsel %vm729, %v687, %v761
      %v794 = vsel %vm730, %v690, %v762
      %v795 = vsel %vm731, %v695, %v763
      %v796 = vsel %vm732, %v698, %v764
      %v797 = vpack.c.bf16 %v766, %v765
      %v798 = vpack.c.bf16 %v768, %v767
      %v799 = vpack.c.bf16 %v770, %v769
      %v800 = vpack.c.bf16 %v772, %v771
      %v801 = vpack.c.bf16 %v774, %v773
      %v802 = vpack.c.bf16 %v776, %v775
      %v803 = vpack.c.bf16 %v778, %v777
      %v804 = vpack.c.bf16 %v780, %v779
      %v805 = vpack.c.bf16 %v782, %v781
      %v806 = vpack.c.bf16 %v784, %v783
      %v807 = vpack.c.bf16 %v786, %v785
      %v808 = vpack.c.bf16 %v788, %v787
      %v809 = vpack.c.bf16 %v790, %v789
      %v810 = vpack.c.bf16 %v792, %v791
      %v811 = vpack.c.bf16 %v794, %v793
      %v812 = vpack.c.bf16 %v796, %v795
      %v813 = vld [vmem:[%s2] sm:$0xf]
      %v814 = vld [vmem:[%s2 + $0x4] sm:$0xf]
      %v815 = vld [vmem:[%s2 + $0x8] sm:$0xf]
      %v816 = vld [vmem:[%s2 + $0xc] sm:$0xf]
      %v817 = vld [vmem:[%s2 + $0x10] sm:$0xf]
      %v818 = vld [vmem:[%s2 + $0x14] sm:$0xf]
      %v819 = vld [vmem:[%s2 + $0x18] sm:$0xf]
      %v820 = vld [vmem:[%s2 + $0x1c] sm:$0xf]
      %v821 = vld [vmem:[%s2 + $0x20] sm:$0xf]
      %v822 = vld [vmem:[%s2 + $0x24] sm:$0xf]
      %v823 = vld [vmem:[%s2 + $0x28] sm:$0xf]
      %v824 = vld [vmem:[%s2 + $0x2c] sm:$0xf]
      %v825 = vld [vmem:[%s2 + $0x30] sm:$0xf]
      %v826 = vld [vmem:[%s2 + $0x34] sm:$0xf]
      %v827 = vld [vmem:[%s2 + $0x38] sm:$0xf]
      %v828 = vld [vmem:[%s2 + $0x3c] sm:$0xf]
      %v829 = vlaneseq
      %v830 = vshrl.u32 %v829, 7
      %v831 = vsub.s32 1, %v830
      %v832 = vrot.slane %v286, %v831
      %v849 = vunpack.c.l.b16 %v813
      %v850 = vunpack.c.l.b16 %v814
      %v851 = vunpack.c.l.b16 %v815
      %v852 = vunpack.c.l.b16 %v816
      %v853 = vunpack.c.l.b16 %v817
      %v854 = vunpack.c.l.b16 %v818
      %v855 = vunpack.c.l.b16 %v819
      %v856 = vunpack.c.l.b16 %v820
      %v857 = vunpack.c.l.b16 %v821
      %v858 = vunpack.c.l.b16 %v822
      %v859 = vunpack.c.l.b16 %v823
      %v860 = vunpack.c.l.b16 %v824
      %v861 = vunpack.c.l.b16 %v825
      %v862 = vunpack.c.l.b16 %v826
      %v863 = vunpack.c.l.b16 %v827
      %v864 = vunpack.c.l.b16 %v828
      %v865 = vpack.c.b16 %v850, %v849
      %v866 = vpack.c.b16 %v852, %v851
      %v867 = vpack.c.b16 %v854, %v853
      %v868 = vpack.c.b16 %v856, %v855
      %v869 = vpack.c.b16 %v858, %v857
      %v870 = vpack.c.b16 %v860, %v859
      %v871 = vpack.c.b16 %v862, %v861
      %v872 = vpack.c.b16 %v864, %v863
      %881 = vmatprep.subr.bf16.mxu0 0
      %882 = vmatpush1.bf16.msra.mxu0 %v865
      %883 = vmatprep.subr.bf16.mxu0 0
      %884 = vmatpush1.bf16.msra.mxu0 %v866
      %885 = vmatprep.subr.bf16.mxu0 0
      %886 = vmatpush1.bf16.msra.mxu0 %v867
      %887 = vmatprep.subr.bf16.mxu0 0
      %888 = vmatpush1.bf16.msra.mxu0 %v868
      %889 = vmatprep.subr.bf16.mxu0 0
      %890 = vmatpush1.bf16.msra.mxu0 %v869
      %891 = vmatprep.subr.bf16.mxu0 0
      %892 = vmatpush1.bf16.msra.mxu0 %v870
      %893 = vmatprep.subr.bf16.mxu0 0
      %894 = vmatpush1.bf16.msra.mxu0 %v871
      %895 = vmatprep.subr.bf16.mxu0 0
      %896 = vmatpush1.bf16.msra.mxu0 %v872
      %897 = vmatprep.subr.bf16.mxu0 0
      %898 = vmatpush1.bf16.msra.mxu0 0
      %899 = vmatprep.subr.bf16.mxu0 0
      %900 = vmatpush1.bf16.msra.mxu0 0
      %901 = vmatprep.subr.bf16.mxu0 0
      %902 = vmatpush1.bf16.msra.mxu0 0
      %903 = vmatprep.subr.bf16.mxu0 0
      %904 = vmatpush1.bf16.msra.mxu0 0
      %905 = vmatprep.subr.bf16.mxu0 0
      %906 = vmatpush1.bf16.msra.mxu0 0
      %907 = vmatprep.subr.bf16.mxu0 0
      %908 = vmatpush1.bf16.msra.mxu0 0
      %909 = vmatprep.subr.bf16.mxu0 0
      %910 = vmatpush1.bf16.msra.mxu0 0
      %911 = vmatprep.subr.bf16.mxu0 0
      %912 = vmatpush1.bf16.msra.mxu0 0
      %913 = vmatprep.mubr.bf16.mxu0 0
      %914 = vmatmul.mubr.bf16.gmra.mrb[0].mxu0 %v797
      %v915 = vpop.f32.mrb[0].mxu0
      %v916 = vadd.f32 %v832, %v915
      %v917 = vpop.f32.mrb[0].mxu0
      %v918 = vpop.f32.mrb[0].mxu0
      %v919 = vadd.f32 %v832, %v918
      %v920 = vpop.f32.mrb[0].mxu0
      %921 = vmatprep.mubr.bf16.mxu0 0
      %922 = vmatmul.mubr.bf16.gmra.mrb[0].mxu0 %v798
      %v923 = vpop.f32.mrb[0].mxu0
      %v924 = vadd.f32 %v832, %v923
      %v925 = vpop.f32.mrb[0].mxu0
      %v926 = vpop.f32.mrb[0].mxu0
      %v927 = vadd.f32 %v832, %v926
      %v928 = vpop.f32.mrb[0].mxu0
      %929 = vmatprep.mubr.bf16.mxu0 0
      %930 = vmatmul.mubr.bf16.gmra.mrb[0].mxu0 %v799
      %v931 = vpop.f32.mrb[0].mxu0
      %v932 = vadd.f32 %v832, %v931
      %v933 = vpop.f32.mrb[0].mxu0
      %v934 = vpop.f32.mrb[0].mxu0
      %v935 = vadd.f32 %v832, %v934
      %v936 = vpop.f32.mrb[0].mxu0
      %937 = vmatprep.mubr.bf16.mxu0 0
      %938 = vmatmul.mubr.bf16.gmra.mrb[0].mxu0 %v800
      %v939 = vpop.f32.mrb[0].mxu0
      %v940 = vadd.f32 %v832, %v939
      %v941 = vpop.f32.mrb[0].mxu0
      %v942 = vpop.f32.mrb[0].mxu0
      %v943 = vadd.f32 %v832, %v942
      %v944 = vpop.f32.mrb[0].mxu0
      %945 = vmatprep.mubr.bf16.mxu0 0
      %946 = vmatmul.mubr.bf16.gmra.mrb[0].mxu0 %v801
      %v947 = vpop.f32.mrb[0].mxu0
      %v948 = vadd.f32 %v832, %v947
      %v949 = vpop.f32.mrb[0].mxu0
      %v950 = vpop.f32.mrb[0].mxu0
      %v951 = vadd.f32 %v832, %v950
      %v952 = vpop.f32.mrb[0].mxu0
      %953 = vmatprep.mubr.bf16.mxu0 0
      %954 = vmatmul.mubr.bf16.gmra.mrb[0].mxu0 %v802
      %v955 = vpop.f32.mrb[0].mxu0
      %v956 = vadd.f32 %v832, %v955
      %v957 = vpop.f32.mrb[0].mxu0
      %v958 = vpop.f32.mrb[0].mxu0
      %v959 = vadd.f32 %v832, %v958
      %v960 = vpop.f32.mrb[0].mxu0
      %961 = vmatprep.mubr.bf16.mxu0 0
      %962 = vmatmul.mubr.bf16.gmra.mrb[0].mxu0 %v803
      %v963 = vpop.f32.mrb[0].mxu0
      %v964 = vadd.f32 %v832, %v963
      %v965 = vpop.f32.mrb[0].mxu0
      %v966 = vpop.f32.mrb[0].mxu0
      %v967 = vadd.f32 %v832, %v966
      %v968 = vpop.f32.mrb[0].mxu0
      %969 = vmatprep.mubr.bf16.mxu0 0
      %970 = vmatmul.mubr.bf16.gmra.mrb[0].mxu0 %v804
      %v971 = vpop.f32.mrb[0].mxu0
      %v972 = vadd.f32 %v832, %v971
      %v973 = vpop.f32.mrb[0].mxu0
      %v974 = vpop.f32.mrb[0].mxu0
      %v975 = vadd.f32 %v832, %v974
      %v976 = vpop.f32.mrb[0].mxu0
      %977 = vmatprep.mubr.bf16.mxu0 0
      %978 = vmatmul.mubr.bf16.gmra.mrb[0].mxu0 %v805
      %v979 = vpop.f32.mrb[0].mxu0
      %v980 = vadd.f32 %v832, %v979
      %v981 = vpop.f32.mrb[0].mxu0
      %v982 = vpop.f32.mrb[0].mxu0
      %v983 = vadd.f32 %v832, %v982
      %v984 = vpop.f32.mrb[0].mxu0
      %985 = vmatprep.mubr.bf16.mxu0 0
      %986 = vmatmul.mubr.bf16.gmra.mrb[0].mxu0 %v806
      %v987 = vpop.f32.mrb[0].mxu0
      %v988 = vadd.f32 %v832, %v987
      %v989 = vpop.f32.mrb[0].mxu0
      %v990 = vpop.f32.mrb[0].mxu0
      %v991 = vadd.f32 %v832, %v990
      %v992 = vpop.f32.mrb[0].mxu0
      %993 = vmatprep.mubr.bf16.mxu0 0
      %994 = vmatmul.mubr.bf16.gmra.mrb[0].mxu0 %v807
      %v995 = vpop.f32.mrb[0].mxu0
      %v996 = vadd.f32 %v832, %v995
      %v997 = vpop.f32.mrb[0].mxu0
      %v998 = vpop.f32.mrb[0].mxu0
      %v999 = vadd.f32 %v832, %v998
      %v1000 = vpop.f32.mrb[0].mxu0
      %1001 = vmatprep.mubr.bf16.mxu0 0
      %1002 = vmatmul.mubr.bf16.gmra.mrb[0].mxu0 %v808
      %v1003 = vpop.f32.mrb[0].mxu0
      %v1004 = vadd.f32 %v832, %v1003
      %v1005 = vpop.f32.mrb[0].mxu0
      %v1006 = vpop.f32.mrb[0].mxu0
      %v1007 = vadd.f32 %v832, %v1006
      %v1008 = vpop.f32.mrb[0].mxu0
      %1009 = vmatprep.mubr.bf16.mxu0 0
      %1010 = vmatmul.mubr.bf16.gmra.mrb[0].mxu0 %v809
      %v1011 = vpop.f32.mrb[0].mxu0
      %v1012 = vadd.f32 %v832, %v1011
      %v1013 = vpop.f32.mrb[0].mxu0
      %v1014 = vpop.f32.mrb[0].mxu0
      %v1015 = vadd.f32 %v832, %v1014
      %v1016 = vpop.f32.mrb[0].mxu0
      %1017 = vmatprep.mubr.bf16.mxu0 0
      %1018 = vmatmul.mubr.bf16.gmra.mrb[0].mxu0 %v810
      %v1019 = vpop.f32.mrb[0].mxu0
      %v1020 = vadd.f32 %v832, %v1019
      %v1021 = vpop.f32.mrb[0].mxu0
      %v1022 = vpop.f32.mrb[0].mxu0
      %v1023 = vadd.f32 %v832, %v1022
      %v1024 = vpop.f32.mrb[0].mxu0
      %1025 = vmatprep.mubr.bf16.mxu0 0
      %1026 = vmatmul.mubr.bf16.gmra.mrb[0].mxu0 %v811
      %v1027 = vpop.f32.mrb[0].mxu0
      %v1028 = vadd.f32 %v832, %v1027
      %v1029 = vpop.f32.mrb[0].mxu0
      %v1030 = vpop.f32.mrb[0].mxu0
      %v1031 = vadd.f32 %v832, %v1030
      %v1032 = vpop.f32.mrb[0].mxu0
      %1033 = vmatprep.mubr.bf16.mxu0 0
      %1034 = vmatmul.mubr.bf16.gmra.mrb[0].mxu0 %v812
      %v1035 = vpop.f32.mrb[0].mxu0
      %v1036 = vadd.f32 %v832, %v1035
      %v1037 = vpop.f32.mrb[0].mxu0
      %v1038 = vpop.f32.mrb[0].mxu0
      %v1039 = vadd.f32 %v832, %v1038
      %v1040 = vpop.f32.mrb[0].mxu0
      %1041 = vdwg.mxu0
      %vm1042 = vcmp.gt.f32.partialorder %v916, 0.0
      %vm1043 = vcmp.gt.f32.partialorder %v919, 0.0
      %vm1044 = vcmp.gt.f32.partialorder %v924, 0.0
      %vm1045 = vcmp.gt.f32.partialorder %v927, 0.0
      %vm1046 = vcmp.gt.f32.partialorder %v932, 0.0
      %vm1047 = vcmp.gt.f32.partialorder %v935, 0.0
      %vm1048 = vcmp.gt.f32.partialorder %v940, 0.0
      %vm1049 = vcmp.gt.f32.partialorder %v943, 0.0
      %vm1050 = vcmp.gt.f32.partialorder %v948, 0.0
      %vm1051 = vcmp.gt.f32.partialorder %v951, 0.0
      %vm1052 = vcmp.gt.f32.partialorder %v956, 0.0
      %vm1053 = vcmp.gt.f32.partialorder %v959, 0.0
      %vm1054 = vcmp.gt.f32.partialorder %v964, 0.0
      %vm1055 = vcmp.gt.f32.partialorder %v967, 0.0
      %vm1056 = vcmp.gt.f32.partialorder %v972, 0.0
      %vm1057 = vcmp.gt.f32.partialorder %v975, 0.0
      %vm1058 = vcmp.gt.f32.partialorder %v980, 0.0
      %vm1059 = vcmp.gt.f32.partialorder %v983, 0.0
      %vm1060 = vcmp.gt.f32.partialorder %v988, 0.0
      %vm1061 = vcmp.gt.f32.partialorder %v991, 0.0
      %vm1062 = vcmp.gt.f32.partialorder %v996, 0.0
      %vm1063 = vcmp.gt.f32.partialorder %v999, 0.0
      %vm1064 = vcmp.gt.f32.partialorder %v1004, 0.0
      %vm1065 = vcmp.gt.f32.partialorder %v1007, 0.0
      %vm1066 = vcmp.gt.f32.partialorder %v1012, 0.0
      %vm1067 = vcmp.gt.f32.partialorder %v1015, 0.0
      %vm1068 = vcmp.gt.f32.partialorder %v1020, 0.0
      %vm1069 = vcmp.gt.f32.partialorder %v1023, 0.0
      %vm1070 = vcmp.gt.f32.partialorder %v1028, 0.0
      %vm1071 = vcmp.gt.f32.partialorder %v1031, 0.0
      %vm1072 = vcmp.gt.f32.partialorder %v1036, 0.0
      %vm1073 = vcmp.gt.f32.partialorder %v1039, 0.0
      %v1074 = vmul.f32 %v916, 0.01
      %v1075 = vmul.f32 %v919, 0.01
      %v1076 = vmul.f32 %v924, 0.01
      %v1077 = vmul.f32 %v927, 0.01
      %v1078 = vmul.f32 %v932, 0.01
      %v1079 = vmul.f32 %v935, 0.01
      %v1080 = vmul.f32 %v940, 0.01
      %v1081 = vmul.f32 %v943, 0.01
      %v1082 = vmul.f32 %v948, 0.01
      %v1083 = vmul.f32 %v951, 0.01
      %v1084 = vmul.f32 %v956, 0.01
      %v1085 = vmul.f32 %v959, 0.01
      %v1086 = vmul.f32 %v964, 0.01
      %v1087 = vmul.f32 %v967, 0.01
      %v1088 = vmul.f32 %v972, 0.01
      %v1089 = vmul.f32 %v975, 0.01
      %v1090 = vmul.f32 %v980, 0.01
      %v1091 = vmul.f32 %v983, 0.01
      %v1092 = vmul.f32 %v988, 0.01
      %v1093 = vmul.f32 %v991, 0.01
      %v1094 = vmul.f32 %v996, 0.01
      %v1095 = vmul.f32 %v999, 0.01
      %v1096 = vmul.f32 %v1004, 0.01
      %v1097 = vmul.f32 %v1007, 0.01
      %v1098 = vmul.f32 %v1012, 0.01
      %v1099 = vmul.f32 %v1015, 0.01
      %v1100 = vmul.f32 %v1020, 0.01
      %v1101 = vmul.f32 %v1023, 0.01
      %v1102 = vmul.f32 %v1028, 0.01
      %v1103 = vmul.f32 %v1031, 0.01
      %v1104 = vmul.f32 %v1036, 0.01
      %v1105 = vmul.f32 %v1039, 0.01
      %v1106 = vsel %vm1042, %v916, %v1074
      %v1107 = vsel %vm1043, %v919, %v1075
      %v1108 = vsel %vm1044, %v924, %v1076
      %v1109 = vsel %vm1045, %v927, %v1077
      %v1110 = vsel %vm1046, %v932, %v1078
      %v1111 = vsel %vm1047, %v935, %v1079
      %v1112 = vsel %vm1048, %v940, %v1080
      %v1113 = vsel %vm1049, %v943, %v1081
      %v1114 = vsel %vm1050, %v948, %v1082
      %v1115 = vsel %vm1051, %v951, %v1083
      %v1116 = vsel %vm1052, %v956, %v1084
      %v1117 = vsel %vm1053, %v959, %v1085
      %v1118 = vsel %vm1054, %v964, %v1086
      %v1119 = vsel %vm1055, %v967, %v1087
      %v1120 = vsel %vm1056, %v972, %v1088
      %v1121 = vsel %vm1057, %v975, %v1089
      %v1122 = vsel %vm1058, %v980, %v1090
      %v1123 = vsel %vm1059, %v983, %v1091
      %v1124 = vsel %vm1060, %v988, %v1092
      %v1125 = vsel %vm1061, %v991, %v1093
      %v1126 = vsel %vm1062, %v996, %v1094
      %v1127 = vsel %vm1063, %v999, %v1095
      %v1128 = vsel %vm1064, %v1004, %v1096
      %v1129 = vsel %vm1065, %v1007, %v1097
      %v1130 = vsel %vm1066, %v1012, %v1098
      %v1131 = vsel %vm1067, %v1015, %v1099
      %v1132 = vsel %vm1068, %v1020, %v1100
      %v1133 = vsel %vm1069, %v1023, %v1101
      %v1134 = vsel %vm1070, %v1028, %v1102
      %v1135 = vsel %vm1071, %v1031, %v1103
      %v1136 = vsel %vm1072, %v1036, %v1104
      %v1137 = vsel %vm1073, %v1039, %v1105
      %v1138 = vpack.c.bf16 %v1107, %v1106
      %v1139 = vpack.c.bf16 %v1109, %v1108
      %v1140 = vpack.c.bf16 %v1111, %v1110
      %v1141 = vpack.c.bf16 %v1113, %v1112
      %v1142 = vpack.c.bf16 %v1115, %v1114
      %v1143 = vpack.c.bf16 %v1117, %v1116
      %v1144 = vpack.c.bf16 %v1119, %v1118
      %v1145 = vpack.c.bf16 %v1121, %v1120
      %v1146 = vpack.c.bf16 %v1123, %v1122
      %v1147 = vpack.c.bf16 %v1125, %v1124
      %v1148 = vpack.c.bf16 %v1127, %v1126
      %v1149 = vpack.c.bf16 %v1129, %v1128
      %v1150 = vpack.c.bf16 %v1131, %v1130
      %v1151 = vpack.c.bf16 %v1133, %v1132
      %v1152 = vpack.c.bf16 %v1135, %v1134
      %v1153 = vpack.c.bf16 %v1137, %v1136
      %v1154 = vld [vmem:[%s3] sm:$0xf]
      %v1155 = vld [vmem:[%s3 + $0x4] sm:$0xf]
      %v1156 = vld [vmem:[%s3 + $0x8] sm:$0xf]
      %v1157 = vld [vmem:[%s3 + $0xc] sm:$0xf]
      %v1158 = vld [vmem:[%s3 + $0x10] sm:$0xf]
      %v1159 = vld [vmem:[%s3 + $0x14] sm:$0xf]
      %v1160 = vld [vmem:[%s3 + $0x18] sm:$0xf]
      %v1161 = vld [vmem:[%s3 + $0x1c] sm:$0xf]
      %v1162 = vld [vmem:[%s3 + $0x20] sm:$0xf]
      %v1163 = vld [vmem:[%s3 + $0x24] sm:$0xf]
      %v1164 = vld [vmem:[%s3 + $0x28] sm:$0xf]
      %v1165 = vld [vmem:[%s3 + $0x2c] sm:$0xf]
      %v1166 = vld [vmem:[%s3 + $0x30] sm:$0xf]
      %v1167 = vld [vmem:[%s3 + $0x34] sm:$0xf]
      %v1168 = vld [vmem:[%s3 + $0x38] sm:$0xf]
      %v1169 = vld [vmem:[%s3 + $0x3c] sm:$0xf]
      %v1170 = vlaneseq
      %v1171 = vshrl.u32 %v1170, 7
      %v1172 = vsub.s32 2, %v1171
      %v1173 = vrot.slane %v286, %v1172
      %v1190 = vunpack.c.l.b16 %v1154
      %v1191 = vunpack.c.l.b16 %v1155
      %v1192 = vunpack.c.l.b16 %v1156
      %v1193 = vunpack.c.l.b16 %v1157
      %v1194 = vunpack.c.l.b16 %v1158
      %v1195 = vunpack.c.l.b16 %v1159
      %v1196 = vunpack.c.l.b16 %v1160
      %v1197 = vunpack.c.l.b16 %v1161
      %v1198 = vunpack.c.l.b16 %v1162
      %v1199 = vunpack.c.l.b16 %v1163
      %v1200 = vunpack.c.l.b16 %v1164
      %v1201 = vunpack.c.l.b16 %v1165
      %v1202 = vunpack.c.l.b16 %v1166
      %v1203 = vunpack.c.l.b16 %v1167
      %v1204 = vunpack.c.l.b16 %v1168
      %v1205 = vunpack.c.l.b16 %v1169
      %v1206 = vpack.c.b16 %v1191, %v1190
      %v1207 = vpack.c.b16 %v1193, %v1192
      %v1208 = vpack.c.b16 %v1195, %v1194
      %v1209 = vpack.c.b16 %v1197, %v1196
      %v1210 = vpack.c.b16 %v1199, %v1198
      %v1211 = vpack.c.b16 %v1201, %v1200
      %v1212 = vpack.c.b16 %v1203, %v1202
      %v1213 = vpack.c.b16 %v1205, %v1204
      %1222 = vmatprep.subr.bf16.mxu0 0
      %1223 = vmatpush1.bf16.msra.mxu0 %v1206
      %1224 = vmatprep.subr.bf16.mxu0 0
      %1225 = vmatpush1.bf16.msra.mxu0 %v1207
      %1226 = vmatprep.subr.bf16.mxu0 0
      %1227 = vmatpush1.bf16.msra.mxu0 %v1208
      %1228 = vmatprep.subr.bf16.mxu0 0
      %1229 = vmatpush1.bf16.msra.mxu0 %v1209
      %1230 = vmatprep.subr.bf16.mxu0 0
      %1231 = vmatpush1.bf16.msra.mxu0 %v1210
      %1232 = vmatprep.subr.bf16.mxu0 0
      %1233 = vmatpush1.bf16.msra.mxu0 %v1211
      %1234 = vmatprep.subr.bf16.mxu0 0
      %1235 = vmatpush1.bf16.msra.mxu0 %v1212
      %1236 = vmatprep.subr.bf16.mxu0 0
      %1237 = vmatpush1.bf16.msra.mxu0 %v1213
      %1238 = vmatprep.subr.bf16.mxu0 0
      %1239 = vmatpush1.bf16.msra.mxu0 0
      %1240 = vmatprep.subr.bf16.mxu0 0
      %1241 = vmatpush1.bf16.msra.mxu0 0
      %1242 = vmatprep.subr.bf16.mxu0 0
      %1243 = vmatpush1.bf16.msra.mxu0 0
      %1244 = vmatprep.subr.bf16.mxu0 0
      %1245 = vmatpush1.bf16.msra.mxu0 0
      %1246 = vmatprep.subr.bf16.mxu0 0
      %1247 = vmatpush1.bf16.msra.mxu0 0
      %1248 = vmatprep.subr.bf16.mxu0 0
      %1249 = vmatpush1.bf16.msra.mxu0 0
      %1250 = vmatprep.subr.bf16.mxu0 0
      %1251 = vmatpush1.bf16.msra.mxu0 0
      %1252 = vmatprep.subr.bf16.mxu0 0
      %1253 = vmatpush1.bf16.msra.mxu0 0
      %1254 = vmatprep.mubr.bf16.mxu0 0
      %1255 = vmatmul.mubr.bf16.gmra.mrb[0].mxu0 %v1138
      %v1256 = vpop.f32.mrb[0].mxu0
      %v1257 = vadd.f32 %v1173, %v1256
      %v1258 = vpop.f32.mrb[0].mxu0
      %v1259 = vpop.f32.mrb[0].mxu0
      %v1260 = vadd.f32 %v1173, %v1259
      %v1261 = vpop.f32.mrb[0].mxu0
      %1262 = vmatprep.mubr.bf16.mxu0 0
      %1263 = vmatmul.mubr.bf16.gmra.mrb[0].mxu0 %v1139
      %v1264 = vpop.f32.mrb[0].mxu0
      %v1265 = vadd.f32 %v1173, %v1264
      %v1266 = vpop.f32.mrb[0].mxu0
      %v1267 = vpop.f32.mrb[0].mxu0
      %v1268 = vadd.f32 %v1173, %v1267
      %v1269 = vpop.f32.mrb[0].mxu0
      %1270 = vmatprep.mubr.bf16.mxu0 0
      %1271 = vmatmul.mubr.bf16.gmra.mrb[0].mxu0 %v1140
      %v1272 = vpop.f32.mrb[0].mxu0
      %v1273 = vadd.f32 %v1173, %v1272
      %v1274 = vpop.f32.mrb[0].mxu0
      %v1275 = vpop.f32.mrb[0].mxu0
      %v1276 = vadd.f32 %v1173, %v1275
      %v1277 = vpop.f32.mrb[0].mxu0
      %1278 = vmatprep.mubr.bf16.mxu0 0
      %1279 = vmatmul.mubr.bf16.gmra.mrb[0].mxu0 %v1141
      %v1280 = vpop.f32.mrb[0].mxu0
      %v1281 = vadd.f32 %v1173, %v1280
      %v1282 = vpop.f32.mrb[0].mxu0
      %v1283 = vpop.f32.mrb[0].mxu0
      %v1284 = vadd.f32 %v1173, %v1283
      %v1285 = vpop.f32.mrb[0].mxu0
      %1286 = vmatprep.mubr.bf16.mxu0 0
      %1287 = vmatmul.mubr.bf16.gmra.mrb[0].mxu0 %v1142
      %v1288 = vpop.f32.mrb[0].mxu0
      %v1289 = vadd.f32 %v1173, %v1288
      %v1290 = vpop.f32.mrb[0].mxu0
      %v1291 = vpop.f32.mrb[0].mxu0
      %v1292 = vadd.f32 %v1173, %v1291
      %v1293 = vpop.f32.mrb[0].mxu0
      %1294 = vmatprep.mubr.bf16.mxu0 0
      %1295 = vmatmul.mubr.bf16.gmra.mrb[0].mxu0 %v1143
      %v1296 = vpop.f32.mrb[0].mxu0
      %v1297 = vadd.f32 %v1173, %v1296
      %v1298 = vpop.f32.mrb[0].mxu0
      %v1299 = vpop.f32.mrb[0].mxu0
      %v1300 = vadd.f32 %v1173, %v1299
      %v1301 = vpop.f32.mrb[0].mxu0
      %1302 = vmatprep.mubr.bf16.mxu0 0
      %1303 = vmatmul.mubr.bf16.gmra.mrb[0].mxu0 %v1144
      %v1304 = vpop.f32.mrb[0].mxu0
      %v1305 = vadd.f32 %v1173, %v1304
      %v1306 = vpop.f32.mrb[0].mxu0
      %v1307 = vpop.f32.mrb[0].mxu0
      %v1308 = vadd.f32 %v1173, %v1307
      %v1309 = vpop.f32.mrb[0].mxu0
      %1310 = vmatprep.mubr.bf16.mxu0 0
      %1311 = vmatmul.mubr.bf16.gmra.mrb[0].mxu0 %v1145
      %v1312 = vpop.f32.mrb[0].mxu0
      %v1313 = vadd.f32 %v1173, %v1312
      %v1314 = vpop.f32.mrb[0].mxu0
      %v1315 = vpop.f32.mrb[0].mxu0
      %v1316 = vadd.f32 %v1173, %v1315
      %v1317 = vpop.f32.mrb[0].mxu0
      %1318 = vmatprep.mubr.bf16.mxu0 0
      %1319 = vmatmul.mubr.bf16.gmra.mrb[0].mxu0 %v1146
      %v1320 = vpop.f32.mrb[0].mxu0
      %v1321 = vadd.f32 %v1173, %v1320
      %v1322 = vpop.f32.mrb[0].mxu0
      %v1323 = vpop.f32.mrb[0].mxu0
      %v1324 = vadd.f32 %v1173, %v1323
      %v1325 = vpop.f32.mrb[0].mxu0
      %1326 = vmatprep.mubr.bf16.mxu0 0
      %1327 = vmatmul.mubr.bf16.gmra.mrb[0].mxu0 %v1147
      %v1328 = vpop.f32.mrb[0].mxu0
      %v1329 = vadd.f32 %v1173, %v1328
      %v1330 = vpop.f32.mrb[0].mxu0
      %v1331 = vpop.f32.mrb[0].mxu0
      %v1332 = vadd.f32 %v1173, %v1331
      %v1333 = vpop.f32.mrb[0].mxu0
      %1334 = vmatprep.mubr.bf16.mxu0 0
      %1335 = vmatmul.mubr.bf16.gmra.mrb[0].mxu0 %v1148
      %v1336 = vpop.f32.mrb[0].mxu0
      %v1337 = vadd.f32 %v1173, %v1336
      %v1338 = vpop.f32.mrb[0].mxu0
      %v1339 = vpop.f32.mrb[0].mxu0
      %v1340 = vadd.f32 %v1173, %v1339
      %v1341 = vpop.f32.mrb[0].mxu0
      %1342 = vmatprep.mubr.bf16.mxu0 0
      %1343 = vmatmul.mubr.bf16.gmra.mrb[0].mxu0 %v1149
      %v1344 = vpop.f32.mrb[0].mxu0
      %v1345 = vadd.f32 %v1173, %v1344
      %v1346 = vpop.f32.mrb[0].mxu0
      %v1347 = vpop.f32.mrb[0].mxu0
      %v1348 = vadd.f32 %v1173, %v1347
      %v1349 = vpop.f32.mrb[0].mxu0
      %1350 = vmatprep.mubr.bf16.mxu0 0
      %1351 = vmatmul.mubr.bf16.gmra.mrb[0].mxu0 %v1150
      %v1352 = vpop.f32.mrb[0].mxu0
      %v1353 = vadd.f32 %v1173, %v1352
      %v1354 = vpop.f32.mrb[0].mxu0
      %v1355 = vpop.f32.mrb[0].mxu0
      %v1356 = vadd.f32 %v1173, %v1355
      %v1357 = vpop.f32.mrb[0].mxu0
      %1358 = vmatprep.mubr.bf16.mxu0 0
      %1359 = vmatmul.mubr.bf16.gmra.mrb[0].mxu0 %v1151
      %v1360 = vpop.f32.mrb[0].mxu0
      %v1361 = vadd.f32 %v1173, %v1360
      %v1362 = vpop.f32.mrb[0].mxu0
      %v1363 = vpop.f32.mrb[0].mxu0
      %v1364 = vadd.f32 %v1173, %v1363
      %v1365 = vpop.f32.mrb[0].mxu0
      %1366 = vmatprep.mubr.bf16.mxu0 0
      %1367 = vmatmul.mubr.bf16.gmra.mrb[0].mxu0 %v1152
      %v1368 = vpop.f32.mrb[0].mxu0
      %v1369 = vadd.f32 %v1173, %v1368
      %v1370 = vpop.f32.mrb[0].mxu0
      %v1371 = vpop.f32.mrb[0].mxu0
      %v1372 = vadd.f32 %v1173, %v1371
      %v1373 = vpop.f32.mrb[0].mxu0
      %1374 = vmatprep.mubr.bf16.mxu0 0
      %1375 = vmatmul.mubr.bf16.gmra.mrb[0].mxu0 %v1153
      %v1376 = vpop.f32.mrb[0].mxu0
      %v1377 = vadd.f32 %v1173, %v1376
      %v1378 = vpop.f32.mrb[0].mxu0
      %v1379 = vpop.f32.mrb[0].mxu0
      %v1380 = vadd.f32 %v1173, %v1379
      %v1381 = vpop.f32.mrb[0].mxu0
      %1382 = vdwg.mxu0
      %vm1383 = vcmp.gt.f32.partialorder %v1257, 0.0
      %vm1384 = vcmp.gt.f32.partialorder %v1260, 0.0
      %vm1385 = vcmp.gt.f32.partialorder %v1265, 0.0
      %vm1386 = vcmp.gt.f32.partialorder %v1268, 0.0
      %vm1387 = vcmp.gt.f32.partialorder %v1273, 0.0
      %vm1388 = vcmp.gt.f32.partialorder %v1276, 0.0
      %vm1389 = vcmp.gt.f32.partialorder %v1281, 0.0
      %vm1390 = vcmp.gt.f32.partialorder %v1284, 0.0
      %vm1391 = vcmp.gt.f32.partialorder %v1289, 0.0
      %vm1392 = vcmp.gt.f32.partialorder %v1292, 0.0
      %vm1393 = vcmp.gt.f32.partialorder %v1297, 0.0
      %vm1394 = vcmp.gt.f32.partialorder %v1300, 0.0
      %vm1395 = vcmp.gt.f32.partialorder %v1305, 0.0
      %vm1396 = vcmp.gt.f32.partialorder %v1308, 0.0
      %vm1397 = vcmp.gt.f32.partialorder %v1313, 0.0
      %vm1398 = vcmp.gt.f32.partialorder %v1316, 0.0
      %vm1399 = vcmp.gt.f32.partialorder %v1321, 0.0
      %vm1400 = vcmp.gt.f32.partialorder %v1324, 0.0
      %vm1401 = vcmp.gt.f32.partialorder %v1329, 0.0
      %vm1402 = vcmp.gt.f32.partialorder %v1332, 0.0
      %vm1403 = vcmp.gt.f32.partialorder %v1337, 0.0
      %vm1404 = vcmp.gt.f32.partialorder %v1340, 0.0
      %vm1405 = vcmp.gt.f32.partialorder %v1345, 0.0
      %vm1406 = vcmp.gt.f32.partialorder %v1348, 0.0
      %vm1407 = vcmp.gt.f32.partialorder %v1353, 0.0
      %vm1408 = vcmp.gt.f32.partialorder %v1356, 0.0
      %vm1409 = vcmp.gt.f32.partialorder %v1361, 0.0
      %vm1410 = vcmp.gt.f32.partialorder %v1364, 0.0
      %vm1411 = vcmp.gt.f32.partialorder %v1369, 0.0
      %vm1412 = vcmp.gt.f32.partialorder %v1372, 0.0
      %vm1413 = vcmp.gt.f32.partialorder %v1377, 0.0
      %vm1414 = vcmp.gt.f32.partialorder %v1380, 0.0
      %v1415 = vmul.f32 %v1257, 0.01
      %v1416 = vmul.f32 %v1260, 0.01
      %v1417 = vmul.f32 %v1265, 0.01
      %v1418 = vmul.f32 %v1268, 0.01
      %v1419 = vmul.f32 %v1273, 0.01
      %v1420 = vmul.f32 %v1276, 0.01
      %v1421 = vmul.f32 %v1281, 0.01
      %v1422 = vmul.f32 %v1284, 0.01
      %v1423 = vmul.f32 %v1289, 0.01
      %v1424 = vmul.f32 %v1292, 0.01
      %v1425 = vmul.f32 %v1297, 0.01
      %v1426 = vmul.f32 %v1300, 0.01
      %v1427 = vmul.f32 %v1305, 0.01
      %v1428 = vmul.f32 %v1308, 0.01
      %v1429 = vmul.f32 %v1313, 0.01
      %v1430 = vmul.f32 %v1316, 0.01
      %v1431 = vmul.f32 %v1321, 0.01
      %v1432 = vmul.f32 %v1324, 0.01
      %v1433 = vmul.f32 %v1329, 0.01
      %v1434 = vmul.f32 %v1332, 0.01
      %v1435 = vmul.f32 %v1337, 0.01
      %v1436 = vmul.f32 %v1340, 0.01
      %v1437 = vmul.f32 %v1345, 0.01
      %v1438 = vmul.f32 %v1348, 0.01
      %v1439 = vmul.f32 %v1353, 0.01
      %v1440 = vmul.f32 %v1356, 0.01
      %v1441 = vmul.f32 %v1361, 0.01
      %v1442 = vmul.f32 %v1364, 0.01
      %v1443 = vmul.f32 %v1369, 0.01
      %v1444 = vmul.f32 %v1372, 0.01
      %v1445 = vmul.f32 %v1377, 0.01
      %v1446 = vmul.f32 %v1380, 0.01
      %v1447 = vsel %vm1383, %v1257, %v1415
      %v1448 = vsel %vm1384, %v1260, %v1416
      %v1449 = vsel %vm1385, %v1265, %v1417
      %v1450 = vsel %vm1386, %v1268, %v1418
      %v1451 = vsel %vm1387, %v1273, %v1419
      %v1452 = vsel %vm1388, %v1276, %v1420
      %v1453 = vsel %vm1389, %v1281, %v1421
      %v1454 = vsel %vm1390, %v1284, %v1422
      %v1455 = vsel %vm1391, %v1289, %v1423
      %v1456 = vsel %vm1392, %v1292, %v1424
      %v1457 = vsel %vm1393, %v1297, %v1425
      %v1458 = vsel %vm1394, %v1300, %v1426
      %v1459 = vsel %vm1395, %v1305, %v1427
      %v1460 = vsel %vm1396, %v1308, %v1428
      %v1461 = vsel %vm1397, %v1313, %v1429
      %v1462 = vsel %vm1398, %v1316, %v1430
      %v1463 = vsel %vm1399, %v1321, %v1431
      %v1464 = vsel %vm1400, %v1324, %v1432
      %v1465 = vsel %vm1401, %v1329, %v1433
      %v1466 = vsel %vm1402, %v1332, %v1434
      %v1467 = vsel %vm1403, %v1337, %v1435
      %v1468 = vsel %vm1404, %v1340, %v1436
      %v1469 = vsel %vm1405, %v1345, %v1437
      %v1470 = vsel %vm1406, %v1348, %v1438
      %v1471 = vsel %vm1407, %v1353, %v1439
      %v1472 = vsel %vm1408, %v1356, %v1440
      %v1473 = vsel %vm1409, %v1361, %v1441
      %v1474 = vsel %vm1410, %v1364, %v1442
      %v1475 = vsel %vm1411, %v1369, %v1443
      %v1476 = vsel %vm1412, %v1372, %v1444
      %v1477 = vsel %vm1413, %v1377, %v1445
      %v1478 = vsel %vm1414, %v1380, %v1446
      %v1479 = vpack.c.bf16 %v1448, %v1447
      %v1480 = vpack.c.bf16 %v1450, %v1449
      %v1481 = vpack.c.bf16 %v1452, %v1451
      %v1482 = vpack.c.bf16 %v1454, %v1453
      %v1483 = vpack.c.bf16 %v1456, %v1455
      %v1484 = vpack.c.bf16 %v1458, %v1457
      %v1485 = vpack.c.bf16 %v1460, %v1459
      %v1486 = vpack.c.bf16 %v1462, %v1461
      %v1487 = vpack.c.bf16 %v1464, %v1463
      %v1488 = vpack.c.bf16 %v1466, %v1465
      %v1489 = vpack.c.bf16 %v1468, %v1467
      %v1490 = vpack.c.bf16 %v1470, %v1469
      %v1491 = vpack.c.bf16 %v1472, %v1471
      %v1492 = vpack.c.bf16 %v1474, %v1473
      %v1493 = vpack.c.bf16 %v1476, %v1475
      %v1494 = vpack.c.bf16 %v1478, %v1477
      %v1495 = vld [vmem:[%s4] sm:$0xf]
      %v1496 = vld [vmem:[%s4 + $0x4] sm:$0xf]
      %v1497 = vld [vmem:[%s4 + $0x8] sm:$0xf]
      %v1498 = vld [vmem:[%s4 + $0xc] sm:$0xf]
      %v1499 = vld [vmem:[%s4 + $0x10] sm:$0xf]
      %v1500 = vld [vmem:[%s4 + $0x14] sm:$0xf]
      %v1501 = vld [vmem:[%s4 + $0x18] sm:$0xf]
      %v1502 = vld [vmem:[%s4 + $0x1c] sm:$0xf]
      %v1503 = vld [vmem:[%s4 + $0x20] sm:$0xf]
      %v1504 = vld [vmem:[%s4 + $0x24] sm:$0xf]
      %v1505 = vld [vmem:[%s4 + $0x28] sm:$0xf]
      %v1506 = vld [vmem:[%s4 + $0x2c] sm:$0xf]
      %v1507 = vld [vmem:[%s4 + $0x30] sm:$0xf]
      %v1508 = vld [vmem:[%s4 + $0x34] sm:$0xf]
      %v1509 = vld [vmem:[%s4 + $0x38] sm:$0xf]
      %v1510 = vld [vmem:[%s4 + $0x3c] sm:$0xf]
      %v1511 = vlaneseq
      %v1512 = vshrl.u32 %v1511, 7
      %v1513 = vsub.s32 3, %v1512
      %v1514 = vrot.slane %v286, %v1513
      %v1531 = vunpack.c.l.b16 %v1495
      %v1532 = vunpack.c.l.b16 %v1496
      %v1533 = vunpack.c.l.b16 %v1497
      %v1534 = vunpack.c.l.b16 %v1498
      %v1535 = vunpack.c.l.b16 %v1499
      %v1536 = vunpack.c.l.b16 %v1500
      %v1537 = vunpack.c.l.b16 %v1501
      %v1538 = vunpack.c.l.b16 %v1502
      %v1539 = vunpack.c.l.b16 %v1503
      %v1540 = vunpack.c.l.b16 %v1504
      %v1541 = vunpack.c.l.b16 %v1505
      %v1542 = vunpack.c.l.b16 %v1506
      %v1543 = vunpack.c.l.b16 %v1507
      %v1544 = vunpack.c.l.b16 %v1508
      %v1545 = vunpack.c.l.b16 %v1509
      %v1546 = vunpack.c.l.b16 %v1510
      %v1547 = vpack.c.b16 %v1532, %v1531
      %v1548 = vpack.c.b16 %v1534, %v1533
      %v1549 = vpack.c.b16 %v1536, %v1535
      %v1550 = vpack.c.b16 %v1538, %v1537
      %v1551 = vpack.c.b16 %v1540, %v1539
      %v1552 = vpack.c.b16 %v1542, %v1541
      %v1553 = vpack.c.b16 %v1544, %v1543
      %v1554 = vpack.c.b16 %v1546, %v1545
      %1563 = vmatprep.subr.bf16.mxu0 0
      %1564 = vmatpush1.bf16.msra.mxu0 %v1547
      %1565 = vmatprep.subr.bf16.mxu0 0
      %1566 = vmatpush1.bf16.msra.mxu0 %v1548
      %1567 = vmatprep.subr.bf16.mxu0 0
      %1568 = vmatpush1.bf16.msra.mxu0 %v1549
      %1569 = vmatprep.subr.bf16.mxu0 0
      %1570 = vmatpush1.bf16.msra.mxu0 %v1550
      %1571 = vmatprep.subr.bf16.mxu0 0
      %1572 = vmatpush1.bf16.msra.mxu0 %v1551
      %1573 = vmatprep.subr.bf16.mxu0 0
      %1574 = vmatpush1.bf16.msra.mxu0 %v1552
      %1575 = vmatprep.subr.bf16.mxu0 0
      %1576 = vmatpush1.bf16.msra.mxu0 %v1553
      %1577 = vmatprep.subr.bf16.mxu0 0
      %1578 = vmatpush1.bf16.msra.mxu0 %v1554
      %1579 = vmatprep.subr.bf16.mxu0 0
      %1580 = vmatpush1.bf16.msra.mxu0 0
      %1581 = vmatprep.subr.bf16.mxu0 0
      %1582 = vmatpush1.bf16.msra.mxu0 0
      %1583 = vmatprep.subr.bf16.mxu0 0
      %1584 = vmatpush1.bf16.msra.mxu0 0
      %1585 = vmatprep.subr.bf16.mxu0 0
      %1586 = vmatpush1.bf16.msra.mxu0 0
      %1587 = vmatprep.subr.bf16.mxu0 0
      %1588 = vmatpush1.bf16.msra.mxu0 0
      %1589 = vmatprep.subr.bf16.mxu0 0
      %1590 = vmatpush1.bf16.msra.mxu0 0
      %1591 = vmatprep.subr.bf16.mxu0 0
      %1592 = vmatpush1.bf16.msra.mxu0 0
      %1593 = vmatprep.subr.bf16.mxu0 0
      %1594 = vmatpush1.bf16.msra.mxu0 0
      %1595 = vmatprep.mubr.bf16.mxu0 0
      %1596 = vmatmul.mubr.bf16.gmra.mrb[0].mxu0 %v1479
      %v1597 = vpop.f32.mrb[0].mxu0
      %v1598 = vadd.f32 %v1514, %v1597
      %v1599 = vpop.f32.mrb[0].mxu0
      %v1600 = vpop.f32.mrb[0].mxu0
      %v1601 = vadd.f32 %v1514, %v1600
      %v1602 = vpop.f32.mrb[0].mxu0
      %1603 = vmatprep.mubr.bf16.mxu0 0
      %1604 = vmatmul.mubr.bf16.gmra.mrb[0].mxu0 %v1480
      %v1605 = vpop.f32.mrb[0].mxu0
      %v1606 = vadd.f32 %v1514, %v1605
      %v1607 = vpop.f32.mrb[0].mxu0
      %v1608 = vpop.f32.mrb[0].mxu0
      %v1609 = vadd.f32 %v1514, %v1608
      %v1610 = vpop.f32.mrb[0].mxu0
      %1611 = vmatprep.mubr.bf16.mxu0 0
      %1612 = vmatmul.mubr.bf16.gmra.mrb[0].mxu0 %v1481
      %v1613 = vpop.f32.mrb[0].mxu0
      %v1614 = vadd.f32 %v1514, %v1613
      %v1615 = vpop.f32.mrb[0].mxu0
      %v1616 = vpop.f32.mrb[0].mxu0
      %v1617 = vadd.f32 %v1514, %v1616
      %v1618 = vpop.f32.mrb[0].mxu0
      %1619 = vmatprep.mubr.bf16.mxu0 0
      %1620 = vmatmul.mubr.bf16.gmra.mrb[0].mxu0 %v1482
      %v1621 = vpop.f32.mrb[0].mxu0
      %v1622 = vadd.f32 %v1514, %v1621
      %v1623 = vpop.f32.mrb[0].mxu0
      %v1624 = vpop.f32.mrb[0].mxu0
      %v1625 = vadd.f32 %v1514, %v1624
      %v1626 = vpop.f32.mrb[0].mxu0
      %1627 = vmatprep.mubr.bf16.mxu0 0
      %1628 = vmatmul.mubr.bf16.gmra.mrb[0].mxu0 %v1483
      %v1629 = vpop.f32.mrb[0].mxu0
      %v1630 = vadd.f32 %v1514, %v1629
      %v1631 = vpop.f32.mrb[0].mxu0
      %v1632 = vpop.f32.mrb[0].mxu0
      %v1633 = vadd.f32 %v1514, %v1632
      %v1634 = vpop.f32.mrb[0].mxu0
      %1635 = vmatprep.mubr.bf16.mxu0 0
      %1636 = vmatmul.mubr.bf16.gmra.mrb[0].mxu0 %v1484
      %v1637 = vpop.f32.mrb[0].mxu0
      %v1638 = vadd.f32 %v1514, %v1637
      %v1639 = vpop.f32.mrb[0].mxu0
      %v1640 = vpop.f32.mrb[0].mxu0
      %v1641 = vadd.f32 %v1514, %v1640
      %v1642 = vpop.f32.mrb[0].mxu0
      %1643 = vmatprep.mubr.bf16.mxu0 0
      %1644 = vmatmul.mubr.bf16.gmra.mrb[0].mxu0 %v1485
      %v1645 = vpop.f32.mrb[0].mxu0
      %v1646 = vadd.f32 %v1514, %v1645
      %v1647 = vpop.f32.mrb[0].mxu0
      %v1648 = vpop.f32.mrb[0].mxu0
      %v1649 = vadd.f32 %v1514, %v1648
      %v1650 = vpop.f32.mrb[0].mxu0
      %1651 = vmatprep.mubr.bf16.mxu0 0
      %1652 = vmatmul.mubr.bf16.gmra.mrb[0].mxu0 %v1486
      %v1653 = vpop.f32.mrb[0].mxu0
      %v1654 = vadd.f32 %v1514, %v1653
      %v1655 = vpop.f32.mrb[0].mxu0
      %v1656 = vpop.f32.mrb[0].mxu0
      %v1657 = vadd.f32 %v1514, %v1656
      %v1658 = vpop.f32.mrb[0].mxu0
      %1659 = vmatprep.mubr.bf16.mxu0 0
      %1660 = vmatmul.mubr.bf16.gmra.mrb[0].mxu0 %v1487
      %v1661 = vpop.f32.mrb[0].mxu0
      %v1662 = vadd.f32 %v1514, %v1661
      %v1663 = vpop.f32.mrb[0].mxu0
      %v1664 = vpop.f32.mrb[0].mxu0
      %v1665 = vadd.f32 %v1514, %v1664
      %v1666 = vpop.f32.mrb[0].mxu0
      %1667 = vmatprep.mubr.bf16.mxu0 0
      %1668 = vmatmul.mubr.bf16.gmra.mrb[0].mxu0 %v1488
      %v1669 = vpop.f32.mrb[0].mxu0
      %v1670 = vadd.f32 %v1514, %v1669
      %v1671 = vpop.f32.mrb[0].mxu0
      %v1672 = vpop.f32.mrb[0].mxu0
      %v1673 = vadd.f32 %v1514, %v1672
      %v1674 = vpop.f32.mrb[0].mxu0
      %1675 = vmatprep.mubr.bf16.mxu0 0
      %1676 = vmatmul.mubr.bf16.gmra.mrb[0].mxu0 %v1489
      %v1677 = vpop.f32.mrb[0].mxu0
      %v1678 = vadd.f32 %v1514, %v1677
      %v1679 = vpop.f32.mrb[0].mxu0
      %v1680 = vpop.f32.mrb[0].mxu0
      %v1681 = vadd.f32 %v1514, %v1680
      %v1682 = vpop.f32.mrb[0].mxu0
      %1683 = vmatprep.mubr.bf16.mxu0 0
      %1684 = vmatmul.mubr.bf16.gmra.mrb[0].mxu0 %v1490
      %v1685 = vpop.f32.mrb[0].mxu0
      %v1686 = vadd.f32 %v1514, %v1685
      %v1687 = vpop.f32.mrb[0].mxu0
      %v1688 = vpop.f32.mrb[0].mxu0
      %v1689 = vadd.f32 %v1514, %v1688
      %v1690 = vpop.f32.mrb[0].mxu0
      %1691 = vmatprep.mubr.bf16.mxu0 0
      %1692 = vmatmul.mubr.bf16.gmra.mrb[0].mxu0 %v1491
      %v1693 = vpop.f32.mrb[0].mxu0
      %v1694 = vadd.f32 %v1514, %v1693
      %v1695 = vpop.f32.mrb[0].mxu0
      %v1696 = vpop.f32.mrb[0].mxu0
      %v1697 = vadd.f32 %v1514, %v1696
      %v1698 = vpop.f32.mrb[0].mxu0
      %1699 = vmatprep.mubr.bf16.mxu0 0
      %1700 = vmatmul.mubr.bf16.gmra.mrb[0].mxu0 %v1492
      %v1701 = vpop.f32.mrb[0].mxu0
      %v1702 = vadd.f32 %v1514, %v1701
      %v1703 = vpop.f32.mrb[0].mxu0
      %v1704 = vpop.f32.mrb[0].mxu0
      %v1705 = vadd.f32 %v1514, %v1704
      %v1706 = vpop.f32.mrb[0].mxu0
      %1707 = vmatprep.mubr.bf16.mxu0 0
      %1708 = vmatmul.mubr.bf16.gmra.mrb[0].mxu0 %v1493
      %v1709 = vpop.f32.mrb[0].mxu0
      %v1710 = vadd.f32 %v1514, %v1709
      %v1711 = vpop.f32.mrb[0].mxu0
      %v1712 = vpop.f32.mrb[0].mxu0
      %v1713 = vadd.f32 %v1514, %v1712
      %v1714 = vpop.f32.mrb[0].mxu0
      %1715 = vmatprep.mubr.bf16.mxu0 0
      %1716 = vmatmul.mubr.bf16.gmra.mrb[0].mxu0 %v1494
      %v1717 = vpop.f32.mrb[0].mxu0
      %v1718 = vadd.f32 %v1514, %v1717
      %v1719 = vpop.f32.mrb[0].mxu0
      %v1720 = vpop.f32.mrb[0].mxu0
      %v1721 = vadd.f32 %v1514, %v1720
      %v1722 = vpop.f32.mrb[0].mxu0
      %1723 = vdwg.mxu0
      %vm1724 = vcmp.gt.f32.partialorder %v1598, 0.0
      %vm1725 = vcmp.gt.f32.partialorder %v1601, 0.0
      %vm1726 = vcmp.gt.f32.partialorder %v1606, 0.0
      %vm1727 = vcmp.gt.f32.partialorder %v1609, 0.0
      %vm1728 = vcmp.gt.f32.partialorder %v1614, 0.0
      %vm1729 = vcmp.gt.f32.partialorder %v1617, 0.0
      %vm1730 = vcmp.gt.f32.partialorder %v1622, 0.0
      %vm1731 = vcmp.gt.f32.partialorder %v1625, 0.0
      %vm1732 = vcmp.gt.f32.partialorder %v1630, 0.0
      %vm1733 = vcmp.gt.f32.partialorder %v1633, 0.0
      %vm1734 = vcmp.gt.f32.partialorder %v1638, 0.0
      %vm1735 = vcmp.gt.f32.partialorder %v1641, 0.0
      %vm1736 = vcmp.gt.f32.partialorder %v1646, 0.0
      %vm1737 = vcmp.gt.f32.partialorder %v1649, 0.0
      %vm1738 = vcmp.gt.f32.partialorder %v1654, 0.0
      %vm1739 = vcmp.gt.f32.partialorder %v1657, 0.0
      %vm1740 = vcmp.gt.f32.partialorder %v1662, 0.0
      %vm1741 = vcmp.gt.f32.partialorder %v1665, 0.0
      %vm1742 = vcmp.gt.f32.partialorder %v1670, 0.0
      %vm1743 = vcmp.gt.f32.partialorder %v1673, 0.0
      %vm1744 = vcmp.gt.f32.partialorder %v1678, 0.0
      %vm1745 = vcmp.gt.f32.partialorder %v1681, 0.0
      %vm1746 = vcmp.gt.f32.partialorder %v1686, 0.0
      %vm1747 = vcmp.gt.f32.partialorder %v1689, 0.0
      %vm1748 = vcmp.gt.f32.partialorder %v1694, 0.0
      %vm1749 = vcmp.gt.f32.partialorder %v1697, 0.0
      %vm1750 = vcmp.gt.f32.partialorder %v1702, 0.0
      %vm1751 = vcmp.gt.f32.partialorder %v1705, 0.0
      %vm1752 = vcmp.gt.f32.partialorder %v1710, 0.0
      %vm1753 = vcmp.gt.f32.partialorder %v1713, 0.0
      %vm1754 = vcmp.gt.f32.partialorder %v1718, 0.0
      %vm1755 = vcmp.gt.f32.partialorder %v1721, 0.0
      %v1756 = vmul.f32 %v1598, 0.01
      %v1757 = vmul.f32 %v1601, 0.01
      %v1758 = vmul.f32 %v1606, 0.01
      %v1759 = vmul.f32 %v1609, 0.01
      %v1760 = vmul.f32 %v1614, 0.01
      %v1761 = vmul.f32 %v1617, 0.01
      %v1762 = vmul.f32 %v1622, 0.01
      %v1763 = vmul.f32 %v1625, 0.01
      %v1764 = vmul.f32 %v1630, 0.01
      %v1765 = vmul.f32 %v1633, 0.01
      %v1766 = vmul.f32 %v1638, 0.01
      %v1767 = vmul.f32 %v1641, 0.01
      %v1768 = vmul.f32 %v1646, 0.01
      %v1769 = vmul.f32 %v1649, 0.01
      %v1770 = vmul.f32 %v1654, 0.01
      %v1771 = vmul.f32 %v1657, 0.01
      %v1772 = vmul.f32 %v1662, 0.01
      %v1773 = vmul.f32 %v1665, 0.01
      %v1774 = vmul.f32 %v1670, 0.01
      %v1775 = vmul.f32 %v1673, 0.01
      %v1776 = vmul.f32 %v1678, 0.01
      %v1777 = vmul.f32 %v1681, 0.01
      %v1778 = vmul.f32 %v1686, 0.01
      %v1779 = vmul.f32 %v1689, 0.01
      %v1780 = vmul.f32 %v1694, 0.01
      %v1781 = vmul.f32 %v1697, 0.01
      %v1782 = vmul.f32 %v1702, 0.01
      %v1783 = vmul.f32 %v1705, 0.01
      %v1784 = vmul.f32 %v1710, 0.01
      %v1785 = vmul.f32 %v1713, 0.01
      %v1786 = vmul.f32 %v1718, 0.01
      %v1787 = vmul.f32 %v1721, 0.01
      %v1788 = vsel %vm1724, %v1598, %v1756
      %v1789 = vsel %vm1725, %v1601, %v1757
      %v1790 = vsel %vm1726, %v1606, %v1758
      %v1791 = vsel %vm1727, %v1609, %v1759
      %v1792 = vsel %vm1728, %v1614, %v1760
      %v1793 = vsel %vm1729, %v1617, %v1761
      %v1794 = vsel %vm1730, %v1622, %v1762
      %v1795 = vsel %vm1731, %v1625, %v1763
      %v1796 = vsel %vm1732, %v1630, %v1764
      %v1797 = vsel %vm1733, %v1633, %v1765
      %v1798 = vsel %vm1734, %v1638, %v1766
      %v1799 = vsel %vm1735, %v1641, %v1767
      %v1800 = vsel %vm1736, %v1646, %v1768
      %v1801 = vsel %vm1737, %v1649, %v1769
      %v1802 = vsel %vm1738, %v1654, %v1770
      %v1803 = vsel %vm1739, %v1657, %v1771
      %v1804 = vsel %vm1740, %v1662, %v1772
      %v1805 = vsel %vm1741, %v1665, %v1773
      %v1806 = vsel %vm1742, %v1670, %v1774
      %v1807 = vsel %vm1743, %v1673, %v1775
      %v1808 = vsel %vm1744, %v1678, %v1776
      %v1809 = vsel %vm1745, %v1681, %v1777
      %v1810 = vsel %vm1746, %v1686, %v1778
      %v1811 = vsel %vm1747, %v1689, %v1779
      %v1812 = vsel %vm1748, %v1694, %v1780
      %v1813 = vsel %vm1749, %v1697, %v1781
      %v1814 = vsel %vm1750, %v1702, %v1782
      %v1815 = vsel %vm1751, %v1705, %v1783
      %v1816 = vsel %vm1752, %v1710, %v1784
      %v1817 = vsel %vm1753, %v1713, %v1785
      %v1818 = vsel %vm1754, %v1718, %v1786
      %v1819 = vsel %vm1755, %v1721, %v1787
      %v1820 = vpack.c.bf16 %v1789, %v1788
      %v1821 = vpack.c.bf16 %v1791, %v1790
      %v1822 = vpack.c.bf16 %v1793, %v1792
      %v1823 = vpack.c.bf16 %v1795, %v1794
      %v1824 = vpack.c.bf16 %v1797, %v1796
      %v1825 = vpack.c.bf16 %v1799, %v1798
      %v1826 = vpack.c.bf16 %v1801, %v1800
      %v1827 = vpack.c.bf16 %v1803, %v1802
      %v1828 = vpack.c.bf16 %v1805, %v1804
      %v1829 = vpack.c.bf16 %v1807, %v1806
      %v1830 = vpack.c.bf16 %v1809, %v1808
      %v1831 = vpack.c.bf16 %v1811, %v1810
      %v1832 = vpack.c.bf16 %v1813, %v1812
      %v1833 = vpack.c.bf16 %v1815, %v1814
      %v1834 = vpack.c.bf16 %v1817, %v1816
      %v1835 = vpack.c.bf16 %v1819, %v1818
      %v1836 = vld [vmem:[%s5] sm:$0xf]
      %v1837 = vld [vmem:[%s5 + $0x4] sm:$0xf]
      %v1838 = vld [vmem:[%s5 + $0x8] sm:$0xf]
      %v1839 = vld [vmem:[%s5 + $0xc] sm:$0xf]
      %v1840 = vld [vmem:[%s5 + $0x10] sm:$0xf]
      %v1841 = vld [vmem:[%s5 + $0x14] sm:$0xf]
      %v1842 = vld [vmem:[%s5 + $0x18] sm:$0xf]
      %v1843 = vld [vmem:[%s5 + $0x1c] sm:$0xf]
      %v1844 = vld [vmem:[%s5 + $0x20] sm:$0xf]
      %v1845 = vld [vmem:[%s5 + $0x24] sm:$0xf]
      %v1846 = vld [vmem:[%s5 + $0x28] sm:$0xf]
      %v1847 = vld [vmem:[%s5 + $0x2c] sm:$0xf]
      %v1848 = vld [vmem:[%s5 + $0x30] sm:$0xf]
      %v1849 = vld [vmem:[%s5 + $0x34] sm:$0xf]
      %v1850 = vld [vmem:[%s5 + $0x38] sm:$0xf]
      %v1851 = vld [vmem:[%s5 + $0x3c] sm:$0xf]
      %v1852 = vlaneseq
      %v1853 = vshrl.u32 %v1852, 7
      %v1854 = vsub.s32 4, %v1853
      %v1855 = vrot.slane %v286, %v1854
      %v1872 = vunpack.c.l.b16 %v1836
      %v1873 = vunpack.c.l.b16 %v1837
      %v1874 = vunpack.c.l.b16 %v1838
      %v1875 = vunpack.c.l.b16 %v1839
      %v1876 = vunpack.c.l.b16 %v1840
      %v1877 = vunpack.c.l.b16 %v1841
      %v1878 = vunpack.c.l.b16 %v1842
      %v1879 = vunpack.c.l.b16 %v1843
      %v1880 = vunpack.c.l.b16 %v1844
      %v1881 = vunpack.c.l.b16 %v1845
      %v1882 = vunpack.c.l.b16 %v1846
      %v1883 = vunpack.c.l.b16 %v1847
      %v1884 = vunpack.c.l.b16 %v1848
      %v1885 = vunpack.c.l.b16 %v1849
      %v1886 = vunpack.c.l.b16 %v1850
      %v1887 = vunpack.c.l.b16 %v1851
      %v1888 = vpack.c.b16 %v1873, %v1872
      %v1889 = vpack.c.b16 %v1875, %v1874
      %v1890 = vpack.c.b16 %v1877, %v1876
      %v1891 = vpack.c.b16 %v1879, %v1878
      %v1892 = vpack.c.b16 %v1881, %v1880
      %v1893 = vpack.c.b16 %v1883, %v1882
      %v1894 = vpack.c.b16 %v1885, %v1884
      %v1895 = vpack.c.b16 %v1887, %v1886
      %1904 = vmatprep.subr.bf16.mxu0 0
      %1905 = vmatpush1.bf16.msra.mxu0 %v1888
      %1906 = vmatprep.subr.bf16.mxu0 0
      %1907 = vmatpush1.bf16.msra.mxu0 %v1889
      %1908 = vmatprep.subr.bf16.mxu0 0
      %1909 = vmatpush1.bf16.msra.mxu0 %v1890
      %1910 = vmatprep.subr.bf16.mxu0 0
      %1911 = vmatpush1.bf16.msra.mxu0 %v1891
      %1912 = vmatprep.subr.bf16.mxu0 0
      %1913 = vmatpush1.bf16.msra.mxu0 %v1892
      %1914 = vmatprep.subr.bf16.mxu0 0
      %1915 = vmatpush1.bf16.msra.mxu0 %v1893
      %1916 = vmatprep.subr.bf16.mxu0 0
      %1917 = vmatpush1.bf16.msra.mxu0 %v1894
      %1918 = vmatprep.subr.bf16.mxu0 0
      %1919 = vmatpush1.bf16.msra.mxu0 %v1895
      %1920 = vmatprep.subr.bf16.mxu0 0
      %1921 = vmatpush1.bf16.msra.mxu0 0
      %1922 = vmatprep.subr.bf16.mxu0 0
      %1923 = vmatpush1.bf16.msra.mxu0 0
      %1924 = vmatprep.subr.bf16.mxu0 0
      %1925 = vmatpush1.bf16.msra.mxu0 0
      %1926 = vmatprep.subr.bf16.mxu0 0
      %1927 = vmatpush1.bf16.msra.mxu0 0
      %1928 = vmatprep.subr.bf16.mxu0 0
      %1929 = vmatpush1.bf16.msra.mxu0 0
      %1930 = vmatprep.subr.bf16.mxu0 0
      %1931 = vmatpush1.bf16.msra.mxu0 0
      %1932 = vmatprep.subr.bf16.mxu0 0
      %1933 = vmatpush1.bf16.msra.mxu0 0
      %1934 = vmatprep.subr.bf16.mxu0 0
      %1935 = vmatpush1.bf16.msra.mxu0 0
      %1936 = vmatprep.mubr.bf16.mxu0 0
      %1937 = vmatmul.mubr.bf16.gmra.mrb[0].mxu0 %v1820
      %v1938 = vpop.f32.mrb[0].mxu0
      %v1939 = vadd.f32 %v1855, %v1938
      %v1940 = vpop.f32.mrb[0].mxu0
      %v1941 = vpop.f32.mrb[0].mxu0
      %v1942 = vadd.f32 %v1855, %v1941
      %v1943 = vpop.f32.mrb[0].mxu0
      %1944 = vmatprep.mubr.bf16.mxu0 0
      %1945 = vmatmul.mubr.bf16.gmra.mrb[0].mxu0 %v1821
      %v1946 = vpop.f32.mrb[0].mxu0
      %v1947 = vadd.f32 %v1855, %v1946
      %v1948 = vpop.f32.mrb[0].mxu0
      %v1949 = vpop.f32.mrb[0].mxu0
      %v1950 = vadd.f32 %v1855, %v1949
      %v1951 = vpop.f32.mrb[0].mxu0
      %1952 = vmatprep.mubr.bf16.mxu0 0
      %1953 = vmatmul.mubr.bf16.gmra.mrb[0].mxu0 %v1822
      %v1954 = vpop.f32.mrb[0].mxu0
      %v1955 = vadd.f32 %v1855, %v1954
      %v1956 = vpop.f32.mrb[0].mxu0
      %v1957 = vpop.f32.mrb[0].mxu0
      %v1958 = vadd.f32 %v1855, %v1957
      %v1959 = vpop.f32.mrb[0].mxu0
      %1960 = vmatprep.mubr.bf16.mxu0 0
      %1961 = vmatmul.mubr.bf16.gmra.mrb[0].mxu0 %v1823
      %v1962 = vpop.f32.mrb[0].mxu0
      %v1963 = vadd.f32 %v1855, %v1962
      %v1964 = vpop.f32.mrb[0].mxu0
      %v1965 = vpop.f32.mrb[0].mxu0
      %v1966 = vadd.f32 %v1855, %v1965
      %v1967 = vpop.f32.mrb[0].mxu0
      %1968 = vmatprep.mubr.bf16.mxu0 0
      %1969 = vmatmul.mubr.bf16.gmra.mrb[0].mxu0 %v1824
      %v1970 = vpop.f32.mrb[0].mxu0
      %v1971 = vadd.f32 %v1855, %v1970
      %v1972 = vpop.f32.mrb[0].mxu0
      %v1973 = vpop.f32.mrb[0].mxu0
      %v1974 = vadd.f32 %v1855, %v1973
      %v1975 = vpop.f32.mrb[0].mxu0
      %1976 = vmatprep.mubr.bf16.mxu0 0
      %1977 = vmatmul.mubr.bf16.gmra.mrb[0].mxu0 %v1825
      %v1978 = vpop.f32.mrb[0].mxu0
      %v1979 = vadd.f32 %v1855, %v1978
      %v1980 = vpop.f32.mrb[0].mxu0
      %v1981 = vpop.f32.mrb[0].mxu0
      %v1982 = vadd.f32 %v1855, %v1981
      %v1983 = vpop.f32.mrb[0].mxu0
      %1984 = vmatprep.mubr.bf16.mxu0 0
      %1985 = vmatmul.mubr.bf16.gmra.mrb[0].mxu0 %v1826
      %v1986 = vpop.f32.mrb[0].mxu0
      %v1987 = vadd.f32 %v1855, %v1986
      %v1988 = vpop.f32.mrb[0].mxu0
      %v1989 = vpop.f32.mrb[0].mxu0
      %v1990 = vadd.f32 %v1855, %v1989
      %v1991 = vpop.f32.mrb[0].mxu0
      %1992 = vmatprep.mubr.bf16.mxu0 0
      %1993 = vmatmul.mubr.bf16.gmra.mrb[0].mxu0 %v1827
      %v1994 = vpop.f32.mrb[0].mxu0
      %v1995 = vadd.f32 %v1855, %v1994
      %v1996 = vpop.f32.mrb[0].mxu0
      %v1997 = vpop.f32.mrb[0].mxu0
      %v1998 = vadd.f32 %v1855, %v1997
      %v1999 = vpop.f32.mrb[0].mxu0
      %2000 = vmatprep.mubr.bf16.mxu0 0
      %2001 = vmatmul.mubr.bf16.gmra.mrb[0].mxu0 %v1828
      %v2002 = vpop.f32.mrb[0].mxu0
      %v2003 = vadd.f32 %v1855, %v2002
      %v2004 = vpop.f32.mrb[0].mxu0
      %v2005 = vpop.f32.mrb[0].mxu0
      %v2006 = vadd.f32 %v1855, %v2005
      %v2007 = vpop.f32.mrb[0].mxu0
      %2008 = vmatprep.mubr.bf16.mxu0 0
      %2009 = vmatmul.mubr.bf16.gmra.mrb[0].mxu0 %v1829
      %v2010 = vpop.f32.mrb[0].mxu0
      %v2011 = vadd.f32 %v1855, %v2010
      %v2012 = vpop.f32.mrb[0].mxu0
      %v2013 = vpop.f32.mrb[0].mxu0
      %v2014 = vadd.f32 %v1855, %v2013
      %v2015 = vpop.f32.mrb[0].mxu0
      %2016 = vmatprep.mubr.bf16.mxu0 0
      %2017 = vmatmul.mubr.bf16.gmra.mrb[0].mxu0 %v1830
      %v2018 = vpop.f32.mrb[0].mxu0
      %v2019 = vadd.f32 %v1855, %v2018
      %v2020 = vpop.f32.mrb[0].mxu0
      %v2021 = vpop.f32.mrb[0].mxu0
      %v2022 = vadd.f32 %v1855, %v2021
      %v2023 = vpop.f32.mrb[0].mxu0
      %2024 = vmatprep.mubr.bf16.mxu0 0
      %2025 = vmatmul.mubr.bf16.gmra.mrb[0].mxu0 %v1831
      %v2026 = vpop.f32.mrb[0].mxu0
      %v2027 = vadd.f32 %v1855, %v2026
      %v2028 = vpop.f32.mrb[0].mxu0
      %v2029 = vpop.f32.mrb[0].mxu0
      %v2030 = vadd.f32 %v1855, %v2029
      %v2031 = vpop.f32.mrb[0].mxu0
      %2032 = vmatprep.mubr.bf16.mxu0 0
      %2033 = vmatmul.mubr.bf16.gmra.mrb[0].mxu0 %v1832
      %v2034 = vpop.f32.mrb[0].mxu0
      %v2035 = vadd.f32 %v1855, %v2034
      %v2036 = vpop.f32.mrb[0].mxu0
      %v2037 = vpop.f32.mrb[0].mxu0
      %v2038 = vadd.f32 %v1855, %v2037
      %v2039 = vpop.f32.mrb[0].mxu0
      %2040 = vmatprep.mubr.bf16.mxu0 0
      %2041 = vmatmul.mubr.bf16.gmra.mrb[0].mxu0 %v1833
      %v2042 = vpop.f32.mrb[0].mxu0
      %v2043 = vadd.f32 %v1855, %v2042
      %v2044 = vpop.f32.mrb[0].mxu0
      %v2045 = vpop.f32.mrb[0].mxu0
      %v2046 = vadd.f32 %v1855, %v2045
      %v2047 = vpop.f32.mrb[0].mxu0
      %2048 = vmatprep.mubr.bf16.mxu0 0
      %2049 = vmatmul.mubr.bf16.gmra.mrb[0].mxu0 %v1834
      %v2050 = vpop.f32.mrb[0].mxu0
      %v2051 = vadd.f32 %v1855, %v2050
      %v2052 = vpop.f32.mrb[0].mxu0
      %v2053 = vpop.f32.mrb[0].mxu0
      %v2054 = vadd.f32 %v1855, %v2053
      %v2055 = vpop.f32.mrb[0].mxu0
      %2056 = vmatprep.mubr.bf16.mxu0 0
      %2057 = vmatmul.mubr.bf16.gmra.mrb[0].mxu0 %v1835
      %v2058 = vpop.f32.mrb[0].mxu0
      %v2059 = vadd.f32 %v1855, %v2058
      %v2060 = vpop.f32.mrb[0].mxu0
      %v2061 = vpop.f32.mrb[0].mxu0
      %v2062 = vadd.f32 %v1855, %v2061
      %v2063 = vpop.f32.mrb[0].mxu0
      %2064 = vdwg.mxu0
      %vm2065 = vcmp.gt.f32.partialorder %v1939, 0.0
      %vm2066 = vcmp.gt.f32.partialorder %v1942, 0.0
      %vm2067 = vcmp.gt.f32.partialorder %v1947, 0.0
      %vm2068 = vcmp.gt.f32.partialorder %v1950, 0.0
      %vm2069 = vcmp.gt.f32.partialorder %v1955, 0.0
      %vm2070 = vcmp.gt.f32.partialorder %v1958, 0.0
      %vm2071 = vcmp.gt.f32.partialorder %v1963, 0.0
      %vm2072 = vcmp.gt.f32.partialorder %v1966, 0.0
      %vm2073 = vcmp.gt.f32.partialorder %v1971, 0.0
      %vm2074 = vcmp.gt.f32.partialorder %v1974, 0.0
      %vm2075 = vcmp.gt.f32.partialorder %v1979, 0.0
      %vm2076 = vcmp.gt.f32.partialorder %v1982, 0.0
      %vm2077 = vcmp.gt.f32.partialorder %v1987, 0.0
      %vm2078 = vcmp.gt.f32.partialorder %v1990, 0.0
      %vm2079 = vcmp.gt.f32.partialorder %v1995, 0.0
      %vm2080 = vcmp.gt.f32.partialorder %v1998, 0.0
      %vm2081 = vcmp.gt.f32.partialorder %v2003, 0.0
      %vm2082 = vcmp.gt.f32.partialorder %v2006, 0.0
      %vm2083 = vcmp.gt.f32.partialorder %v2011, 0.0
      %vm2084 = vcmp.gt.f32.partialorder %v2014, 0.0
      %vm2085 = vcmp.gt.f32.partialorder %v2019, 0.0
      %vm2086 = vcmp.gt.f32.partialorder %v2022, 0.0
      %vm2087 = vcmp.gt.f32.partialorder %v2027, 0.0
      %vm2088 = vcmp.gt.f32.partialorder %v2030, 0.0
      %vm2089 = vcmp.gt.f32.partialorder %v2035, 0.0
      %vm2090 = vcmp.gt.f32.partialorder %v2038, 0.0
      %vm2091 = vcmp.gt.f32.partialorder %v2043, 0.0
      %vm2092 = vcmp.gt.f32.partialorder %v2046, 0.0
      %vm2093 = vcmp.gt.f32.partialorder %v2051, 0.0
      %vm2094 = vcmp.gt.f32.partialorder %v2054, 0.0
      %vm2095 = vcmp.gt.f32.partialorder %v2059, 0.0
      %vm2096 = vcmp.gt.f32.partialorder %v2062, 0.0
      %v2097 = vmul.f32 %v1939, 0.01
      %v2098 = vmul.f32 %v1942, 0.01
      %v2099 = vmul.f32 %v1947, 0.01
      %v2100 = vmul.f32 %v1950, 0.01
      %v2101 = vmul.f32 %v1955, 0.01
      %v2102 = vmul.f32 %v1958, 0.01
      %v2103 = vmul.f32 %v1963, 0.01
      %v2104 = vmul.f32 %v1966, 0.01
      %v2105 = vmul.f32 %v1971, 0.01
      %v2106 = vmul.f32 %v1974, 0.01
      %v2107 = vmul.f32 %v1979, 0.01
      %v2108 = vmul.f32 %v1982, 0.01
      %v2109 = vmul.f32 %v1987, 0.01
      %v2110 = vmul.f32 %v1990, 0.01
      %v2111 = vmul.f32 %v1995, 0.01
      %v2112 = vmul.f32 %v1998, 0.01
      %v2113 = vmul.f32 %v2003, 0.01
      %v2114 = vmul.f32 %v2006, 0.01
      %v2115 = vmul.f32 %v2011, 0.01
      %v2116 = vmul.f32 %v2014, 0.01
      %v2117 = vmul.f32 %v2019, 0.01
      %v2118 = vmul.f32 %v2022, 0.01
      %v2119 = vmul.f32 %v2027, 0.01
      %v2120 = vmul.f32 %v2030, 0.01
      %v2121 = vmul.f32 %v2035, 0.01
      %v2122 = vmul.f32 %v2038, 0.01
      %v2123 = vmul.f32 %v2043, 0.01
      %v2124 = vmul.f32 %v2046, 0.01
      %v2125 = vmul.f32 %v2051, 0.01
      %v2126 = vmul.f32 %v2054, 0.01
      %v2127 = vmul.f32 %v2059, 0.01
      %v2128 = vmul.f32 %v2062, 0.01
      %v2129 = vsel %vm2065, %v1939, %v2097
      %v2130 = vsel %vm2066, %v1942, %v2098
      %v2131 = vsel %vm2067, %v1947, %v2099
      %v2132 = vsel %vm2068, %v1950, %v2100
      %v2133 = vsel %vm2069, %v1955, %v2101
      %v2134 = vsel %vm2070, %v1958, %v2102
      %v2135 = vsel %vm2071, %v1963, %v2103
      %v2136 = vsel %vm2072, %v1966, %v2104
      %v2137 = vsel %vm2073, %v1971, %v2105
      %v2138 = vsel %vm2074, %v1974, %v2106
      %v2139 = vsel %vm2075, %v1979, %v2107
      %v2140 = vsel %vm2076, %v1982, %v2108
      %v2141 = vsel %vm2077, %v1987, %v2109
      %v2142 = vsel %vm2078, %v1990, %v2110
      %v2143 = vsel %vm2079, %v1995, %v2111
      %v2144 = vsel %vm2080, %v1998, %v2112
      %v2145 = vsel %vm2081, %v2003, %v2113
      %v2146 = vsel %vm2082, %v2006, %v2114
      %v2147 = vsel %vm2083, %v2011, %v2115
      %v2148 = vsel %vm2084, %v2014, %v2116
      %v2149 = vsel %vm2085, %v2019, %v2117
      %v2150 = vsel %vm2086, %v2022, %v2118
      %v2151 = vsel %vm2087, %v2027, %v2119
      %v2152 = vsel %vm2088, %v2030, %v2120
      %v2153 = vsel %vm2089, %v2035, %v2121
      %v2154 = vsel %vm2090, %v2038, %v2122
      %v2155 = vsel %vm2091, %v2043, %v2123
      %v2156 = vsel %vm2092, %v2046, %v2124
      %v2157 = vsel %vm2093, %v2051, %v2125
      %v2158 = vsel %vm2094, %v2054, %v2126
      %v2159 = vsel %vm2095, %v2059, %v2127
      %v2160 = vsel %vm2096, %v2062, %v2128
      %2161 = vst [vmem:[%s283] sm:$0xff] %v2129
      %2162 = vst [vmem:[%s283 + $0x8] sm:$0xff] %v2130
      %2163 = vst [vmem:[%s283 + $0x10] sm:$0xff] %v2131
      %2164 = vst [vmem:[%s283 + $0x18] sm:$0xff] %v2132
      %2165 = vst [vmem:[%s283 + $0x20] sm:$0xff] %v2133
      %2166 = vst [vmem:[%s283 + $0x28] sm:$0xff] %v2134
      %2167 = vst [vmem:[%s283 + $0x30] sm:$0xff] %v2135
      %2168 = vst [vmem:[%s283 + $0x38] sm:$0xff] %v2136
      %2169 = vst [vmem:[%s283 + $0x40] sm:$0xff] %v2137
      %2170 = vst [vmem:[%s283 + $0x48] sm:$0xff] %v2138
      %2171 = vst [vmem:[%s283 + $0x50] sm:$0xff] %v2139
      %2172 = vst [vmem:[%s283 + $0x58] sm:$0xff] %v2140
      %2173 = vst [vmem:[%s283 + $0x60] sm:$0xff] %v2141
      %2174 = vst [vmem:[%s283 + $0x68] sm:$0xff] %v2142
      %2175 = vst [vmem:[%s283 + $0x70] sm:$0xff] %v2143
      %2176 = vst [vmem:[%s283 + $0x78] sm:$0xff] %v2144
      %2177 = vst [vmem:[%s283 + $0x80] sm:$0xff] %v2145
      %2178 = vst [vmem:[%s283 + $0x88] sm:$0xff] %v2146
      %2179 = vst [vmem:[%s283 + $0x90] sm:$0xff] %v2147
      %2180 = vst [vmem:[%s283 + $0x98] sm:$0xff] %v2148
      %2181 = vst [vmem:[%s283 + $0xa0] sm:$0xff] %v2149
      %2182 = vst [vmem:[%s283 + $0xa8] sm:$0xff] %v2150
      %2183 = vst [vmem:[%s283 + $0xb0] sm:$0xff] %v2151
      %2184 = vst [vmem:[%s283 + $0xb8] sm:$0xff] %v2152
      %2185 = vst [vmem:[%s283 + $0xc0] sm:$0xff] %v2153
      %2186 = vst [vmem:[%s283 + $0xc8] sm:$0xff] %v2154
      %2187 = vst [vmem:[%s283 + $0xd0] sm:$0xff] %v2155
      %2188 = vst [vmem:[%s283 + $0xd8] sm:$0xff] %v2156
      %2189 = vst [vmem:[%s283 + $0xe0] sm:$0xff] %v2157
      %2190 = vst [vmem:[%s283 + $0xe8] sm:$0xff] %v2158
      %2191 = vst [vmem:[%s283 + $0xf0] sm:$0xff] %v2159
      %2192 = vst [vmem:[%s283 + $0xf8] sm:$0xff] %v2160
      %s2193 = smul.u32 32, %s18
      %p2194 = scmp.lt.s32.totalorder %s2193, 63
      %s2195 = scalar_select %p2194, %s2193, 63
      %s2196 = smul.addr %s2195, 8
      %s2197 = scalar_lea.vmem %s7, %s2196
      // Predicated region
      $region49: #{baselinemlp_forward.1} parent=47 // pred_check
        %p2198 = pneg %p188
      $region50: #{baselinemlp_forward.1} parent=47 // pred_check_branch
        %2200 = sbr.rel (%p2198) target = $region52
      $region51: #{baselinemlp_forward.1} parent=47 // pred_region
        %s2201 = smul.u32 32, %s18
      $region52: #{baselinemlp_forward.1} parent=47 // pred_fallthru
        _
    $region48: #{baselinemlp_forward.1} parent=5 // pred_fallthru
      _
    %p2202 = scmp.le.s32.totalorder 2, %s13
    // Predicated region
    $region53: #{baselinemlp_forward.1} parent=5 // pred_check
      %p2203 = pneg %p2202
    $region54: #{baselinemlp_forward.1} parent=5 // pred_check_branch
      %2205 = sbr.rel (%p2203) target = $region56
    $region55: #{baselinemlp_forward.1} parent=5 // pred_region
      %s2206 = ssub.s32 %s13, 2
      // Predicated region
      $region57: #{baselinemlp_forward.1} parent=55 // pred_check
        %p2207 = pneg %p194
      $region58: #{baselinemlp_forward.1} parent=55 // pred_check_branch
        %2209 = sbr.rel (%p2207) target = $region60
      $region59: #{baselinemlp_forward.1} parent=55 // pred_region
        %s2210 = smul.u32 32, %s19
        %p2211 = scmp.lt.s32.totalorder %s2210, 63
        %s2212 = scalar_select %p2211, %s2210, 63
        %s2213 = smul.addr %s2212, 8
        %s2214 = scalar_lea.vmem %s7, %s2213
      $region60: #{baselinemlp_forward.1} parent=55 // pred_fallthru
        _
    $region56: #{baselinemlp_forward.1} parent=5 // pred_fallthru
      _
  $region6: #{baselinemlp_forward.1} parent=0 // loop_footer
    %s17 = sadd.s32 1, %s13
  $region7: #{baselinemlp_forward.1} parent=0 // loop_footer_branch
    %12 = sbr.rel target = $region3
  $region8: #{baselinemlp_forward.1} parent=0 // loop_exit
    _

// kernel: baselinemlp_forward.1
$region0: #{baselinemlp_forward.1}
  #allocation0 [shape = 'u32[]', space=smem, size = 0x4, offset = 0x4, fixed_abs, tag = 'smem constant byte address 0x4 - core index']
  #allocation1 [shape = 'u32[144,128]{1,0:T(1,128)}', space=vmem, size = 0x12000, scoped, tag = 'internal scratch']
  %s0 = inlined_call_operand.vmem [shape: f32[512,200], index: 0, kind: input, shape index: {}]
  %s1 = inlined_call_operand.vmem [shape: bf16[200,128], index: 1, kind: input, shape index: {}]
  %s2 = inlined_call_operand.vmem [shape: bf16[128,128], index: 2, kind: input, shape index: {}]
  %s3 = inlined_call_operand.vmem [shape: bf16[128,128], index: 3, kind: input, shape index: {}]
  %s4 = inlined_call_operand.vmem [shape: bf16[128,128], index: 4, kind: input, shape index: {}]
  %s5 = inlined_call_operand.vmem [shape: bf16[128,128], index: 5, kind: input, shape index: {}]
  %s6 = inlined_call_operand.vmem [shape: f32[8,128], index: 6, kind: input, shape index: {}]
  %s7 = inlined_call_operand.vmem [shape: f32[512,128], index: 7, kind: output, shape index: {}]
  %s8 = sld [smem:[#allocation0]]
  $region61: #{baselinemlp_forward.1} parent=0
    _
  %s10 = ssub.s32 1, %s8
  %s11 = scalar_select 0, %s10, %s8
  loop: start=0, step=1, limit=4
  $region2: #{baselinemlp_forward.1} parent=0 // loop_pre_header
    _
  $region3: #{baselinemlp_forward.1} parent=0 // loop_header
    %s13 = sphi 0, %s17
    %p14 = scmp.ge.s32.totalorder %s13, 4
    %s23 = sphi 0, %s25
    %s26 = sphi 0, %s23
    %s27 = sphi 0, %s26
    %s43 = sphi 0, %s27
    %s47 = sphi 0, %s47
    %s49 = sphi 0, %s47
    %s50 = sphi 0, %s49
    %s64 = sphi 0, %s50
    %s68 = sphi 0, %s68
    %s70 = sphi 0, %s68
    %s71 = sphi 0, %s70
    %s85 = sphi 0, %s71
    %s89 = sphi 0, %s89
    %s91 = sphi 0, %s89
    %s92 = sphi 0, %s91
    %s106 = sphi 0, %s92
    %s110 = sphi 0, %s110
    %s112 = sphi 0, %s110
    %s113 = sphi 0, %s112
    %s127 = sphi 0, %s113
    %s131 = sphi 0, %s131
    %s133 = sphi 0, %s131
    %s134 = sphi 0, %s133
    %s148 = sphi 0, %s134
    %s152 = sphi 0, %s152
    %s154 = sphi 0, %s152
    %s155 = sphi 0, %s154
    %s169 = sphi 0, %s155
    %s175 = sphi 0, %s177
    %s178 = sphi 0, %s175
    %s179 = sphi 0, %s178
    %s195 = sphi 0, %s179
  $region4: #{baselinemlp_forward.1} parent=0 // loop_header_branch
    %16 = sbr.rel (%p14) target = $region8
  $region5: #{baselinemlp_forward.1} parent=0 // loop_body
    %s18 = ssub.s32 %s13, 1
    %s19 = ssub.s32 %s13, 2
    %s20 = sadd.s32 %s13, 1
    %s21 = ssub.s32 %s13, %s20
    %p22 = scmp.eq.s32.totalorder %s21, 0
    %s24 = sadd.s32 %s23, 1
    %s25 = scalar_select %p22, %s23, %s24
    %p28 = pneg %p22
    %p29 = scmp.eq.s32.totalorder %s13, 1
    %p30 = por %p28, %p29
    %p31 = scmp.ne.s32.totalorder %s23, %s26
    %p32 = scmp.eq.s32.totalorder %s13, 0
    %p33 = por %p31, %p32
    %p34 = scmp.ne.s32.totalorder %s23, %s26
    %p35 = scmp.eq.s32.totalorder %s18, 1
    %p36 = por %p34, %p35
    %p37 = scmp.ne.s32.totalorder %s26, %s27
    %p38 = scmp.eq.s32.totalorder %s18, 0
    %p39 = por %p37, %p38
    %p40 = scmp.ne.s32.totalorder %s26, %s27
    %p41 = scmp.eq.s32.totalorder %s19, 1
    %p42 = por %p40, %p41
    %p44 = scmp.ne.s32.totalorder %s27, %s43
    %p45 = scmp.eq.s32.totalorder %s19, 0
    %p46 = por %p44, %p45
    %s48 = sadd.s32 %s47, 1
    %p51 = scmp.eq.s32.totalorder %s13, 1
    %p52 = scmp.ne.s32.totalorder %s47, %s49
    %p53 = scmp.eq.s32.totalorder %s13, 0
    %p54 = por %p52, %p53
    %p55 = scmp.ne.s32.totalorder %s47, %s49
    %p56 = scmp.eq.s32.totalorder %s18, 1
    %p57 = por %p55, %p56
    %p58 = scmp.ne.s32.totalorder %s49, %s50
    %p59 = scmp.eq.s32.totalorder %s18, 0
    %p60 = por %p58, %p59
    %p61 = scmp.ne.s32.totalorder %s49, %s50
    %p62 = scmp.eq.s32.totalorder %s19, 1
    %p63 = por %p61, %p62
    %p65 = scmp.ne.s32.totalorder %s50, %s64
    %p66 = scmp.eq.s32.totalorder %s19, 0
    %p67 = por %p65, %p66
    %s69 = sadd.s32 %s68, 1
    %p72 = scmp.eq.s32.totalorder %s13, 1
    %p73 = scmp.ne.s32.totalorder %s68, %s70
    %p74 = scmp.eq.s32.totalorder %s13, 0
    %p75 = por %p73, %p74
    %p76 = scmp.ne.s32.totalorder %s68, %s70
    %p77 = scmp.eq.s32.totalorder %s18, 1
    %p78 = por %p76, %p77
    %p79 = scmp.ne.s32.totalorder %s70, %s71
    %p80 = scmp.eq.s32.totalorder %s18, 0
    %p81 = por %p79, %p80
    %p82 = scmp.ne.s32.totalorder %s70, %s71
    %p83 = scmp.eq.s32.totalorder %s19, 1
    %p84 = por %p82, %p83
    %p86 = scmp.ne.s32.totalorder %s71, %s85
    %p87 = scmp.eq.s32.totalorder %s19, 0
    %p88 = por %p86, %p87
    %s90 = sadd.s32 %s89, 1
    %p93 = scmp.eq.s32.totalorder %s13, 1
    %p94 = scmp.ne.s32.totalorder %s89, %s91
    %p95 = scmp.eq.s32.totalorder %s13, 0
    %p96 = por %p94, %p95
    %p97 = scmp.ne.s32.totalorder %s89, %s91
    %p98 = scmp.eq.s32.totalorder %s18, 1
    %p99 = por %p97, %p98
    %p100 = scmp.ne.s32.totalorder %s91, %s92
    %p101 = scmp.eq.s32.totalorder %s18, 0
    %p102 = por %p100, %p101
    %p103 = scmp.ne.s32.totalorder %s91, %s92
    %p104 = scmp.eq.s32.totalorder %s19, 1
    %p105 = por %p103, %p104
    %p107 = scmp.ne.s32.totalorder %s92, %s106
    %p108 = scmp.eq.s32.totalorder %s19, 0
    %p109 = por %p107, %p108
    %s111 = sadd.s32 %s110, 1
    %p114 = scmp.eq.s32.totalorder %s13, 1
    %p115 = scmp.ne.s32.totalorder %s110, %s112
    %p116 = scmp.eq.s32.totalorder %s13, 0
    %p117 = por %p115, %p116
    %p118 = scmp.ne.s32.totalorder %s110, %s112
    %p119 = scmp.eq.s32.totalorder %s18, 1
    %p120 = por %p118, %p119
    %p121 = scmp.ne.s32.totalorder %s112, %s113
    %p122 = scmp.eq.s32.totalorder %s18, 0
    %p123 = por %p121, %p122
    %p124 = scmp.ne.s32.totalorder %s112, %s113
    %p125 = scmp.eq.s32.totalorder %s19, 1
    %p126 = por %p124, %p125
    %p128 = scmp.ne.s32.totalorder %s113, %s127
    %p129 = scmp.eq.s32.totalorder %s19, 0
    %p130 = por %p128, %p129
    %s132 = sadd.s32 %s131, 1
    %p135 = scmp.eq.s32.totalorder %s13, 1
    %p136 = scmp.ne.s32.totalorder %s131, %s133
    %p137 = scmp.eq.s32.totalorder %s13, 0
    %p138 = por %p136, %p137
    %p139 = scmp.ne.s32.totalorder %s131, %s133
    %p140 = scmp.eq.s32.totalorder %s18, 1
    %p141 = por %p139, %p140
    %p142 = scmp.ne.s32.totalorder %s133, %s134
    %p143 = scmp.eq.s32.totalorder %s18, 0
    %p144 = por %p142, %p143
    %p145 = scmp.ne.s32.totalorder %s133, %s134
    %p146 = scmp.eq.s32.totalorder %s19, 1
    %p147 = por %p145, %p146
    %p149 = scmp.ne.s32.totalorder %s134, %s148
    %p150 = scmp.eq.s32.totalorder %s19, 0
    %p151 = por %p149, %p150
    %s153 = sadd.s32 %s152, 1
    %p156 = scmp.eq.s32.totalorder %s13, 1
    %p157 = scmp.ne.s32.totalorder %s152, %s154
    %p158 = scmp.eq.s32.totalorder %s13, 0
    %p159 = por %p157, %p158
    %p160 = scmp.ne.s32.totalorder %s152, %s154
    %p161 = scmp.eq.s32.totalorder %s18, 1
    %p162 = por %p160, %p161
    %p163 = scmp.ne.s32.totalorder %s154, %s155
    %p164 = scmp.eq.s32.totalorder %s18, 0
    %p165 = por %p163, %p164
    %p166 = scmp.ne.s32.totalorder %s154, %s155
    %p167 = scmp.eq.s32.totalorder %s19, 1
    %p168 = por %p166, %p167
    %p170 = scmp.ne.s32.totalorder %s155, %s169
    %p171 = scmp.eq.s32.totalorder %s19, 0
    %p172 = por %p170, %p171
    %s173 = ssub.s32 %s13, %s20
    %p174 = scmp.eq.s32.totalorder %s173, 0
    %s176 = sadd.s32 %s175, 1
    %s177 = scalar_select %p174, %s175, %s176
    %p180 = pneg %p174
    %p181 = scmp.eq.s32.totalorder %s13, 1
    %p182 = por %p180, %p181
    %p183 = scmp.ne.s32.totalorder %s175, %s178
    %p184 = scmp.eq.s32.totalorder %s13, 0
    %p185 = por %p183, %p184
    %p186 = scmp.ne.s32.totalorder %s175, %s178
    %p187 = scmp.eq.s32.totalorder %s18, 1
    %p188 = por %p186, %p187
    %p189 = scmp.ne.s32.totalorder %s178, %s179
    %p190 = scmp.eq.s32.totalorder %s18, 0
    %p191 = por %p189, %p190
    %p192 = scmp.ne.s32.totalorder %s178, %s179
    %p193 = scmp.eq.s32.totalorder %s19, 1
    %p194 = por %p192, %p193
    %p196 = scmp.ne.s32.totalorder %s179, %s195
    %p197 = scmp.eq.s32.totalorder %s19, 0
    %p198 = por %p196, %p197
    %p199 = scmp.le.s32.totalorder 1, %s13
    %p200 = scmp.lt.s32.totalorder %s13, 3
    %p201 = pnand %p199, %p200
    %p202 = pneg %p201
    // Predicated region
    $region9: #{baselinemlp_forward.1} parent=5 // pred_check
      _
    $region10: #{baselinemlp_forward.1} parent=5 // pred_check_branch
      %204 = sbr.rel (%p201) target = $region12
    $region11: #{baselinemlp_forward.1} parent=5 // pred_region
      %s205 = ssub.s32 %s13, 1
      // Predicated region
      $region13: #{baselinemlp_forward.1} parent=11 // pred_check
        %p206 = pneg %p60
      $region14: #{baselinemlp_forward.1} parent=11 // pred_check_branch
        %208 = sbr.rel (%p206) target = $region16
      $region15: #{baselinemlp_forward.1} parent=11 // pred_region
        _
      $region16: #{baselinemlp_forward.1} parent=11 // pred_fallthru
        _
      // Predicated region
      $region17: #{baselinemlp_forward.1} parent=11 // pred_check
        %p209 = pneg %p81
      $region18: #{baselinemlp_forward.1} parent=11 // pred_check_branch
        %211 = sbr.rel (%p209) target = $region20
      $region19: #{baselinemlp_forward.1} parent=11 // pred_region
        _
      $region20: #{baselinemlp_forward.1} parent=11 // pred_fallthru
        _
      // Predicated region
      $region21: #{baselinemlp_forward.1} parent=11 // pred_check
        %p212 = pneg %p102
      $region22: #{baselinemlp_forward.1} parent=11 // pred_check_branch
        %214 = sbr.rel (%p212) target = $region24
      $region23: #{baselinemlp_forward.1} parent=11 // pred_region
        _
      $region24: #{baselinemlp_forward.1} parent=11 // pred_fallthru
        _
      // Predicated region
      $region25: #{baselinemlp_forward.1} parent=11 // pred_check
        %p215 = pneg %p123
      $region26: #{baselinemlp_forward.1} parent=11 // pred_check_branch
        %217 = sbr.rel (%p215) target = $region28
      $region27: #{baselinemlp_forward.1} parent=11 // pred_region
        _
      $region28: #{baselinemlp_forward.1} parent=11 // pred_fallthru
        _
      // Predicated region
      $region29: #{baselinemlp_forward.1} parent=11 // pred_check
        %p218 = pneg %p144
      $region30: #{baselinemlp_forward.1} parent=11 // pred_check_branch
        %220 = sbr.rel (%p218) target = $region32
      $region31: #{baselinemlp_forward.1} parent=11 // pred_region
        _
      $region32: #{baselinemlp_forward.1} parent=11 // pred_fallthru
        _
      // Predicated region
      $region33: #{baselinemlp_forward.1} parent=11 // pred_check
        %p221 = pneg %p165
      $region34: #{baselinemlp_forward.1} parent=11 // pred_check_branch
        %223 = sbr.rel (%p221) target = $region36
      $region35: #{baselinemlp_forward.1} parent=11 // pred_region
        _
      $region36: #{baselinemlp_forward.1} parent=11 // pred_fallthru
        _
    $region12: #{baselinemlp_forward.1} parent=5 // pred_fallthru
      _
    %p224 = scmp.lt.s32.totalorder %s13, 2
    // Predicated region
    $region37: #{baselinemlp_forward.1} parent=5 // pred_check
      %p225 = pneg %p224
    $region38: #{baselinemlp_forward.1} parent=5 // pred_check_branch
      %227 = sbr.rel (%p225) target = $region40
    $region39: #{baselinemlp_forward.1} parent=5 // pred_region
      // Predicated region
      $region41: #{baselinemlp_forward.1} parent=39 // pred_check
        %p228 = pneg %p33
      $region42: #{baselinemlp_forward.1} parent=39 // pred_check_branch
        %230 = sbr.rel (%p228) target = $region44
      $region43: #{baselinemlp_forward.1} parent=39 // pred_region
        %s231 = smul.u32 32, %s13
        %p232 = scmp.lt.s32.totalorder %s231, 63
        %s233 = scalar_select %p232, %s231, 63
        %s234 = smul.addr %s233, 2
        %s235 = smul.addr %s234, 8
        %s236 = scalar_lea.vmem %s0, %s235
        %s237 = smul.u32 32, %s13
      $region44: #{baselinemlp_forward.1} parent=39 // pred_fallthru
        _
    $region40: #{baselinemlp_forward.1} parent=5 // pred_fallthru
      _
    %p238 = scmp.le.s32.totalorder 1, %s13
    %p239 = scmp.lt.s32.totalorder %s13, 3
    %p240 = pnand %p238, %p239
    %p241 = pneg %p240
    // Predicated region
    $region45: #{baselinemlp_forward.1} parent=5 // pred_check
      _
    $region46: #{baselinemlp_forward.1} parent=5 // pred_check_branch
      %243 = sbr.rel (%p240) target = $region48
    $region47: #{baselinemlp_forward.1} parent=5 // pred_region
      %s244 = ssub.s32 %s13, 1
      %s245 = smul.u32 32, %s18
      %p246 = scmp.lt.s32.totalorder %s245, 63
      %s247 = scalar_select %p246, %s245, 63
      %s248 = smul.addr %s247, 2
      %s249 = smul.addr %s248, 8
      %s250 = scalar_lea.vmem %s0, %s249
      %p251 = pneg %p39
      %p252 = pneg %p36
      %p253 = pneg %p60
      %p254 = pneg %p57
      %p255 = pneg %p81
      %p256 = pneg %p78
      %p257 = pneg %p102
      %p258 = pneg %p99
      %p259 = pneg %p123
      %p260 = pneg %p120
      %p261 = pneg %p144
      %p262 = pneg %p141
      %p263 = pneg %p165
      %p264 = pneg %p162
      %p265 = pneg %p191
      %p266 = pneg %p188
      %s267 = smul.u32 32, %s18
      %p268 = scmp.lt.s32.totalorder %s267, 63
      %s269 = scalar_select %p268, %s267, 63
      %s270 = smul.addr %s269, 8
      %s271 = scalar_lea.vmem %s7, %s270
      %s272 = smul.u32 32, %s18
      %p273 = scmp.lt.s32.totalorder %s272, 63
      %s274 = scalar_select %p273, %s272, 63
      %s275 = smul.addr %s274, 2
      %s276 = smul.addr %s275, 8
      %s277 = scalar_lea.vmem %s0, %s276
      %s278 = smul.u32 32, %s18
      %s279 = smul.u32 32, %s18
      %p280 = scmp.lt.s32.totalorder %s279, 63
      %s281 = scalar_select %p280, %s279, 63
      %s282 = smul.addr %s281, 8
      %s283 = scalar_lea.vmem %s7, %s282
      %s284 = smul.u32 32, %s18
      %v286 = vld [vmem:[%s6] sm:$0xff]
      %v287 = vld [vmem:[%s277] sm:$0xff]
      %v288 = vld [vmem:[%s277 + $0x8] sm:$0xff]
      %v289 = vld [vmem:[%s277 + $0x10] sm:$0xff]
      %v290 = vld [vmem:[%s277 + $0x18] sm:$0xff]
      %v291 = vld [vmem:[%s277 + $0x20] sm:$0xff]
      %v292 = vld [vmem:[%s277 + $0x28] sm:$0xff]
      %v293 = vld [vmem:[%s277 + $0x30] sm:$0xff]
      %v294 = vld [vmem:[%s277 + $0x38] sm:$0xff]
      %v295 = vld [vmem:[%s277 + $0x40] sm:$0xff]
      %v296 = vld [vmem:[%s277 + $0x48] sm:$0xff]
      %v297 = vld [vmem:[%s277 + $0x50] sm:$0xff]
      %v298 = vld [vmem:[%s277 + $0x58] sm:$0xff]
      %v299 = vld [vmem:[%s277 + $0x60] sm:$0xff]
      %v300 = vld [vmem:[%s277 + $0x68] sm:$0xff]
      %v301 = vld [vmem:[%s277 + $0x70] sm:$0xff]
      %v302 = vld [vmem:[%s277 + $0x78] sm:$0xff]
      %v303 = vld [vmem:[%s277 + $0x80] sm:$0xff]
      %v304 = vld [vmem:[%s277 + $0x88] sm:$0xff]
      %v305 = vld [vmem:[%s277 + $0x90] sm:$0xff]
      %v306 = vld [vmem:[%s277 + $0x98] sm:$0xff]
      %v307 = vld [vmem:[%s277 + $0xa0] sm:$0xff]
      %v308 = vld [vmem:[%s277 + $0xa8] sm:$0xff]
      %v309 = vld [vmem:[%s277 + $0xb0] sm:$0xff]
      %v310 = vld [vmem:[%s277 + $0xb8] sm:$0xff]
      %v311 = vld [vmem:[%s277 + $0xc0] sm:$0xff]
      %v312 = vld [vmem:[%s277 + $0xc8] sm:$0xff]
      %v313 = vld [vmem:[%s277 + $0xd0] sm:$0xff]
      %v314 = vld [vmem:[%s277 + $0xd8] sm:$0xff]
      %v315 = vld [vmem:[%s277 + $0xe0] sm:$0xff]
      %v316 = vld [vmem:[%s277 + $0xe8] sm:$0xff]
      %v317 = vld [vmem:[%s277 + $0xf0] sm:$0xff]
      %v318 = vld [vmem:[%s277 + $0xf8] sm:$0xff]
      %v319 = vld [vmem:[%s277 + $0x100] sm:$0xff]
      %v320 = vld [vmem:[%s277 + $0x108] sm:$0xff]
      %v321 = vld [vmem:[%s277 + $0x110] sm:$0xff]
      %v322 = vld [vmem:[%s277 + $0x118] sm:$0xff]
      %v323 = vld [vmem:[%s277 + $0x120] sm:$0xff]
      %v324 = vld [vmem:[%s277 + $0x128] sm:$0xff]
      %v325 = vld [vmem:[%s277 + $0x130] sm:$0xff]
      %v326 = vld [vmem:[%s277 + $0x138] sm:$0xff]
      %v327 = vld [vmem:[%s277 + $0x140] sm:$0xff]
      %v328 = vld [vmem:[%s277 + $0x148] sm:$0xff]
      %v329 = vld [vmem:[%s277 + $0x150] sm:$0xff]
      %v330 = vld [vmem:[%s277 + $0x158] sm:$0xff]
      %v331 = vld [vmem:[%s277 + $0x160] sm:$0xff]
      %v332 = vld [vmem:[%s277 + $0x168] sm:$0xff]
      %v333 = vld [vmem:[%s277 + $0x170] sm:$0xff]
      %v334 = vld [vmem:[%s277 + $0x178] sm:$0xff]
      %v335 = vld [vmem:[%s277 + $0x180] sm:$0xff]
      %v336 = vld [vmem:[%s277 + $0x188] sm:$0xff]
      %v337 = vld [vmem:[%s277 + $0x190] sm:$0xff]
      %v338 = vld [vmem:[%s277 + $0x198] sm:$0xff]
      %v339 = vld [vmem:[%s277 + $0x1a0] sm:$0xff]
      %v340 = vld [vmem:[%s277 + $0x1a8] sm:$0xff]
      %v341 = vld [vmem:[%s277 + $0x1b0] sm:$0xff]
      %v342 = vld [vmem:[%s277 + $0x1b8] sm:$0xff]
      %v343 = vld [vmem:[%s277 + $0x1c0] sm:$0xff]
      %v344 = vld [vmem:[%s277 + $0x1c8] sm:$0xff]
      %v345 = vld [vmem:[%s277 + $0x1d0] sm:$0xff]
      %v346 = vld [vmem:[%s277 + $0x1d8] sm:$0xff]
      %v347 = vld [vmem:[%s277 + $0x1e0] sm:$0xff]
      %v348 = vld [vmem:[%s277 + $0x1e8] sm:$0xff]
      %v349 = vld [vmem:[%s277 + $0x1f0] sm:$0xff]
      %v350 = vld [vmem:[%s277 + $0x1f8] sm:$0xff]
      %v351 = vpack.c.bf16 %v289, %v287
      %v352 = vpack.c.bf16 %v290, %v288
      %v353 = vpack.c.bf16 %v293, %v291
      %v354 = vpack.c.bf16 %v294, %v292
      %v355 = vpack.c.bf16 %v297, %v295
      %v356 = vpack.c.bf16 %v298, %v296
      %v357 = vpack.c.bf16 %v301, %v299
      %v358 = vpack.c.bf16 %v302, %v300
      %v359 = vpack.c.bf16 %v305, %v303
      %v360 = vpack.c.bf16 %v306, %v304
      %v361 = vpack.c.bf16 %v309, %v307
      %v362 = vpack.c.bf16 %v310, %v308
      %v363 = vpack.c.bf16 %v313, %v311
      %v364 = vpack.c.bf16 %v314, %v312
      %v365 = vpack.c.bf16 %v317, %v315
      %v366 = vpack.c.bf16 %v318, %v316
      %v367 = vpack.c.bf16 %v321, %v319
      %v368 = vpack.c.bf16 %v322, %v320
      %v369 = vpack.c.bf16 %v325, %v323
      %v370 = vpack.c.bf16 %v326, %v324
      %v371 = vpack.c.bf16 %v329, %v327
      %v372 = vpack.c.bf16 %v330, %v328
      %v373 = vpack.c.bf16 %v333, %v331
      %v374 = vpack.c.bf16 %v334, %v332
      %v375 = vpack.c.bf16 %v337, %v335
      %v376 = vpack.c.bf16 %v338, %v336
      %v377 = vpack.c.bf16 %v341, %v339
      %v378 = vpack.c.bf16 %v342, %v340
      %v379 = vpack.c.bf16 %v345, %v343
      %v380 = vpack.c.bf16 %v346, %v344
      %v381 = vpack.c.bf16 %v349, %v347
      %v382 = vpack.c.bf16 %v350, %v348
      %v383 = vld [vmem:[%s1] sm:$0xf]
      %v384 = vld [vmem:[%s1 + $0x4] sm:$0xf]
      %v385 = vld [vmem:[%s1 + $0x8] sm:$0xf]
      %v386 = vld [vmem:[%s1 + $0xc] sm:$0xf]
      %v387 = vld [vmem:[%s1 + $0x10] sm:$0xf]
      %v388 = vld [vmem:[%s1 + $0x14] sm:$0xf]
      %v389 = vld [vmem:[%s1 + $0x18] sm:$0xf]
      %v390 = vld [vmem:[%s1 + $0x1c] sm:$0xf]
      %v391 = vld [vmem:[%s1 + $0x20] sm:$0xf]
      %v392 = vld [vmem:[%s1 + $0x24] sm:$0xf]
      %v393 = vld [vmem:[%s1 + $0x28] sm:$0xf]
      %v394 = vld [vmem:[%s1 + $0x2c] sm:$0xf]
      %v395 = vld [vmem:[%s1 + $0x30] sm:$0xf]
      %v396 = vld [vmem:[%s1 + $0x34] sm:$0xf]
      %v397 = vld [vmem:[%s1 + $0x38] sm:$0xf]
      %v398 = vld [vmem:[%s1 + $0x3c] sm:$0xf]
      %v399 = vld [vmem:[%s1 + $0x40] sm:$0xf]
      %v400 = vld [vmem:[%s1 + $0x44] sm:$0xf]
      %v401 = vld [vmem:[%s1 + $0x48] sm:$0xf]
      %v402 = vld [vmem:[%s1 + $0x4c] sm:$0xf]
      %v403 = vld [vmem:[%s1 + $0x50] sm:$0xf]
      %v404 = vld [vmem:[%s1 + $0x54] sm:$0xf]
      %v405 = vld [vmem:[%s1 + $0x58] sm:$0xf]
      %v406 = vld [vmem:[%s1 + $0x5c] sm:$0xf]
      %v407 = vld [vmem:[%s1 + $0x60] sm:$0xf]
      %v408 = vlaneseq
      %v409 = vshrl.u32 %v408, 7
      %v410 = vsub.s32 0, %v409
      %v411 = vrot.slane %v286, %v410
      %v437 = vunpack.c.l.b16 %v383
      %v438 = vunpack.c.l.b16 %v384
      %v439 = vunpack.c.l.b16 %v385
      %v440 = vunpack.c.l.b16 %v386
      %v441 = vunpack.c.l.b16 %v387
      %v442 = vunpack.c.l.b16 %v388
      %v443 = vunpack.c.l.b16 %v389
      %v444 = vunpack.c.l.b16 %v390
      %v445 = vunpack.c.l.b16 %v391
      %v446 = vunpack.c.l.b16 %v392
      %v447 = vunpack.c.l.b16 %v393
      %v448 = vunpack.c.l.b16 %v394
      %v449 = vunpack.c.l.b16 %v395
      %v450 = vunpack.c.l.b16 %v396
      %v451 = vunpack.c.l.b16 %v397
      %v452 = vunpack.c.l.b16 %v398
      %v453 = vunpack.c.l.b16 %v399
      %v454 = vunpack.c.l.b16 %v400
      %v455 = vunpack.c.l.b16 %v401
      %v456 = vunpack.c.l.b16 %v402
      %v457 = vunpack.c.l.b16 %v403
      %v458 = vunpack.c.l.b16 %v404
      %v459 = vunpack.c.l.b16 %v405
      %v460 = vunpack.c.l.b16 %v406
      %v461 = vunpack.c.l.b16 %v407
      %v462 = vpack.c.b16 %v438, %v437
      %v463 = vpack.c.b16 %v440, %v439
      %v464 = vpack.c.b16 %v442, %v441
      %v465 = vpack.c.b16 %v444, %v443
      %v466 = vpack.c.b16 %v446, %v445
      %v467 = vpack.c.b16 %v448, %v447
      %v468 = vpack.c.b16 %v450, %v449
      %v469 = vpack.c.b16 %v452, %v451
      %v470 = vpack.c.b16 %v454, %v453
      %v471 = vpack.c.b16 %v456, %v455
      %v472 = vpack.c.b16 %v458, %v457
      %v473 = vpack.c.b16 %v460, %v459
      %v474 = vpack.c.b16 %v461, %v461
      %vm487 = vcmask 588800
      %v489 = vsel %vm487, %v352, 0
      %v492 = vsel %vm487, %v354, 0
      %v495 = vsel %vm487, %v356, 0
      %v498 = vsel %vm487, %v358, 0
      %v501 = vsel %vm487, %v360, 0
      %v504 = vsel %vm487, %v362, 0
      %v507 = vsel %vm487, %v364, 0
      %v510 = vsel %vm487, %v366, 0
      %v513 = vsel %vm487, %v368, 0
      %v516 = vsel %vm487, %v370, 0
      %v519 = vsel %vm487, %v372, 0
      %v522 = vsel %vm487, %v374, 0
      %v525 = vsel %vm487, %v376, 0
      %v528 = vsel %vm487, %v378, 0
      %v531 = vsel %vm487, %v380, 0
      %v534 = vsel %vm487, %v382, 0
      %vm536 = vcmask 1043456
      %v538 = vsel %vm536, %v474, 0
      %540 = vmatprep.subr.bf16.mxu0 0
      %541 = vmatpush1.bf16.msra.mxu0 %v462
      %542 = vmatprep.subr.bf16.mxu0 0
      %543 = vmatpush1.bf16.msra.mxu0 %v463
      %544 = vmatprep.subr.bf16.mxu0 0
      %545 = vmatpush1.bf16.msra.mxu0 %v464
      %546 = vmatprep.subr.bf16.mxu0 0
      %547 = vmatpush1.bf16.msra.mxu0 %v465
      %548 = vmatprep.subr.bf16.mxu0 0
      %549 = vmatpush1.bf16.msra.mxu0 %v466
      %550 = vmatprep.subr.bf16.mxu0 0
      %551 = vmatpush1.bf16.msra.mxu0 %v467
      %552 = vmatprep.subr.bf16.mxu0 0
      %553 = vmatpush1.bf16.msra.mxu0 %v468
      %554 = vmatprep.subr.bf16.mxu0 0
      %555 = vmatpush1.bf16.msra.mxu0 %v469
      %556 = vmatprep.subr.bf16.mxu0 0
      %557 = vmatpush1.bf16.msra.mxu0 %v470
      %558 = vmatprep.subr.bf16.mxu0 0
      %559 = vmatpush1.bf16.msra.mxu0 %v471
      %560 = vmatprep.subr.bf16.mxu0 0
      %561 = vmatpush1.bf16.msra.mxu0 %v472
      %562 = vmatprep.subr.bf16.mxu0 0
      %563 = vmatpush1.bf16.msra.mxu0 %v473
      %564 = vmatprep.subr.bf16.mxu0 0
      %565 = vmatpush1.bf16.msra.mxu0 %v538
      %566 = vmatprep.subr.bf16.mxu0 0
      %567 = vmatpush1.bf16.msra.mxu0 0
      %568 = vmatprep.subr.bf16.mxu0 0
      %569 = vmatpush1.bf16.msra.mxu0 0
      %570 = vmatprep.subr.bf16.mxu0 0
      %571 = vmatpush1.bf16.msra.mxu0 0
      %572 = vmatprep.mubr.bf16.mxu0 %v489
      %573 = vmatmul.mubr.bf16.gmra.mrb[0].mxu0 %v351
      %v574 = vpop.f32.mrb[0].mxu0
      %v575 = vadd.f32 %v411, %v574
      %v576 = vpop.f32.mrb[0].mxu0
      %v577 = vpop.f32.mrb[0].mxu0
      %v578 = vadd.f32 %v411, %v577
      %v579 = vpop.f32.mrb[0].mxu0
      %580 = vmatprep.mubr.bf16.mxu0 %v492
      %581 = vmatmul.mubr.bf16.gmra.mrb[0].mxu0 %v353
      %v582 = vpop.f32.mrb[0].mxu0
      %v583 = vadd.f32 %v411, %v582
      %v584 = vpop.f32.mrb[0].mxu0
      %v585 = vpop.f32.mrb[0].mxu0
      %v586 = vadd.f32 %v411, %v585
      %v587 = vpop.f32.mrb[0].mxu0
      %588 = vmatprep.mubr.bf16.mxu0 %v495
      %589 = vmatmul.mubr.bf16.gmra.mrb[0].mxu0 %v355
      %v590 = vpop.f32.mrb[0].mxu0
      %v591 = vadd.f32 %v411, %v590
      %v592 = vpop.f32.mrb[0].mxu0
      %v593 = vpop.f32.mrb[0].mxu0
      %v594 = vadd.f32 %v411, %v593
      %v595 = vpop.f32.mrb[0].mxu0
      %596 = vmatprep.mubr.bf16.mxu0 %v498
      %597 = vmatmul.mubr.bf16.gmra.mrb[0].mxu0 %v357
      %v598 = vpop.f32.mrb[0].mxu0
      %v599 = vadd.f32 %v411, %v598
      %v600 = vpop.f32.mrb[0].mxu0
      %v601 = vpop.f32.mrb[0].mxu0
      %v602 = vadd.f32 %v411, %v601
      %v603 = vpop.f32.mrb[0].mxu0
      %604 = vmatprep.mubr.bf16.mxu0 %v501
      %605 = vmatmul.mubr.bf16.gmra.mrb[0].mxu0 %v359
      %v606 = vpop.f32.mrb[0].mxu0
      %v607 = vadd.f32 %v411, %v606
      %v608 = vpop.f32.mrb[0].mxu0
      %v609 = vpop.f32.mrb[0].mxu0
      %v610 = vadd.f32 %v411, %v609
      %v611 = vpop.f32.mrb[0].mxu0
      %612 = vmatprep.mubr.bf16.mxu0 %v504
      %613 = vmatmul.mubr.bf16.gmra.mrb[0].mxu0 %v361
      %v614 = vpop.f32.mrb[0].mxu0
      %v615 = vadd.f32 %v411, %v614
      %v616 = vpop.f32.mrb[0].mxu0
      %v617 = vpop.f32.mrb[0].mxu0
      %v618 = vadd.f32 %v411, %v617
      %v619 = vpop.f32.mrb[0].mxu0
      %620 = vmatprep.mubr.bf16.mxu0 %v507
      %621 = vmatmul.mubr.bf16.gmra.mrb[0].mxu0 %v363
      %v622 = vpop.f32.mrb[0].mxu0
      %v623 = vadd.f32 %v411, %v622
      %v624 = vpop.f32.mrb[0].mxu0
      %v625 = vpop.f32.mrb[0].mxu0
      %v626 = vadd.f32 %v411, %v625
      %v627 = vpop.f32.mrb[0].mxu0
      %628 = vmatprep.mubr.bf16.mxu0 %v510
      %629 = vmatmul.mubr.bf16.gmra.mrb[0].mxu0 %v365
      %v630 = vpop.f32.mrb[0].mxu0
      %v631 = vadd.f32 %v411, %v630
      %v632 = vpop.f32.mrb[0].mxu0
      %v633 = vpop.f32.mrb[0].mxu0
      %v634 = vadd.f32 %v411, %v633
      %v635 = vpop.f32.mrb[0].mxu0
      %636 = vmatprep.mubr.bf16.mxu0 %v513
      %637 = vmatmul.mubr.bf16.gmra.mrb[0].mxu0 %v367
      %v638 = vpop.f32.mrb[0].mxu0
      %v639 = vadd.f32 %v411, %v638
      %v640 = vpop.f32.mrb[0].mxu0
      %v641 = vpop.f32.mrb[0].mxu0
      %v642 = vadd.f32 %v411, %v641
      %v643 = vpop.f32.mrb[0].mxu0
      %644 = vmatprep.mubr.bf16.mxu0 %v516
      %645 = vmatmul.mubr.bf16.gmra.mrb[0].mxu0 %v369
      %v646 = vpop.f32.mrb[0].mxu0
      %v647 = vadd.f32 %v411, %v646
      %v648 = vpop.f32.mrb[0].mxu0
      %v649 = vpop.f32.mrb[0].mxu0
      %v650 = vadd.f32 %v411, %v649
      %v651 = vpop.f32.mrb[0].mxu0
      %652 = vmatprep.mubr.bf16.mxu0 %v519
      %653 = vmatmul.mubr.bf16.gmra.mrb[0].mxu0 %v371
      %v654 = vpop.f32.mrb[0].mxu0
      %v655 = vadd.f32 %v411, %v654
      %v656 = vpop.f32.mrb[0].mxu0
      %v657 = vpop.f32.mrb[0].mxu0
      %v658 = vadd.f32 %v411, %v657
      %v659 = vpop.f32.mrb[0].mxu0
      %660 = vmatprep.mubr.bf16.mxu0 %v522
      %661 = vmatmul.mubr.bf16.gmra.mrb[0].mxu0 %v373
      %v662 = vpop.f32.mrb[0].mxu0
      %v663 = vadd.f32 %v411, %v662
      %v664 = vpop.f32.mrb[0].mxu0
      %v665 = vpop.f32.mrb[0].mxu0
      %v666 = vadd.f32 %v411, %v665
      %v667 = vpop.f32.mrb[0].mxu0
      %668 = vmatprep.mubr.bf16.mxu0 %v525
      %669 = vmatmul.mubr.bf16.gmra.mrb[0].mxu0 %v375
      %v670 = vpop.f32.mrb[0].mxu0
      %v671 = vadd.f32 %v411, %v670
      %v672 = vpop.f32.mrb[0].mxu0
      %v673 = vpop.f32.mrb[0].mxu0
      %v674 = vadd.f32 %v411, %v673
      %v675 = vpop.f32.mrb[0].mxu0
      %676 = vmatprep.mubr.bf16.mxu0 %v528
      %677 = vmatmul.mubr.bf16.gmra.mrb[0].mxu0 %v377
      %v678 = vpop.f32.mrb[0].mxu0
      %v679 = vadd.f32 %v411, %v678
      %v680 = vpop.f32.mrb[0].mxu0
      %v681 = vpop.f32.mrb[0].mxu0
      %v682 = vadd.f32 %v411, %v681
      %v683 = vpop.f32.mrb[0].mxu0
      %684 = vmatprep.mubr.bf16.mxu0 %v531
      %685 = vmatmul.mubr.bf16.gmra.mrb[0].mxu0 %v379
      %v686 = vpop.f32.mrb[0].mxu0
      %v687 = vadd.f32 %v411, %v686
      %v688 = vpop.f32.mrb[0].mxu0
      %v689 = vpop.f32.mrb[0].mxu0
      %v690 = vadd.f32 %v411, %v689
      %v691 = vpop.f32.mrb[0].mxu0
      %692 = vmatprep.mubr.bf16.mxu0 %v534
      %693 = vmatmul.mubr.bf16.gmra.mrb[0].mxu0 %v381
      %v694 = vpop.f32.mrb[0].mxu0
      %v695 = vadd.f32 %v411, %v694
      %v696 = vpop.f32.mrb[0].mxu0
      %v697 = vpop.f32.mrb[0].mxu0
      %v698 = vadd.f32 %v411, %v697
      %v699 = vpop.f32.mrb[0].mxu0
      %700 = vdwg.mxu0
      %vm701 = vcmp.gt.f32.partialorder %v575, 0.0
      %vm702 = vcmp.gt.f32.partialorder %v578, 0.0
      %vm703 = vcmp.gt.f32.partialorder %v583, 0.0
      %vm704 = vcmp.gt.f32.partialorder %v586, 0.0
      %vm705 = vcmp.gt.f32.partialorder %v591, 0.0
      %vm706 = vcmp.gt.f32.partialorder %v594, 0.0
      %vm707 = vcmp.gt.f32.partialorder %v599, 0.0
      %vm708 = vcmp.gt.f32.partialorder %v602, 0.0
      %vm709 = vcmp.gt.f32.partialorder %v607, 0.0
      %vm710 = vcmp.gt.f32.partialorder %v610, 0.0
      %vm711 = vcmp.gt.f32.partialorder %v615, 0.0
      %vm712 = vcmp.gt.f32.partialorder %v618, 0.0
      %vm713 = vcmp.gt.f32.partialorder %v623, 0.0
      %vm714 = vcmp.gt.f32.partialorder %v626, 0.0
      %vm715 = vcmp.gt.f32.partialorder %v631, 0.0
      %vm716 = vcmp.gt.f32.partialorder %v634, 0.0
      %vm717 = vcmp.gt.f32.partialorder %v639, 0.0
      %vm718 = vcmp.gt.f32.partialorder %v642, 0.0
      %vm719 = vcmp.gt.f32.partialorder %v647, 0.0
      %vm720 = vcmp.gt.f32.partialorder %v650, 0.0
      %vm721 = vcmp.gt.f32.partialorder %v655, 0.0
      %vm722 = vcmp.gt.f32.partialorder %v658, 0.0
      %vm723 = vcmp.gt.f32.partialorder %v663, 0.0
      %vm724 = vcmp.gt.f32.partialorder %v666, 0.0
      %vm725 = vcmp.gt.f32.partialorder %v671, 0.0
      %vm726 = vcmp.gt.f32.partialorder %v674, 0.0
      %vm727 = vcmp.gt.f32.partialorder %v679, 0.0
      %vm728 = vcmp.gt.f32.partialorder %v682, 0.0
      %vm729 = vcmp.gt.f32.partialorder %v687, 0.0
      %vm730 = vcmp.gt.f32.partialorder %v690, 0.0
      %vm731 = vcmp.gt.f32.partialorder %v695, 0.0
      %vm732 = vcmp.gt.f32.partialorder %v698, 0.0
      %v733 = vmul.f32 %v575, 0.01
      %v734 = vmul.f32 %v578, 0.01
      %v735 = vmul.f32 %v583, 0.01
      %v736 = vmul.f32 %v586, 0.01
      %v737 = vmul.f32 %v591, 0.01
      %v738 = vmul.f32 %v594, 0.01
      %v739 = vmul.f32 %v599, 0.01
      %v740 = vmul.f32 %v602, 0.01
      %v741 = vmul.f32 %v607, 0.01
      %v742 = vmul.f32 %v610, 0.01
      %v743 = vmul.f32 %v615, 0.01
      %v744 = vmul.f32 %v618, 0.01
      %v745 = vmul.f32 %v623, 0.01
      %v746 = vmul.f32 %v626, 0.01
      %v747 = vmul.f32 %v631, 0.01
      %v748 = vmul.f32 %v634, 0.01
      %v749 = vmul.f32 %v639, 0.01
      %v750 = vmul.f32 %v642, 0.01
      %v751 = vmul.f32 %v647, 0.01
      %v752 = vmul.f32 %v650, 0.01
      %v753 = vmul.f32 %v655, 0.01
      %v754 = vmul.f32 %v658, 0.01
      %v755 = vmul.f32 %v663, 0.01
      %v756 = vmul.f32 %v666, 0.01
      %v757 = vmul.f32 %v671, 0.01
      %v758 = vmul.f32 %v674, 0.01
      %v759 = vmul.f32 %v679, 0.01
      %v760 = vmul.f32 %v682, 0.01
      %v761 = vmul.f32 %v687, 0.01
      %v762 = vmul.f32 %v690, 0.01
      %v763 = vmul.f32 %v695, 0.01
      %v764 = vmul.f32 %v698, 0.01
      %v765 = vsel %vm701, %v575, %v733
      %v766 = vsel %vm702, %v578, %v734
      %v767 = vsel %vm703, %v583, %v735
      %v768 = vsel %vm704, %v586, %v736
      %v769 = vsel %vm705, %v591, %v737
      %v770 = vsel %vm706, %v594, %v738
      %v771 = vsel %vm707, %v599, %v739
      %v772 = vsel %vm708, %v602, %v740
      %v773 = vsel %vm709, %v607, %v741
      %v774 = vsel %vm710, %v610, %v742
      %v775 = vsel %vm711, %v615, %v743
      %v776 = vsel %vm712, %v618, %v744
      %v777 = vsel %vm713, %v623, %v745
      %v778 = vsel %vm714, %v626, %v746
      %v779 = vsel %vm715, %v631, %v747
      %v780 = vsel %vm716, %v634, %v748
      %v781 = vsel %vm717, %v639, %v749
      %v782 = vsel %vm718, %v642, %v750
      %v783 = vsel %vm719, %v647, %v751
      %v784 = vsel %vm720, %v650, %v752
      %v785 = vsel %vm721, %v655, %v753
      %v786 = vsel %vm722, %v658, %v754
      %v787 = vsel %vm723, %v663, %v755
      %v788 = vsel %vm724, %v666, %v756
      %v789 = vsel %vm725, %v671, %v757
      %v790 = vsel %vm726, %v674, %v758
      %v791 = vsel %vm727, %v679, %v759
      %v792 = vsel %vm728, %v682, %v760
      %v793 = vsel %vm729, %v687, %v761
      %v794 = vsel %vm730, %v690, %v762
      %v795 = vsel %vm731, %v695, %v763
      %v796 = vsel %vm732, %v698, %v764
      %v797 = vpack.c.bf16 %v766, %v765
      %v798 = vpack.c.bf16 %v768, %v767
      %v799 = vpack.c.bf16 %v770, %v769
      %v800 = vpack.c.bf16 %v772, %v771
      %v801 = vpack.c.bf16 %v774, %v773
      %v802 = vpack.c.bf16 %v776, %v775
      %v803 = vpack.c.bf16 %v778, %v777
      %v804 = vpack.c.bf16 %v780, %v779
      %v805 = vpack.c.bf16 %v782, %v781
      %v806 = vpack.c.bf16 %v784, %v783
      %v807 = vpack.c.bf16 %v786, %v785
      %v808 = vpack.c.bf16 %v788, %v787
      %v809 = vpack.c.bf16 %v790, %v789
      %v810 = vpack.c.bf16 %v792, %v791
      %v811 = vpack.c.bf16 %v794, %v793
      %v812 = vpack.c.bf16 %v796, %v795
      %v813 = vld [vmem:[%s2] sm:$0xf]
      %v814 = vld [vmem:[%s2 + $0x4] sm:$0xf]
      %v815 = vld [vmem:[%s2 + $0x8] sm:$0xf]
      %v816 = vld [vmem:[%s2 + $0xc] sm:$0xf]
      %v817 = vld [vmem:[%s2 + $0x10] sm:$0xf]
      %v818 = vld [vmem:[%s2 + $0x14] sm:$0xf]
      %v819 = vld [vmem:[%s2 + $0x18] sm:$0xf]
      %v820 = vld [vmem:[%s2 + $0x1c] sm:$0xf]
      %v821 = vld [vmem:[%s2 + $0x20] sm:$0xf]
      %v822 = vld [vmem:[%s2 + $0x24] sm:$0xf]
      %v823 = vld [vmem:[%s2 + $0x28] sm:$0xf]
      %v824 = vld [vmem:[%s2 + $0x2c] sm:$0xf]
      %v825 = vld [vmem:[%s2 + $0x30] sm:$0xf]
      %v826 = vld [vmem:[%s2 + $0x34] sm:$0xf]
      %v827 = vld [vmem:[%s2 + $0x38] sm:$0xf]
      %v828 = vld [vmem:[%s2 + $0x3c] sm:$0xf]
      %v829 = vlaneseq
      %v830 = vshrl.u32 %v829, 7
      %v831 = vsub.s32 1, %v830
      %v832 = vrot.slane %v286, %v831
      %v849 = vunpack.c.l.b16 %v813
      %v850 = vunpack.c.l.b16 %v814
      %v851 = vunpack.c.l.b16 %v815
      %v852 = vunpack.c.l.b16 %v816
      %v853 = vunpack.c.l.b16 %v817
      %v854 = vunpack.c.l.b16 %v818
      %v855 = vunpack.c.l.b16 %v819
      %v856 = vunpack.c.l.b16 %v820
      %v857 = vunpack.c.l.b16 %v821
      %v858 = vunpack.c.l.b16 %v822
      %v859 = vunpack.c.l.b16 %v823
      %v860 = vunpack.c.l.b16 %v824
      %v861 = vunpack.c.l.b16 %v825
      %v862 = vunpack.c.l.b16 %v826
      %v863 = vunpack.c.l.b16 %v827
      %v864 = vunpack.c.l.b16 %v828
      %v865 = vpack.c.b16 %v850, %v849
      %v866 = vpack.c.b16 %v852, %v851
      %v867 = vpack.c.b16 %v854, %v853
      %v868 = vpack.c.b16 %v856, %v855
      %v869 = vpack.c.b16 %v858, %v857
      %v870 = vpack.c.b16 %v860, %v859
      %v871 = vpack.c.b16 %v862, %v861
      %v872 = vpack.c.b16 %v864, %v863
      %881 = vmatprep.subr.bf16.mxu0 0
      %882 = vmatpush1.bf16.msra.mxu0 %v865
      %883 = vmatprep.subr.bf16.mxu0 0
      %884 = vmatpush1.bf16.msra.mxu0 %v866
      %885 = vmatprep.subr.bf16.mxu0 0
      %886 = vmatpush1.bf16.msra.mxu0 %v867
      %887 = vmatprep.subr.bf16.mxu0 0
      %888 = vmatpush1.bf16.msra.mxu0 %v868
      %889 = vmatprep.subr.bf16.mxu0 0
      %890 = vmatpush1.bf16.msra.mxu0 %v869
      %891 = vmatprep.subr.bf16.mxu0 0
      %892 = vmatpush1.bf16.msra.mxu0 %v870
      %893 = vmatprep.subr.bf16.mxu0 0
      %894 = vmatpush1.bf16.msra.mxu0 %v871
      %895 = vmatprep.subr.bf16.mxu0 0
      %896 = vmatpush1.bf16.msra.mxu0 %v872
      %897 = vmatprep.subr.bf16.mxu0 0
      %898 = vmatpush1.bf16.msra.mxu0 0
      %899 = vmatprep.subr.bf16.mxu0 0
      %900 = vmatpush1.bf16.msra.mxu0 0
      %901 = vmatprep.subr.bf16.mxu0 0
      %902 = vmatpush1.bf16.msra.mxu0 0
      %903 = vmatprep.subr.bf16.mxu0 0
      %904 = vmatpush1.bf16.msra.mxu0 0
      %905 = vmatprep.subr.bf16.mxu0 0
      %906 = vmatpush1.bf16.msra.mxu0 0
      %907 = vmatprep.subr.bf16.mxu0 0
      %908 = vmatpush1.bf16.msra.mxu0 0
      %909 = vmatprep.subr.bf16.mxu0 0
      %910 = vmatpush1.bf16.msra.mxu0 0
      %911 = vmatprep.subr.bf16.mxu0 0
      %912 = vmatpush1.bf16.msra.mxu0 0
      %913 = vmatprep.mubr.bf16.mxu0 0
      %914 = vmatmul.mubr.bf16.gmra.mrb[0].mxu0 %v797
      %v915 = vpop.f32.mrb[0].mxu0
      %v916 = vadd.f32 %v832, %v915
      %v917 = vpop.f32.mrb[0].mxu0
      %v918 = vpop.f32.mrb[0].mxu0
      %v919 = vadd.f32 %v832, %v918
      %v920 = vpop.f32.mrb[0].mxu0
      %921 = vmatprep.mubr.bf16.mxu0 0
      %922 = vmatmul.mubr.bf16.gmra.mrb[0].mxu0 %v798
      %v923 = vpop.f32.mrb[0].mxu0
      %v924 = vadd.f32 %v832, %v923
      %v925 = vpop.f32.mrb[0].mxu0
      %v926 = vpop.f32.mrb[0].mxu0
      %v927 = vadd.f32 %v832, %v926
      %v928 = vpop.f32.mrb[0].mxu0
      %929 = vmatprep.mubr.bf16.mxu0 0
      %930 = vmatmul.mubr.bf16.gmra.mrb[0].mxu0 %v799
      %v931 = vpop.f32.mrb[0].mxu0
      %v932 = vadd.f32 %v832, %v931
      %v933 = vpop.f32.mrb[0].mxu0
      %v934 = vpop.f32.mrb[0].mxu0
      %v935 = vadd.f32 %v832, %v934
      %v936 = vpop.f32.mrb[0].mxu0
      %937 = vmatprep.mubr.bf16.mxu0 0
      %938 = vmatmul.mubr.bf16.gmra.mrb[0].mxu0 %v800
      %v939 = vpop.f32.mrb[0].mxu0
      %v940 = vadd.f32 %v832, %v939
      %v941 = vpop.f32.mrb[0].mxu0
      %v942 = vpop.f32.mrb[0].mxu0
      %v943 = vadd.f32 %v832, %v942
      %v944 = vpop.f32.mrb[0].mxu0
      %945 = vmatprep.mubr.bf16.mxu0 0
      %946 = vmatmul.mubr.bf16.gmra.mrb[0].mxu0 %v801
      %v947 = vpop.f32.mrb[0].mxu0
      %v948 = vadd.f32 %v832, %v947
      %v949 = vpop.f32.mrb[0].mxu0
      %v950 = vpop.f32.mrb[0].mxu0
      %v951 = vadd.f32 %v832, %v950
      %v952 = vpop.f32.mrb[0].mxu0
      %953 = vmatprep.mubr.bf16.mxu0 0
      %954 = vmatmul.mubr.bf16.gmra.mrb[0].mxu0 %v802
      %v955 = vpop.f32.mrb[0].mxu0
      %v956 = vadd.f32 %v832, %v955
      %v957 = vpop.f32.mrb[0].mxu0
      %v958 = vpop.f32.mrb[0].mxu0
      %v959 = vadd.f32 %v832, %v958
      %v960 = vpop.f32.mrb[0].mxu0
      %961 = vmatprep.mubr.bf16.mxu0 0
      %962 = vmatmul.mubr.bf16.gmra.mrb[0].mxu0 %v803
      %v963 = vpop.f32.mrb[0].mxu0
      %v964 = vadd.f32 %v832, %v963
      %v965 = vpop.f32.mrb[0].mxu0
      %v966 = vpop.f32.mrb[0].mxu0
      %v967 = vadd.f32 %v832, %v966
      %v968 = vpop.f32.mrb[0].mxu0
      %969 = vmatprep.mubr.bf16.mxu0 0
      %970 = vmatmul.mubr.bf16.gmra.mrb[0].mxu0 %v804
      %v971 = vpop.f32.mrb[0].mxu0
      %v972 = vadd.f32 %v832, %v971
      %v973 = vpop.f32.mrb[0].mxu0
      %v974 = vpop.f32.mrb[0].mxu0
      %v975 = vadd.f32 %v832, %v974
      %v976 = vpop.f32.mrb[0].mxu0
      %977 = vmatprep.mubr.bf16.mxu0 0
      %978 = vmatmul.mubr.bf16.gmra.mrb[0].mxu0 %v805
      %v979 = vpop.f32.mrb[0].mxu0
      %v980 = vadd.f32 %v832, %v979
      %v981 = vpop.f32.mrb[0].mxu0
      %v982 = vpop.f32.mrb[0].mxu0
      %v983 = vadd.f32 %v832, %v982
      %v984 = vpop.f32.mrb[0].mxu0
      %985 = vmatprep.mubr.bf16.mxu0 0
      %986 = vmatmul.mubr.bf16.gmra.mrb[0].mxu0 %v806
      %v987 = vpop.f32.mrb[0].mxu0
      %v988 = vadd.f32 %v832, %v987
      %v989 = vpop.f32.mrb[0].mxu0
      %v990 = vpop.f32.mrb[0].mxu0
      %v991 = vadd.f32 %v832, %v990
      %v992 = vpop.f32.mrb[0].mxu0
      %993 = vmatprep.mubr.bf16.mxu0 0
      %994 = vmatmul.mubr.bf16.gmra.mrb[0].mxu0 %v807
      %v995 = vpop.f32.mrb[0].mxu0
      %v996 = vadd.f32 %v832, %v995
      %v997 = vpop.f32.mrb[0].mxu0
      %v998 = vpop.f32.mrb[0].mxu0
      %v999 = vadd.f32 %v832, %v998
      %v1000 = vpop.f32.mrb[0].mxu0
      %1001 = vmatprep.mubr.bf16.mxu0 0
      %1002 = vmatmul.mubr.bf16.gmra.mrb[0].mxu0 %v808
      %v1003 = vpop.f32.mrb[0].mxu0
      %v1004 = vadd.f32 %v832, %v1003
      %v1005 = vpop.f32.mrb[0].mxu0
      %v1006 = vpop.f32.mrb[0].mxu0
      %v1007 = vadd.f32 %v832, %v1006
      %v1008 = vpop.f32.mrb[0].mxu0
      %1009 = vmatprep.mubr.bf16.mxu0 0
      %1010 = vmatmul.mubr.bf16.gmra.mrb[0].mxu0 %v809
      %v1011 = vpop.f32.mrb[0].mxu0
      %v1012 = vadd.f32 %v832, %v1011
      %v1013 = vpop.f32.mrb[0].mxu0
      %v1014 = vpop.f32.mrb[0].mxu0
      %v1015 = vadd.f32 %v832, %v1014
      %v1016 = vpop.f32.mrb[0].mxu0
      %1017 = vmatprep.mubr.bf16.mxu0 0
      %1018 = vmatmul.mubr.bf16.gmra.mrb[0].mxu0 %v810
      %v1019 = vpop.f32.mrb[0].mxu0
      %v1020 = vadd.f32 %v832, %v1019
      %v1021 = vpop.f32.mrb[0].mxu0
      %v1022 = vpop.f32.mrb[0].mxu0
      %v1023 = vadd.f32 %v832, %v1022
      %v1024 = vpop.f32.mrb[0].mxu0
      %1025 = vmatprep.mubr.bf16.mxu0 0
      %1026 = vmatmul.mubr.bf16.gmra.mrb[0].mxu0 %v811
      %v1027 = vpop.f32.mrb[0].mxu0
      %v1028 = vadd.f32 %v832, %v1027
      %v1029 = vpop.f32.mrb[0].mxu0
      %v1030 = vpop.f32.mrb[0].mxu0
      %v1031 = vadd.f32 %v832, %v1030
      %v1032 = vpop.f32.mrb[0].mxu0
      %1033 = vmatprep.mubr.bf16.mxu0 0
      %1034 = vmatmul.mubr.bf16.gmra.mrb[0].mxu0 %v812
      %v1035 = vpop.f32.mrb[0].mxu0
      %v1036 = vadd.f32 %v832, %v1035
      %v1037 = vpop.f32.mrb[0].mxu0
      %v1038 = vpop.f32.mrb[0].mxu0
      %v1039 = vadd.f32 %v832, %v1038
      %v1040 = vpop.f32.mrb[0].mxu0
      %1041 = vdwg.mxu0
      %vm1042 = vcmp.gt.f32.partialorder %v916, 0.0
      %vm1043 = vcmp.gt.f32.partialorder %v919, 0.0
      %vm1044 = vcmp.gt.f32.partialorder %v924, 0.0
      %vm1045 = vcmp.gt.f32.partialorder %v927, 0.0
      %vm1046 = vcmp.gt.f32.partialorder %v932, 0.0
      %vm1047 = vcmp.gt.f32.partialorder %v935, 0.0
      %vm1048 = vcmp.gt.f32.partialorder %v940, 0.0
      %vm1049 = vcmp.gt.f32.partialorder %v943, 0.0
      %vm1050 = vcmp.gt.f32.partialorder %v948, 0.0
      %vm1051 = vcmp.gt.f32.partialorder %v951, 0.0
      %vm1052 = vcmp.gt.f32.partialorder %v956, 0.0
      %vm1053 = vcmp.gt.f32.partialorder %v959, 0.0
      %vm1054 = vcmp.gt.f32.partialorder %v964, 0.0
      %vm1055 = vcmp.gt.f32.partialorder %v967, 0.0
      %vm1056 = vcmp.gt.f32.partialorder %v972, 0.0
      %vm1057 = vcmp.gt.f32.partialorder %v975, 0.0
      %vm1058 = vcmp.gt.f32.partialorder %v980, 0.0
      %vm1059 = vcmp.gt.f32.partialorder %v983, 0.0
      %vm1060 = vcmp.gt.f32.partialorder %v988, 0.0
      %vm1061 = vcmp.gt.f32.partialorder %v991, 0.0
      %vm1062 = vcmp.gt.f32.partialorder %v996, 0.0
      %vm1063 = vcmp.gt.f32.partialorder %v999, 0.0
      %vm1064 = vcmp.gt.f32.partialorder %v1004, 0.0
      %vm1065 = vcmp.gt.f32.partialorder %v1007, 0.0
      %vm1066 = vcmp.gt.f32.partialorder %v1012, 0.0
      %vm1067 = vcmp.gt.f32.partialorder %v1015, 0.0
      %vm1068 = vcmp.gt.f32.partialorder %v1020, 0.0
      %vm1069 = vcmp.gt.f32.partialorder %v1023, 0.0
      %vm1070 = vcmp.gt.f32.partialorder %v1028, 0.0
      %vm1071 = vcmp.gt.f32.partialorder %v1031, 0.0
      %vm1072 = vcmp.gt.f32.partialorder %v1036, 0.0
      %vm1073 = vcmp.gt.f32.partialorder %v1039, 0.0
      %v1074 = vmul.f32 %v916, 0.01
      %v1075 = vmul.f32 %v919, 0.01
      %v1076 = vmul.f32 %v924, 0.01
      %v1077 = vmul.f32 %v927, 0.01
      %v1078 = vmul.f32 %v932, 0.01
      %v1079 = vmul.f32 %v935, 0.01
      %v1080 = vmul.f32 %v940, 0.01
      %v1081 = vmul.f32 %v943, 0.01
      %v1082 = vmul.f32 %v948, 0.01
      %v1083 = vmul.f32 %v951, 0.01
      %v1084 = vmul.f32 %v956, 0.01
      %v1085 = vmul.f32 %v959, 0.01
      %v1086 = vmul.f32 %v964, 0.01
      %v1087 = vmul.f32 %v967, 0.01
      %v1088 = vmul.f32 %v972, 0.01
      %v1089 = vmul.f32 %v975, 0.01
      %v1090 = vmul.f32 %v980, 0.01
      %v1091 = vmul.f32 %v983, 0.01
      %v1092 = vmul.f32 %v988, 0.01
      %v1093 = vmul.f32 %v991, 0.01
      %v1094 = vmul.f32 %v996, 0.01
      %v1095 = vmul.f32 %v999, 0.01
      %v1096 = vmul.f32 %v1004, 0.01
      %v1097 = vmul.f32 %v1007, 0.01
      %v1098 = vmul.f32 %v1012, 0.01
      %v1099 = vmul.f32 %v1015, 0.01
      %v1100 = vmul.f32 %v1020, 0.01
      %v1101 = vmul.f32 %v1023, 0.01
      %v1102 = vmul.f32 %v1028, 0.01
      %v1103 = vmul.f32 %v1031, 0.01
      %v1104 = vmul.f32 %v1036, 0.01
      %v1105 = vmul.f32 %v1039, 0.01
      %v1106 = vsel %vm1042, %v916, %v1074
      %v1107 = vsel %vm1043, %v919, %v1075
      %v1108 = vsel %vm1044, %v924, %v1076
      %v1109 = vsel %vm1045, %v927, %v1077
      %v1110 = vsel %vm1046, %v932, %v1078
      %v1111 = vsel %vm1047, %v935, %v1079
      %v1112 = vsel %vm1048, %v940, %v1080
      %v1113 = vsel %vm1049, %v943, %v1081
      %v1114 = vsel %vm1050, %v948, %v1082
      %v1115 = vsel %vm1051, %v951, %v1083
      %v1116 = vsel %vm1052, %v956, %v1084
      %v1117 = vsel %vm1053, %v959, %v1085
      %v1118 = vsel %vm1054, %v964, %v1086
      %v1119 = vsel %vm1055, %v967, %v1087
      %v1120 = vsel %vm1056, %v972, %v1088
      %v1121 = vsel %vm1057, %v975, %v1089
      %v1122 = vsel %vm1058, %v980, %v1090
      %v1123 = vsel %vm1059, %v983, %v1091
      %v1124 = vsel %vm1060, %v988, %v1092
      %v1125 = vsel %vm1061, %v991, %v1093
      %v1126 = vsel %vm1062, %v996, %v1094
      %v1127 = vsel %vm1063, %v999, %v1095
      %v1128 = vsel %vm1064, %v1004, %v1096
      %v1129 = vsel %vm1065, %v1007, %v1097
      %v1130 = vsel %vm1066, %v1012, %v1098
      %v1131 = vsel %vm1067, %v1015, %v1099
      %v1132 = vsel %vm1068, %v1020, %v1100
      %v1133 = vsel %vm1069, %v1023, %v1101
      %v1134 = vsel %vm1070, %v1028, %v1102
      %v1135 = vsel %vm1071, %v1031, %v1103
      %v1136 = vsel %vm1072, %v1036, %v1104
      %v1137 = vsel %vm1073, %v1039, %v1105
      %v1138 = vpack.c.bf16 %v1107, %v1106
      %v1139 = vpack.c.bf16 %v1109, %v1108
      %v1140 = vpack.c.bf16 %v1111, %v1110
      %v1141 = vpack.c.bf16 %v1113, %v1112
      %v1142 = vpack.c.bf16 %v1115, %v1114
      %v1143 = vpack.c.bf16 %v1117, %v1116
      %v1144 = vpack.c.bf16 %v1119, %v1118
      %v1145 = vpack.c.bf16 %v1121, %v1120
      %v1146 = vpack.c.bf16 %v1123, %v1122
      %v1147 = vpack.c.bf16 %v1125, %v1124
      %v1148 = vpack.c.bf16 %v1127, %v1126
      %v1149 = vpack.c.bf16 %v1129, %v1128
      %v1150 = vpack.c.bf16 %v1131, %v1130
      %v1151 = vpack.c.bf16 %v1133, %v1132
      %v1152 = vpack.c.bf16 %v1135, %v1134
      %v1153 = vpack.c.bf16 %v1137, %v1136
      %v1154 = vld [vmem:[%s3] sm:$0xf]
      %v1155 = vld [vmem:[%s3 + $0x4] sm:$0xf]
      %v1156 = vld [vmem:[%s3 + $0x8] sm:$0xf]
      %v1157 = vld [vmem:[%s3 + $0xc] sm:$0xf]
      %v1158 = vld [vmem:[%s3 + $0x10] sm:$0xf]
      %v1159 = vld [vmem:[%s3 + $0x14] sm:$0xf]
      %v1160 = vld [vmem:[%s3 + $0x18] sm:$0xf]
      %v1161 = vld [vmem:[%s3 + $0x1c] sm:$0xf]
      %v1162 = vld [vmem:[%s3 + $0x20] sm:$0xf]
      %v1163 = vld [vmem:[%s3 + $0x24] sm:$0xf]
      %v1164 = vld [vmem:[%s3 + $0x28] sm:$0xf]
      %v1165 = vld [vmem:[%s3 + $0x2c] sm:$0xf]
      %v1166 = vld [vmem:[%s3 + $0x30] sm:$0xf]
      %v1167 = vld [vmem:[%s3 + $0x34] sm:$0xf]
      %v1168 = vld [vmem:[%s3 + $0x38] sm:$0xf]
      %v1169 = vld [vmem:[%s3 + $0x3c] sm:$0xf]
      %v1170 = vlaneseq
      %v1171 = vshrl.u32 %v1170, 7
      %v1172 = vsub.s32 2, %v1171
      %v1173 = vrot.slane %v286, %v1172
      %v1190 = vunpack.c.l.b16 %v1154
      %v1191 = vunpack.c.l.b16 %v1155
      %v1192 = vunpack.c.l.b16 %v1156
      %v1193 = vunpack.c.l.b16 %v1157
      %v1194 = vunpack.c.l.b16 %v1158
      %v1195 = vunpack.c.l.b16 %v1159
      %v1196 = vunpack.c.l.b16 %v1160
      %v1197 = vunpack.c.l.b16 %v1161
      %v1198 = vunpack.c.l.b16 %v1162
      %v1199 = vunpack.c.l.b16 %v1163
      %v1200 = vunpack.c.l.b16 %v1164
      %v1201 = vunpack.c.l.b16 %v1165
      %v1202 = vunpack.c.l.b16 %v1166
      %v1203 = vunpack.c.l.b16 %v1167
      %v1204 = vunpack.c.l.b16 %v1168
      %v1205 = vunpack.c.l.b16 %v1169
      %v1206 = vpack.c.b16 %v1191, %v1190
      %v1207 = vpack.c.b16 %v1193, %v1192
      %v1208 = vpack.c.b16 %v1195, %v1194
      %v1209 = vpack.c.b16 %v1197, %v1196
      %v1210 = vpack.c.b16 %v1199, %v1198
      %v1211 = vpack.c.b16 %v1201, %v1200
      %v1212 = vpack.c.b16 %v1203, %v1202
      %v1213 = vpack.c.b16 %v1205, %v1204
      %1222 = vmatprep.subr.bf16.mxu0 0
      %1223 = vmatpush1.bf16.msra.mxu0 %v1206
      %1224 = vmatprep.subr.bf16.mxu0 0
      %1225 = vmatpush1.bf16.msra.mxu0 %v1207
      %1226 = vmatprep.subr.bf16.mxu0 0
      %1227 = vmatpush1.bf16.msra.mxu0 %v1208
      %1228 = vmatprep.subr.bf16.mxu0 0
      %1229 = vmatpush1.bf16.msra.mxu0 %v1209
      %1230 = vmatprep.subr.bf16.mxu0 0
      %1231 = vmatpush1.bf16.msra.mxu0 %v1210
      %1232 = vmatprep.subr.bf16.mxu0 0
      %1233 = vmatpush1.bf16.msra.mxu0 %v1211
      %1234 = vmatprep.subr.bf16.mxu0 0
      %1235 = vmatpush1.bf16.msra.mxu0 %v1212
      %1236 = vmatprep.subr.bf16.mxu0 0
      %1237 = vmatpush1.bf16.msra.mxu0 %v1213
      %1238 = vmatprep.subr.bf16.mxu0 0
      %1239 = vmatpush1.bf16.msra.mxu0 0
      %1240 = vmatprep.subr.bf16.mxu0 0
      %1241 = vmatpush1.bf16.msra.mxu0 0
      %1242 = vmatprep.subr.bf16.mxu0 0
      %1243 = vmatpush1.bf16.msra.mxu0 0
      %1244 = vmatprep.subr.bf16.mxu0 0
      %1245 = vmatpush1.bf16.msra.mxu0 0
      %1246 = vmatprep.subr.bf16.mxu0 0
      %1247 = vmatpush1.bf16.msra.mxu0 0
      %1248 = vmatprep.subr.bf16.mxu0 0
      %1249 = vmatpush1.bf16.msra.mxu0 0
      %1250 = vmatprep.subr.bf16.mxu0 0
      %1251 = vmatpush1.bf16.msra.mxu0 0
      %1252 = vmatprep.subr.bf16.mxu0 0
      %1253 = vmatpush1.bf16.msra.mxu0 0
      %1254 = vmatprep.mubr.bf16.mxu0 0
      %1255 = vmatmul.mubr.bf16.gmra.mrb[0].mxu0 %v1138
      %v1256 = vpop.f32.mrb[0].mxu0
      %v1257 = vadd.f32 %v1173, %v1256
      %v1258 = vpop.f32.mrb[0].mxu0
      %v1259 = vpop.f32.mrb[0].mxu0
      %v1260 = vadd.f32 %v1173, %v1259
      %v1261 = vpop.f32.mrb[0].mxu0
      %1262 = vmatprep.mubr.bf16.mxu0 0
      %1263 = vmatmul.mubr.bf16.gmra.mrb[0].mxu0 %v1139
      %v1264 = vpop.f32.mrb[0].mxu0
      %v1265 = vadd.f32 %v1173, %v1264
      %v1266 = vpop.f32.mrb[0].mxu0
      %v1267 = vpop.f32.mrb[0].mxu0
      %v1268 = vadd.f32 %v1173, %v1267
      %v1269 = vpop.f32.mrb[0].mxu0
      %1270 = vmatprep.mubr.bf16.mxu0 0
      %1271 = vmatmul.mubr.bf16.gmra.mrb[0].mxu0 %v1140
      %v1272 = vpop.f32.mrb[0].mxu0
      %v1273 = vadd.f32 %v1173, %v1272
      %v1274 = vpop.f32.mrb[0].mxu0
      %v1275 = vpop.f32.mrb[0].mxu0
      %v1276 = vadd.f32 %v1173, %v1275
      %v1277 = vpop.f32.mrb[0].mxu0
      %1278 = vmatprep.mubr.bf16.mxu0 0
      %1279 = vmatmul.mubr.bf16.gmra.mrb[0].mxu0 %v1141
      %v1280 = vpop.f32.mrb[0].mxu0
      %v1281 = vadd.f32 %v1173, %v1280
      %v1282 = vpop.f32.mrb[0].mxu0
      %v1283 = vpop.f32.mrb[0].mxu0
      %v1284 = vadd.f32 %v1173, %v1283
      %v1285 = vpop.f32.mrb[0].mxu0
      %1286 = vmatprep.mubr.bf16.mxu0 0
      %1287 = vmatmul.mubr.bf16.gmra.mrb[0].mxu0 %v1142
      %v1288 = vpop.f32.mrb[0].mxu0
      %v1289 = vadd.f32 %v1173, %v1288
      %v1290 = vpop.f32.mrb[0].mxu0
      %v1291 = vpop.f32.mrb[0].mxu0
      %v1292 = vadd.f32 %v1173, %v1291
      %v1293 = vpop.f32.mrb[0].mxu0
      %1294 = vmatprep.mubr.bf16.mxu0 0
      %1295 = vmatmul.mubr.bf16.gmra.mrb[0].mxu0 %v1143
      %v1296 = vpop.f32.mrb[0].mxu0
      %v1297 = vadd.f32 %v1173, %v1296
      %v1298 = vpop.f32.mrb[0].mxu0
      %v1299 = vpop.f32.mrb[0].mxu0
      %v1300 = vadd.f32 %v1173, %v1299
      %v1301 = vpop.f32.mrb[0].mxu0
      %1302 = vmatprep.mubr.bf16.mxu0 0
      %1303 = vmatmul.mubr.bf16.gmra.mrb[0].mxu0 %v1144
      %v1304 = vpop.f32.mrb[0].mxu0
      %v1305 = vadd.f32 %v1173, %v1304
      %v1306 = vpop.f32.mrb[0].mxu0
      %v1307 = vpop.f32.mrb[0].mxu0
      %v1308 = vadd.f32 %v1173, %v1307
      %v1309 = vpop.f32.mrb[0].mxu0
      %1310 = vmatprep.mubr.bf16.mxu0 0
      %1311 = vmatmul.mubr.bf16.gmra.mrb[0].mxu0 %v1145
      %v1312 = vpop.f32.mrb[0].mxu0
      %v1313 = vadd.f32 %v1173, %v1312
      %v1314 = vpop.f32.mrb[0].mxu0
      %v1315 = vpop.f32.mrb[0].mxu0
      %v1316 = vadd.f32 %v1173, %v1315
      %v1317 = vpop.f32.mrb[0].mxu0
      %1318 = vmatprep.mubr.bf16.mxu0 0
      %1319 = vmatmul.mubr.bf16.gmra.mrb[0].mxu0 %v1146
      %v1320 = vpop.f32.mrb[0].mxu0
      %v1321 = vadd.f32 %v1173, %v1320
      %v1322 = vpop.f32.mrb[0].mxu0
      %v1323 = vpop.f32.mrb[0].mxu0
      %v1324 = vadd.f32 %v1173, %v1323
      %v1325 = vpop.f32.mrb[0].mxu0
      %1326 = vmatprep.mubr.bf16.mxu0 0
      %1327 = vmatmul.mubr.bf16.gmra.mrb[0].mxu0 %v1147
      %v1328 = vpop.f32.mrb[0].mxu0
      %v1329 = vadd.f32 %v1173, %v1328
      %v1330 = vpop.f32.mrb[0].mxu0
      %v1331 = vpop.f32.mrb[0].mxu0
      %v1332 = vadd.f32 %v1173, %v1331
      %v1333 = vpop.f32.mrb[0].mxu0
      %1334 = vmatprep.mubr.bf16.mxu0 0
      %1335 = vmatmul.mubr.bf16.gmra.mrb[0].mxu0 %v1148
      %v1336 = vpop.f32.mrb[0].mxu0
      %v1337 = vadd.f32 %v1173, %v1336
      %v1338 = vpop.f32.mrb[0].mxu0
      %v1339 = vpop.f32.mrb[0].mxu0
      %v1340 = vadd.f32 %v1173, %v1339
      %v1341 = vpop.f32.mrb[0].mxu0
      %1342 = vmatprep.mubr.bf16.mxu0 0
      %1343 = vmatmul.mubr.bf16.gmra.mrb[0].mxu0 %v1149
      %v1344 = vpop.f32.mrb[0].mxu0
      %v1345 = vadd.f32 %v1173, %v1344
      %v1346 = vpop.f32.mrb[0].mxu0
      %v1347 = vpop.f32.mrb[0].mxu0
      %v1348 = vadd.f32 %v1173, %v1347
      %v1349 = vpop.f32.mrb[0].mxu0
      %1350 = vmatprep.mubr.bf16.mxu0 0
      %1351 = vmatmul.mubr.bf16.gmra.mrb[0].mxu0 %v1150
      %v1352 = vpop.f32.mrb[0].mxu0
      %v1353 = vadd.f32 %v1173, %v1352
      %v1354 = vpop.f32.mrb[0].mxu0
      %v1355 = vpop.f32.mrb[0].mxu0
      %v1356 = vadd.f32 %v1173, %v1355
      %v1357 = vpop.f32.mrb[0].mxu0
      %1358 = vmatprep.mubr.bf16.mxu0 0
      %1359 = vmatmul.mubr.bf16.gmra.mrb[0].mxu0 %v1151
      %v1360 = vpop.f32.mrb[0].mxu0
      %v1361 = vadd.f32 %v1173, %v1360
      %v1362 = vpop.f32.mrb[0].mxu0
      %v1363 = vpop.f32.mrb[0].mxu0
      %v1364 = vadd.f32 %v1173, %v1363
      %v1365 = vpop.f32.mrb[0].mxu0
      %1366 = vmatprep.mubr.bf16.mxu0 0
      %1367 = vmatmul.mubr.bf16.gmra.mrb[0].mxu0 %v1152
      %v1368 = vpop.f32.mrb[0].mxu0
      %v1369 = vadd.f32 %v1173, %v1368
      %v1370 = vpop.f32.mrb[0].mxu0
      %v1371 = vpop.f32.mrb[0].mxu0
      %v1372 = vadd.f32 %v1173, %v1371
      %v1373 = vpop.f32.mrb[0].mxu0
      %1374 = vmatprep.mubr.bf16.mxu0 0
      %1375 = vmatmul.mubr.bf16.gmra.mrb[0].mxu0 %v1153
      %v1376 = vpop.f32.mrb[0].mxu0
      %v1377 = vadd.f32 %v1173, %v1376
      %v1378 = vpop.f32.mrb[0].mxu0
      %v1379 = vpop.f32.mrb[0].mxu0
      %v1380 = vadd.f32 %v1173, %v1379
      %v1381 = vpop.f32.mrb[0].mxu0
      %1382 = vdwg.mxu0
      %vm1383 = vcmp.gt.f32.partialorder %v1257, 0.0
      %vm1384 = vcmp.gt.f32.partialorder %v1260, 0.0
      %vm1385 = vcmp.gt.f32.partialorder %v1265, 0.0
      %vm1386 = vcmp.gt.f32.partialorder %v1268, 0.0
      %vm1387 = vcmp.gt.f32.partialorder %v1273, 0.0
      %vm1388 = vcmp.gt.f32.partialorder %v1276, 0.0
      %vm1389 = vcmp.gt.f32.partialorder %v1281, 0.0
      %vm1390 = vcmp.gt.f32.partialorder %v1284, 0.0
      %vm1391 = vcmp.gt.f32.partialorder %v1289, 0.0
      %vm1392 = vcmp.gt.f32.partialorder %v1292, 0.0
      %vm1393 = vcmp.gt.f32.partialorder %v1297, 0.0
      %vm1394 = vcmp.gt.f32.partialorder %v1300, 0.0
      %vm1395 = vcmp.gt.f32.partialorder %v1305, 0.0
      %vm1396 = vcmp.gt.f32.partialorder %v1308, 0.0
      %vm1397 = vcmp.gt.f32.partialorder %v1313, 0.0
      %vm1398 = vcmp.gt.f32.partialorder %v1316, 0.0
      %vm1399 = vcmp.gt.f32.partialorder %v1321, 0.0
      %vm1400 = vcmp.gt.f32.partialorder %v1324, 0.0
      %vm1401 = vcmp.gt.f32.partialorder %v1329, 0.0
      %vm1402 = vcmp.gt.f32.partialorder %v1332, 0.0
      %vm1403 = vcmp.gt.f32.partialorder %v1337, 0.0
      %vm1404 = vcmp.gt.f32.partialorder %v1340, 0.0
      %vm1405 = vcmp.gt.f32.partialorder %v1345, 0.0
      %vm1406 = vcmp.gt.f32.partialorder %v1348, 0.0
      %vm1407 = vcmp.gt.f32.partialorder %v1353, 0.0
      %vm1408 = vcmp.gt.f32.partialorder %v1356, 0.0
      %vm1409 = vcmp.gt.f32.partialorder %v1361, 0.0
      %vm1410 = vcmp.gt.f32.partialorder %v1364, 0.0
      %vm1411 = vcmp.gt.f32.partialorder %v1369, 0.0
      %vm1412 = vcmp.gt.f32.partialorder %v1372, 0.0
      %vm1413 = vcmp.gt.f32.partialorder %v1377, 0.0
      %vm1414 = vcmp.gt.f32.partialorder %v1380, 0.0
      %v1415 = vmul.f32 %v1257, 0.01
      %v1416 = vmul.f32 %v1260, 0.01
      %v1417 = vmul.f32 %v1265, 0.01
      %v1418 = vmul.f32 %v1268, 0.01
      %v1419 = vmul.f32 %v1273, 0.01
      %v1420 = vmul.f32 %v1276, 0.01
      %v1421 = vmul.f32 %v1281, 0.01
      %v1422 = vmul.f32 %v1284, 0.01
      %v1423 = vmul.f32 %v1289, 0.01
      %v1424 = vmul.f32 %v1292, 0.01
      %v1425 = vmul.f32 %v1297, 0.01
      %v1426 = vmul.f32 %v1300, 0.01
      %v1427 = vmul.f32 %v1305, 0.01
      %v1428 = vmul.f32 %v1308, 0.01
      %v1429 = vmul.f32 %v1313, 0.01
      %v1430 = vmul.f32 %v1316, 0.01
      %v1431 = vmul.f32 %v1321, 0.01
      %v1432 = vmul.f32 %v1324, 0.01
      %v1433 = vmul.f32 %v1329, 0.01
      %v1434 = vmul.f32 %v1332, 0.01
      %v1435 = vmul.f32 %v1337, 0.01
      %v1436 = vmul.f32 %v1340, 0.01
      %v1437 = vmul.f32 %v1345, 0.01
      %v1438 = vmul.f32 %v1348, 0.01
      %v1439 = vmul.f32 %v1353, 0.01
      %v1440 = vmul.f32 %v1356, 0.01
      %v1441 = vmul.f32 %v1361, 0.01
      %v1442 = vmul.f32 %v1364, 0.01
      %v1443 = vmul.f32 %v1369, 0.01
      %v1444 = vmul.f32 %v1372, 0.01
      %v1445 = vmul.f32 %v1377, 0.01
      %v1446 = vmul.f32 %v1380, 0.01
      %v1447 = vsel %vm1383, %v1257, %v1415
      %v1448 = vsel %vm1384, %v1260, %v1416
      %v1449 = vsel %vm1385, %v1265, %v1417
      %v1450 = vsel %vm1386, %v1268, %v1418
      %v1451 = vsel %vm1387, %v1273, %v1419
      %v1452 = vsel %vm1388, %v1276, %v1420
      %v1453 = vsel %vm1389, %v1281, %v1421
      %v1454 = vsel %vm1390, %v1284, %v1422
      %v1455 = vsel %vm1391, %v1289, %v1423
      %v1456 = vsel %vm1392, %v1292, %v1424
      %v1457 = vsel %vm1393, %v1297, %v1425
      %v1458 = vsel %vm1394, %v1300, %v1426
      %v1459 = vsel %vm1395, %v1305, %v1427
      %v1460 = vsel %vm1396, %v1308, %v1428
      %v1461 = vsel %vm1397, %v1313, %v1429
      %v1462 = vsel %vm1398, %v1316, %v1430
      %v1463 = vsel %vm1399, %v1321, %v1431
      %v1464 = vsel %vm1400, %v1324, %v1432
      %v1465 = vsel %vm1401, %v1329, %v1433
      %v1466 = vsel %vm1402, %v1332, %v1434
      %v1467 = vsel %vm1403, %v1337, %v1435
      %v1468 = vsel %vm1404, %v1340, %v1436
      %v1469 = vsel %vm1405, %v1345, %v1437
      %v1470 = vsel %vm1406, %v1348, %v1438
      %v1471 = vsel %vm1407, %v1353, %v1439
      %v1472 = vsel %vm1408, %v1356, %v1440
      %v1473 = vsel %vm1409, %v1361, %v1441
      %v1474 = vsel %vm1410, %v1364, %v1442
      %v1475 = vsel %vm1411, %v1369, %v1443
      %v1476 = vsel %vm1412, %v1372, %v1444
      %v1477 = vsel %vm1413, %v1377, %v1445
      %v1478 = vsel %vm1414, %v1380, %v1446
      %v1479 = vpack.c.bf16 %v1448, %v1447
      %v1480 = vpack.c.bf16 %v1450, %v1449
      %v1481 = vpack.c.bf16 %v1452, %v1451
      %v1482 = vpack.c.bf16 %v1454, %v1453
      %v1483 = vpack.c.bf16 %v1456, %v1455
      %v1484 = vpack.c.bf16 %v1458, %v1457
      %v1485 = vpack.c.bf16 %v1460, %v1459
      %v1486 = vpack.c.bf16 %v1462, %v1461
      %v1487 = vpack.c.bf16 %v1464, %v1463
      %v1488 = vpack.c.bf16 %v1466, %v1465
      %v1489 = vpack.c.bf16 %v1468, %v1467
      %v1490 = vpack.c.bf16 %v1470, %v1469
      %v1491 = vpack.c.bf16 %v1472, %v1471
      %v1492 = vpack.c.bf16 %v1474, %v1473
      %v1493 = vpack.c.bf16 %v1476, %v1475
      %v1494 = vpack.c.bf16 %v1478, %v1477
      %v1495 = vld [vmem:[%s4] sm:$0xf]
      %v1496 = vld [vmem:[%s4 + $0x4] sm:$0xf]
      %v1497 = vld [vmem:[%s4 + $0x8] sm:$0xf]
      %v1498 = vld [vmem:[%s4 + $0xc] sm:$0xf]
      %v1499 = vld [vmem:[%s4 + $0x10] sm:$0xf]
      %v1500 = vld [vmem:[%s4 + $0x14] sm:$0xf]
      %v1501 = vld [vmem:[%s4 + $0x18] sm:$0xf]
      %v1502 = vld [vmem:[%s4 + $0x1c] sm:$0xf]
      %v1503 = vld [vmem:[%s4 + $0x20] sm:$0xf]
      %v1504 = vld [vmem:[%s4 + $0x24] sm:$0xf]
      %v1505 = vld [vmem:[%s4 + $0x28] sm:$0xf]
      %v1506 = vld [vmem:[%s4 + $0x2c] sm:$0xf]
      %v1507 = vld [vmem:[%s4 + $0x30] sm:$0xf]
      %v1508 = vld [vmem:[%s4 + $0x34] sm:$0xf]
      %v1509 = vld [vmem:[%s4 + $0x38] sm:$0xf]
      %v1510 = vld [vmem:[%s4 + $0x3c] sm:$0xf]
      %v1511 = vlaneseq
      %v1512 = vshrl.u32 %v1511, 7
      %v1513 = vsub.s32 3, %v1512
      %v1514 = vrot.slane %v286, %v1513
      %v1531 = vunpack.c.l.b16 %v1495
      %v1532 = vunpack.c.l.b16 %v1496
      %v1533 = vunpack.c.l.b16 %v1497
      %v1534 = vunpack.c.l.b16 %v1498
      %v1535 = vunpack.c.l.b16 %v1499
      %v1536 = vunpack.c.l.b16 %v1500
      %v1537 = vunpack.c.l.b16 %v1501
      %v1538 = vunpack.c.l.b16 %v1502
      %v1539 = vunpack.c.l.b16 %v1503
      %v1540 = vunpack.c.l.b16 %v1504
      %v1541 = vunpack.c.l.b16 %v1505
      %v1542 = vunpack.c.l.b16 %v1506
      %v1543 = vunpack.c.l.b16 %v1507
      %v1544 = vunpack.c.l.b16 %v1508
      %v1545 = vunpack.c.l.b16 %v1509
      %v1546 = vunpack.c.l.b16 %v1510
      %v1547 = vpack.c.b16 %v1532, %v1531
      %v1548 = vpack.c.b16 %v1534, %v1533
      %v1549 = vpack.c.b16 %v1536, %v1535
      %v1550 = vpack.c.b16 %v1538, %v1537
      %v1551 = vpack.c.b16 %v1540, %v1539
      %v1552 = vpack.c.b16 %v1542, %v1541
      %v1553 = vpack.c.b16 %v1544, %v1543
      %v1554 = vpack.c.b16 %v1546, %v1545
      %1563 = vmatprep.subr.bf16.mxu0 0
      %1564 = vmatpush1.bf16.msra.mxu0 %v1547
      %1565 = vmatprep.subr.bf16.mxu0 0
      %1566 = vmatpush1.bf16.msra.mxu0 %v1548
      %1567 = vmatprep.subr.bf16.mxu0 0
      %1568 = vmatpush1.bf16.msra.mxu0 %v1549
      %1569 = vmatprep.subr.bf16.mxu0 0
      %1570 = vmatpush1.bf16.msra.mxu0 %v1550
      %1571 = vmatprep.subr.bf16.mxu0 0
      %1572 = vmatpush1.bf16.msra.mxu0 %v1551
      %1573 = vmatprep.subr.bf16.mxu0 0
      %1574 = vmatpush1.bf16.msra.mxu0 %v1552
      %1575 = vmatprep.subr.bf16.mxu0 0
      %1576 = vmatpush1.bf16.msra.mxu0 %v1553
      %1577 = vmatprep.subr.bf16.mxu0 0
      %1578 = vmatpush1.bf16.msra.mxu0 %v1554
      %1579 = vmatprep.subr.bf16.mxu0 0
      %1580 = vmatpush1.bf16.msra.mxu0 0
      %1581 = vmatprep.subr.bf16.mxu0 0
      %1582 = vmatpush1.bf16.msra.mxu0 0
      %1583 = vmatprep.subr.bf16.mxu0 0
      %1584 = vmatpush1.bf16.msra.mxu0 0
      %1585 = vmatprep.subr.bf16.mxu0 0
      %1586 = vmatpush1.bf16.msra.mxu0 0
      %1587 = vmatprep.subr.bf16.mxu0 0
      %1588 = vmatpush1.bf16.msra.mxu0 0
      %1589 = vmatprep.subr.bf16.mxu0 0
      %1590 = vmatpush1.bf16.msra.mxu0 0
      %1591 = vmatprep.subr.bf16.mxu0 0
      %1592 = vmatpush1.bf16.msra.mxu0 0
      %1593 = vmatprep.subr.bf16.mxu0 0
      %1594 = vmatpush1.bf16.msra.mxu0 0
      %1595 = vmatprep.mubr.bf16.mxu0 0
      %1596 = vmatmul.mubr.bf16.gmra.mrb[0].mxu0 %v1479
      %v1597 = vpop.f32.mrb[0].mxu0
      %v1598 = vadd.f32 %v1514, %v1597
      %v1599 = vpop.f32.mrb[0].mxu0
      %v1600 = vpop.f32.mrb[0].mxu0
      %v1601 = vadd.f32 %v1514, %v1600
      %v1602 = vpop.f32.mrb[0].mxu0
      %1603 = vmatprep.mubr.bf16.mxu0 0
      %1604 = vmatmul.mubr.bf16.gmra.mrb[0].mxu0 %v1480
      %v1605 = vpop.f32.mrb[0].mxu0
      %v1606 = vadd.f32 %v1514, %v1605
      %v1607 = vpop.f32.mrb[0].mxu0
      %v1608 = vpop.f32.mrb[0].mxu0
      %v1609 = vadd.f32 %v1514, %v1608
      %v1610 = vpop.f32.mrb[0].mxu0
      %1611 = vmatprep.mubr.bf16.mxu0 0
      %1612 = vmatmul.mubr.bf16.gmra.mrb[0].mxu0 %v1481
      %v1613 = vpop.f32.mrb[0].mxu0
      %v1614 = vadd.f32 %v1514, %v1613
      %v1615 = vpop.f32.mrb[0].mxu0
      %v1616 = vpop.f32.mrb[0].mxu0
      %v1617 = vadd.f32 %v1514, %v1616
      %v1618 = vpop.f32.mrb[0].mxu0
      %1619 = vmatprep.mubr.bf16.mxu0 0
      %1620 = vmatmul.mubr.bf16.gmra.mrb[0].mxu0 %v1482
      %v1621 = vpop.f32.mrb[0].mxu0
      %v1622 = vadd.f32 %v1514, %v1621
      %v1623 = vpop.f32.mrb[0].mxu0
      %v1624 = vpop.f32.mrb[0].mxu0
      %v1625 = vadd.f32 %v1514, %v1624
      %v1626 = vpop.f32.mrb[0].mxu0
      %1627 = vmatprep.mubr.bf16.mxu0 0
      %1628 = vmatmul.mubr.bf16.gmra.mrb[0].mxu0 %v1483
      %v1629 = vpop.f32.mrb[0].mxu0
      %v1630 = vadd.f32 %v1514, %v1629
      %v1631 = vpop.f32.mrb[0].mxu0
      %v1632 = vpop.f32.mrb[0].mxu0
      %v1633 = vadd.f32 %v1514, %v1632
      %v1634 = vpop.f32.mrb[0].mxu0
      %1635 = vmatprep.mubr.bf16.mxu0 0
      %1636 = vmatmul.mubr.bf16.gmra.mrb[0].mxu0 %v1484
      %v1637 = vpop.f32.mrb[0].mxu0
      %v1638 = vadd.f32 %v1514, %v1637
      %v1639 = vpop.f32.mrb[0].mxu0
      %v1640 = vpop.f32.mrb[0].mxu0
      %v1641 = vadd.f32 %v1514, %v1640
      %v1642 = vpop.f32.mrb[0].mxu0
      %1643 = vmatprep.mubr.bf16.mxu0 0
      %1644 = vmatmul.mubr.bf16.gmra.mrb[0].mxu0 %v1485
      %v1645 = vpop.f32.mrb[0].mxu0
      %v1646 = vadd.f32 %v1514, %v1645
      %v1647 = vpop.f32.mrb[0].mxu0
      %v1648 = vpop.f32.mrb[0].mxu0
      %v1649 = vadd.f32 %v1514, %v1648
      %v1650 = vpop.f32.mrb[0].mxu0
      %1651 = vmatprep.mubr.bf16.mxu0 0
      %1652 = vmatmul.mubr.bf16.gmra.mrb[0].mxu0 %v1486
      %v1653 = vpop.f32.mrb[0].mxu0
      %v1654 = vadd.f32 %v1514, %v1653
      %v1655 = vpop.f32.mrb[0].mxu0
      %v1656 = vpop.f32.mrb[0].mxu0
      %v1657 = vadd.f32 %v1514, %v1656
      %v1658 = vpop.f32.mrb[0].mxu0
      %1659 = vmatprep.mubr.bf16.mxu0 0
      %1660 = vmatmul.mubr.bf16.gmra.mrb[0].mxu0 %v1487
      %v1661 = vpop.f32.mrb[0].mxu0
      %v1662 = vadd.f32 %v1514, %v1661
      %v1663 = vpop.f32.mrb[0].mxu0
      %v1664 = vpop.f32.mrb[0].mxu0
      %v1665 = vadd.f32 %v1514, %v1664
      %v1666 = vpop.f32.mrb[0].mxu0
      %1667 = vmatprep.mubr.bf16.mxu0 0
      %1668 = vmatmul.mubr.bf16.gmra.mrb[0].mxu0 %v1488
      %v1669 = vpop.f32.mrb[0].mxu0
      %v1670 = vadd.f32 %v1514, %v1669
      %v1671 = vpop.f32.mrb[0].mxu0
      %v1672 = vpop.f32.mrb[0].mxu0
      %v1673 = vadd.f32 %v1514, %v1672
      %v1674 = vpop.f32.mrb[0].mxu0
      %1675 = vmatprep.mubr.bf16.mxu0 0
      %1676 = vmatmul.mubr.bf16.gmra.mrb[0].mxu0 %v1489
      %v1677 = vpop.f32.mrb[0].mxu0
      %v1678 = vadd.f32 %v1514, %v1677
      %v1679 = vpop.f32.mrb[0].mxu0
      %v1680 = vpop.f32.mrb[0].mxu0
      %v1681 = vadd.f32 %v1514, %v1680
      %v1682 = vpop.f32.mrb[0].mxu0
      %1683 = vmatprep.mubr.bf16.mxu0 0
      %1684 = vmatmul.mubr.bf16.gmra.mrb[0].mxu0 %v1490
      %v1685 = vpop.f32.mrb[0].mxu0
      %v1686 = vadd.f32 %v1514, %v1685
      %v1687 = vpop.f32.mrb[0].mxu0
      %v1688 = vpop.f32.mrb[0].mxu0
      %v1689 = vadd.f32 %v1514, %v1688
      %v1690 = vpop.f32.mrb[0].mxu0
      %1691 = vmatprep.mubr.bf16.mxu0 0
      %1692 = vmatmul.mubr.bf16.gmra.mrb[0].mxu0 %v1491
      %v1693 = vpop.f32.mrb[0].mxu0
      %v1694 = vadd.f32 %v1514, %v1693
      %v1695 = vpop.f32.mrb[0].mxu0
      %v1696 = vpop.f32.mrb[0].mxu0
      %v1697 = vadd.f32 %v1514, %v1696
      %v1698 = vpop.f32.mrb[0].mxu0
      %1699 = vmatprep.mubr.bf16.mxu0 0
      %1700 = vmatmul.mubr.bf16.gmra.mrb[0].mxu0 %v1492
      %v1701 = vpop.f32.mrb[0].mxu0
      %v1702 = vadd.f32 %v1514, %v1701
      %v1703 = vpop.f32.mrb[0].mxu0
      %v1704 = vpop.f32.mrb[0].mxu0
      %v1705 = vadd.f32 %v1514, %v1704
      %v1706 = vpop.f32.mrb[0].mxu0
      %1707 = vmatprep.mubr.bf16.mxu0 0
      %1708 = vmatmul.mubr.bf16.gmra.mrb[0].mxu0 %v1493
      %v1709 = vpop.f32.mrb[0].mxu0
      %v1710 = vadd.f32 %v1514, %v1709
      %v1711 = vpop.f32.mrb[0].mxu0
      %v1712 = vpop.f32.mrb[0].mxu0
      %v1713 = vadd.f32 %v1514, %v1712
      %v1714 = vpop.f32.mrb[0].mxu0
      %1715 = vmatprep.mubr.bf16.mxu0 0
      %1716 = vmatmul.mubr.bf16.gmra.mrb[0].mxu0 %v1494
      %v1717 = vpop.f32.mrb[0].mxu0
      %v1718 = vadd.f32 %v1514, %v1717
      %v1719 = vpop.f32.mrb[0].mxu0
      %v1720 = vpop.f32.mrb[0].mxu0
      %v1721 = vadd.f32 %v1514, %v1720
      %v1722 = vpop.f32.mrb[0].mxu0
      %1723 = vdwg.mxu0
      %vm1724 = vcmp.gt.f32.partialorder %v1598, 0.0
      %vm1725 = vcmp.gt.f32.partialorder %v1601, 0.0
      %vm1726 = vcmp.gt.f32.partialorder %v1606, 0.0
      %vm1727 = vcmp.gt.f32.partialorder %v1609, 0.0
      %vm1728 = vcmp.gt.f32.partialorder %v1614, 0.0
      %vm1729 = vcmp.gt.f32.partialorder %v1617, 0.0
      %vm1730 = vcmp.gt.f32.partialorder %v1622, 0.0
      %vm1731 = vcmp.gt.f32.partialorder %v1625, 0.0
      %vm1732 = vcmp.gt.f32.partialorder %v1630, 0.0
      %vm1733 = vcmp.gt.f32.partialorder %v1633, 0.0
      %vm1734 = vcmp.gt.f32.partialorder %v1638, 0.0
      %vm1735 = vcmp.gt.f32.partialorder %v1641, 0.0
      %vm1736 = vcmp.gt.f32.partialorder %v1646, 0.0
      %vm1737 = vcmp.gt.f32.partialorder %v1649, 0.0
      %vm1738 = vcmp.gt.f32.partialorder %v1654, 0.0
      %vm1739 = vcmp.gt.f32.partialorder %v1657, 0.0
      %vm1740 = vcmp.gt.f32.partialorder %v1662, 0.0
      %vm1741 = vcmp.gt.f32.partialorder %v1665, 0.0
      %vm1742 = vcmp.gt.f32.partialorder %v1670, 0.0
      %vm1743 = vcmp.gt.f32.partialorder %v1673, 0.0
      %vm1744 = vcmp.gt.f32.partialorder %v1678, 0.0
      %vm1745 = vcmp.gt.f32.partialorder %v1681, 0.0
      %vm1746 = vcmp.gt.f32.partialorder %v1686, 0.0
      %vm1747 = vcmp.gt.f32.partialorder %v1689, 0.0
      %vm1748 = vcmp.gt.f32.partialorder %v1694, 0.0
      %vm1749 = vcmp.gt.f32.partialorder %v1697, 0.0
      %vm1750 = vcmp.gt.f32.partialorder %v1702, 0.0
      %vm1751 = vcmp.gt.f32.partialorder %v1705, 0.0
      %vm1752 = vcmp.gt.f32.partialorder %v1710, 0.0
      %vm1753 = vcmp.gt.f32.partialorder %v1713, 0.0
      %vm1754 = vcmp.gt.f32.partialorder %v1718, 0.0
      %vm1755 = vcmp.gt.f32.partialorder %v1721, 0.0
      %v1756 = vmul.f32 %v1598, 0.01
      %v1757 = vmul.f32 %v1601, 0.01
      %v1758 = vmul.f32 %v1606, 0.01
      %v1759 = vmul.f32 %v1609, 0.01
      %v1760 = vmul.f32 %v1614, 0.01
      %v1761 = vmul.f32 %v1617, 0.01
      %v1762 = vmul.f32 %v1622, 0.01
      %v1763 = vmul.f32 %v1625, 0.01
      %v1764 = vmul.f32 %v1630, 0.01
      %v1765 = vmul.f32 %v1633, 0.01
      %v1766 = vmul.f32 %v1638, 0.01
      %v1767 = vmul.f32 %v1641, 0.01
      %v1768 = vmul.f32 %v1646, 0.01
      %v1769 = vmul.f32 %v1649, 0.01
      %v1770 = vmul.f32 %v1654, 0.01
      %v1771 = vmul.f32 %v1657, 0.01
      %v1772 = vmul.f32 %v1662, 0.01
      %v1773 = vmul.f32 %v1665, 0.01
      %v1774 = vmul.f32 %v1670, 0.01
      %v1775 = vmul.f32 %v1673, 0.01
      %v1776 = vmul.f32 %v1678, 0.01
      %v1777 = vmul.f32 %v1681, 0.01
      %v1778 = vmul.f32 %v1686, 0.01
      %v1779 = vmul.f32 %v1689, 0.01
      %v1780 = vmul.f32 %v1694, 0.01
      %v1781 = vmul.f32 %v1697, 0.01
      %v1782 = vmul.f32 %v1702, 0.01
      %v1783 = vmul.f32 %v1705, 0.01
      %v1784 = vmul.f32 %v1710, 0.01
      %v1785 = vmul.f32 %v1713, 0.01
      %v1786 = vmul.f32 %v1718, 0.01
      %v1787 = vmul.f32 %v1721, 0.01
      %v1788 = vsel %vm1724, %v1598, %v1756
      %v1789 = vsel %vm1725, %v1601, %v1757
      %v1790 = vsel %vm1726, %v1606, %v1758
      %v1791 = vsel %vm1727, %v1609, %v1759
      %v1792 = vsel %vm1728, %v1614, %v1760
      %v1793 = vsel %vm1729, %v1617, %v1761
      %v1794 = vsel %vm1730, %v1622, %v1762
      %v1795 = vsel %vm1731, %v1625, %v1763
      %v1796 = vsel %vm1732, %v1630, %v1764
      %v1797 = vsel %vm1733, %v1633, %v1765
      %v1798 = vsel %vm1734, %v1638, %v1766
      %v1799 = vsel %vm1735, %v1641, %v1767
      %v1800 = vsel %vm1736, %v1646, %v1768
      %v1801 = vsel %vm1737, %v1649, %v1769
      %v1802 = vsel %vm1738, %v1654, %v1770
      %v1803 = vsel %vm1739, %v1657, %v1771
      %v1804 = vsel %vm1740, %v1662, %v1772
      %v1805 = vsel %vm1741, %v1665, %v1773
      %v1806 = vsel %vm1742, %v1670, %v1774
      %v1807 = vsel %vm1743, %v1673, %v1775
      %v1808 = vsel %vm1744, %v1678, %v1776
      %v1809 = vsel %vm1745, %v1681, %v1777
      %v1810 = vsel %vm1746, %v1686, %v1778
      %v1811 = vsel %vm1747, %v1689, %v1779
      %v1812 = vsel %vm1748, %v1694, %v1780
      %v1813 = vsel %vm1749, %v1697, %v1781
      %v1814 = vsel %vm1750, %v1702, %v1782
      %v1815 = vsel %vm1751, %v1705, %v1783
      %v1816 = vsel %vm1752, %v1710, %v1784
      %v1817 = vsel %vm1753, %v1713, %v1785
      %v1818 = vsel %vm1754, %v1718, %v1786
      %v1819 = vsel %vm1755, %v1721, %v1787
      %v1820 = vpack.c.bf16 %v1789, %v1788
      %v1821 = vpack.c.bf16 %v1791, %v1790
      %v1822 = vpack.c.bf16 %v1793, %v1792
      %v1823 = vpack.c.bf16 %v1795, %v1794
      %v1824 = vpack.c.bf16 %v1797, %v1796
      %v1825 = vpack.c.bf16 %v1799, %v1798
      %v1826 = vpack.c.bf16 %v1801, %v1800
      %v1827 = vpack.c.bf16 %v1803, %v1802
      %v1828 = vpack.c.bf16 %v1805, %v1804
      %v1829 = vpack.c.bf16 %v1807, %v1806
      %v1830 = vpack.c.bf16 %v1809, %v1808
      %v1831 = vpack.c.bf16 %v1811, %v1810
      %v1832 = vpack.c.bf16 %v1813, %v1812
      %v1833 = vpack.c.bf16 %v1815, %v1814
      %v1834 = vpack.c.bf16 %v1817, %v1816
      %v1835 = vpack.c.bf16 %v1819, %v1818
      %v1836 = vld [vmem:[%s5] sm:$0xf]
      %v1837 = vld [vmem:[%s5 + $0x4] sm:$0xf]
      %v1838 = vld [vmem:[%s5 + $0x8] sm:$0xf]
      %v1839 = vld [vmem:[%s5 + $0xc] sm:$0xf]
      %v1840 = vld [vmem:[%s5 + $0x10] sm:$0xf]
      %v1841 = vld [vmem:[%s5 + $0x14] sm:$0xf]
      %v1842 = vld [vmem:[%s5 + $0x18] sm:$0xf]
      %v1843 = vld [vmem:[%s5 + $0x1c] sm:$0xf]
      %v1844 = vld [vmem:[%s5 + $0x20] sm:$0xf]
      %v1845 = vld [vmem:[%s5 + $0x24] sm:$0xf]
      %v1846 = vld [vmem:[%s5 + $0x28] sm:$0xf]
      %v1847 = vld [vmem:[%s5 + $0x2c] sm:$0xf]
      %v1848 = vld [vmem:[%s5 + $0x30] sm:$0xf]
      %v1849 = vld [vmem:[%s5 + $0x34] sm:$0xf]
      %v1850 = vld [vmem:[%s5 + $0x38] sm:$0xf]
      %v1851 = vld [vmem:[%s5 + $0x3c] sm:$0xf]
      %v1852 = vlaneseq
      %v1853 = vshrl.u32 %v1852, 7
      %v1854 = vsub.s32 4, %v1853
      %v1855 = vrot.slane %v286, %v1854
      %v1872 = vunpack.c.l.b16 %v1836
      %v1873 = vunpack.c.l.b16 %v1837
      %v1874 = vunpack.c.l.b16 %v1838
      %v1875 = vunpack.c.l.b16 %v1839
      %v1876 = vunpack.c.l.b16 %v1840
      %v1877 = vunpack.c.l.b16 %v1841
      %v1878 = vunpack.c.l.b16 %v1842
      %v1879 = vunpack.c.l.b16 %v1843
      %v1880 = vunpack.c.l.b16 %v1844
      %v1881 = vunpack.c.l.b16 %v1845
      %v1882 = vunpack.c.l.b16 %v1846
      %v1883 = vunpack.c.l.b16 %v1847
      %v1884 = vunpack.c.l.b16 %v1848
      %v1885 = vunpack.c.l.b16 %v1849
      %v1886 = vunpack.c.l.b16 %v1850
      %v1887 = vunpack.c.l.b16 %v1851
      %v1888 = vpack.c.b16 %v1873, %v1872
      %v1889 = vpack.c.b16 %v1875, %v1874
      %v1890 = vpack.c.b16 %v1877, %v1876
      %v1891 = vpack.c.b16 %v1879, %v1878
      %v1892 = vpack.c.b16 %v1881, %v1880
      %v1893 = vpack.c.b16 %v1883, %v1882
      %v1894 = vpack.c.b16 %v1885, %v1884
      %v1895 = vpack.c.b16 %v1887, %v1886
      %1904 = vmatprep.subr.bf16.mxu0 0
      %1905 = vmatpush1.bf16.msra.mxu0 %v1888
      %1906 = vmatprep.subr.bf16.mxu0 0
      %1907 = vmatpush1.bf16.msra.mxu0 %v1889
      %1908 = vmatprep.subr.bf16.mxu0 0
      %1909 = vmatpush1.bf16.msra.mxu0 %v1890
      %1910 = vmatprep.subr.bf16.mxu0 0
      %1911 = vmatpush1.bf16.msra.mxu0 %v1891
      %1912 = vmatprep.subr.bf16.mxu0 0
      %1913 = vmatpush1.bf16.msra.mxu0 %v1892
      %1914 = vmatprep.subr.bf16.mxu0 0
      %1915 = vmatpush1.bf16.msra.mxu0 %v1893
      %1916 = vmatprep.subr.bf16.mxu0 0
      %1917 = vmatpush1.bf16.msra.mxu0 %v1894
      %1918 = vmatprep.subr.bf16.mxu0 0
      %1919 = vmatpush1.bf16.msra.mxu0 %v1895
      %1920 = vmatprep.subr.bf16.mxu0 0
      %1921 = vmatpush1.bf16.msra.mxu0 0
      %1922 = vmatprep.subr.bf16.mxu0 0
      %1923 = vmatpush1.bf16.msra.mxu0 0
      %1924 = vmatprep.subr.bf16.mxu0 0
      %1925 = vmatpush1.bf16.msra.mxu0 0
      %1926 = vmatprep.subr.bf16.mxu0 0
      %1927 = vmatpush1.bf16.msra.mxu0 0
      %1928 = vmatprep.subr.bf16.mxu0 0
      %1929 = vmatpush1.bf16.msra.mxu0 0
      %1930 = vmatprep.subr.bf16.mxu0 0
      %1931 = vmatpush1.bf16.msra.mxu0 0
      %1932 = vmatprep.subr.bf16.mxu0 0
      %1933 = vmatpush1.bf16.msra.mxu0 0
      %1934 = vmatprep.subr.bf16.mxu0 0
      %1935 = vmatpush1.bf16.msra.mxu0 0
      %1936 = vmatprep.mubr.bf16.mxu0 0
      %1937 = vmatmul.mubr.bf16.gmra.mrb[0].mxu0 %v1820
      %v1938 = vpop.f32.mrb[0].mxu0
      %v1939 = vadd.f32 %v1855, %v1938
      %v1940 = vpop.f32.mrb[0].mxu0
      %v1941 = vpop.f32.mrb[0].mxu0
      %v1942 = vadd.f32 %v1855, %v1941
      %v1943 = vpop.f32.mrb[0].mxu0
      %1944 = vmatprep.mubr.bf16.mxu0 0
      %1945 = vmatmul.mubr.bf16.gmra.mrb[0].mxu0 %v1821
      %v1946 = vpop.f32.mrb[0].mxu0
      %v1947 = vadd.f32 %v1855, %v1946
      %v1948 = vpop.f32.mrb[0].mxu0
      %v1949 = vpop.f32.mrb[0].mxu0
      %v1950 = vadd.f32 %v1855, %v1949
      %v1951 = vpop.f32.mrb[0].mxu0
      %1952 = vmatprep.mubr.bf16.mxu0 0
      %1953 = vmatmul.mubr.bf16.gmra.mrb[0].mxu0 %v1822
      %v1954 = vpop.f32.mrb[0].mxu0
      %v1955 = vadd.f32 %v1855, %v1954
      %v1956 = vpop.f32.mrb[0].mxu0
      %v1957 = vpop.f32.mrb[0].mxu0
      %v1958 = vadd.f32 %v1855, %v1957
      %v1959 = vpop.f32.mrb[0].mxu0
      %1960 = vmatprep.mubr.bf16.mxu0 0
      %1961 = vmatmul.mubr.bf16.gmra.mrb[0].mxu0 %v1823
      %v1962 = vpop.f32.mrb[0].mxu0
      %v1963 = vadd.f32 %v1855, %v1962
      %v1964 = vpop.f32.mrb[0].mxu0
      %v1965 = vpop.f32.mrb[0].mxu0
      %v1966 = vadd.f32 %v1855, %v1965
      %v1967 = vpop.f32.mrb[0].mxu0
      %1968 = vmatprep.mubr.bf16.mxu0 0
      %1969 = vmatmul.mubr.bf16.gmra.mrb[0].mxu0 %v1824
      %v1970 = vpop.f32.mrb[0].mxu0
      %v1971 = vadd.f32 %v1855, %v1970
      %v1972 = vpop.f32.mrb[0].mxu0
      %v1973 = vpop.f32.mrb[0].mxu0
      %v1974 = vadd.f32 %v1855, %v1973
      %v1975 = vpop.f32.mrb[0].mxu0
      %1976 = vmatprep.mubr.bf16.mxu0 0
      %1977 = vmatmul.mubr.bf16.gmra.mrb[0].mxu0 %v1825
      %v1978 = vpop.f32.mrb[0].mxu0
      %v1979 = vadd.f32 %v1855, %v1978
      %v1980 = vpop.f32.mrb[0].mxu0
      %v1981 = vpop.f32.mrb[0].mxu0
      %v1982 = vadd.f32 %v1855, %v1981
      %v1983 = vpop.f32.mrb[0].mxu0
      %1984 = vmatprep.mubr.bf16.mxu0 0
      %1985 = vmatmul.mubr.bf16.gmra.mrb[0].mxu0 %v1826
      %v1986 = vpop.f32.mrb[0].mxu0
      %v1987 = vadd.f32 %v1855, %v1986
      %v1988 = vpop.f32.mrb[0].mxu0
      %v1989 = vpop.f32.mrb[0].mxu0
      %v1990 = vadd.f32 %v1855, %v1989
      %v1991 = vpop.f32.mrb[0].mxu0
      %1992 = vmatprep.mubr.bf16.mxu0 0
      %1993 = vmatmul.mubr.bf16.gmra.mrb[0].mxu0 %v1827
      %v1994 = vpop.f32.mrb[0].mxu0
      %v1995 = vadd.f32 %v1855, %v1994
      %v1996 = vpop.f32.mrb[0].mxu0
      %v1997 = vpop.f32.mrb[0].mxu0
      %v1998 = vadd.f32 %v1855, %v1997
      %v1999 = vpop.f32.mrb[0].mxu0
      %2000 = vmatprep.mubr.bf16.mxu0 0
      %2001 = vmatmul.mubr.bf16.gmra.mrb[0].mxu0 %v1828
      %v2002 = vpop.f32.mrb[0].mxu0
      %v2003 = vadd.f32 %v1855, %v2002
      %v2004 = vpop.f32.mrb[0].mxu0
      %v2005 = vpop.f32.mrb[0].mxu0
      %v2006 = vadd.f32 %v1855, %v2005
      %v2007 = vpop.f32.mrb[0].mxu0
      %2008 = vmatprep.mubr.bf16.mxu0 0
      %2009 = vmatmul.mubr.bf16.gmra.mrb[0].mxu0 %v1829
      %v2010 = vpop.f32.mrb[0].mxu0
      %v2011 = vadd.f32 %v1855, %v2010
      %v2012 = vpop.f32.mrb[0].mxu0
      %v2013 = vpop.f32.mrb[0].mxu0
      %v2014 = vadd.f32 %v1855, %v2013
      %v2015 = vpop.f32.mrb[0].mxu0
      %2016 = vmatprep.mubr.bf16.mxu0 0
      %2017 = vmatmul.mubr.bf16.gmra.mrb[0].mxu0 %v1830
      %v2018 = vpop.f32.mrb[0].mxu0
      %v2019 = vadd.f32 %v1855, %v2018
      %v2020 = vpop.f32.mrb[0].mxu0
      %v2021 = vpop.f32.mrb[0].mxu0
      %v2022 = vadd.f32 %v1855, %v2021
      %v2023 = vpop.f32.mrb[0].mxu0
      %2024 = vmatprep.mubr.bf16.mxu0 0
      %2025 = vmatmul.mubr.bf16.gmra.mrb[0].mxu0 %v1831
      %v2026 = vpop.f32.mrb[0].mxu0
      %v2027 = vadd.f32 %v1855, %v2026
      %v2028 = vpop.f32.mrb[0].mxu0
      %v2029 = vpop.f32.mrb[0].mxu0
      %v2030 = vadd.f32 %v1855, %v2029
      %v2031 = vpop.f32.mrb[0].mxu0
      %2032 = vmatprep.mubr.bf16.mxu0 0
      %2033 = vmatmul.mubr.bf16.gmra.mrb[0].mxu0 %v1832
      %v2034 = vpop.f32.mrb[0].mxu0
      %v2035 = vadd.f32 %v1855, %v2034
      %v2036 = vpop.f32.mrb[0].mxu0
      %v2037 = vpop.f32.mrb[0].mxu0
      %v2038 = vadd.f32 %v1855, %v2037
      %v2039 = vpop.f32.mrb[0].mxu0
      %2040 = vmatprep.mubr.bf16.mxu0 0
      %2041 = vmatmul.mubr.bf16.gmra.mrb[0].mxu0 %v1833
      %v2042 = vpop.f32.mrb[0].mxu0
      %v2043 = vadd.f32 %v1855, %v2042
      %v2044 = vpop.f32.mrb[0].mxu0
      %v2045 = vpop.f32.mrb[0].mxu0
      %v2046 = vadd.f32 %v1855, %v2045
      %v2047 = vpop.f32.mrb[0].mxu0
      %2048 = vmatprep.mubr.bf16.mxu0 0
      %2049 = vmatmul.mubr.bf16.gmra.mrb[0].mxu0 %v1834
      %v2050 = vpop.f32.mrb[0].mxu0
      %v2051 = vadd.f32 %v1855, %v2050
      %v2052 = vpop.f32.mrb[0].mxu0
      %v2053 = vpop.f32.mrb[0].mxu0
      %v2054 = vadd.f32 %v1855, %v2053
      %v2055 = vpop.f32.mrb[0].mxu0
      %2056 = vmatprep.mubr.bf16.mxu0 0
      %2057 = vmatmul.mubr.bf16.gmra.mrb[0].mxu0 %v1835
      %v2058 = vpop.f32.mrb[0].mxu0
      %v2059 = vadd.f32 %v1855, %v2058
      %v2060 = vpop.f32.mrb[0].mxu0
      %v2061 = vpop.f32.mrb[0].mxu0
      %v2062 = vadd.f32 %v1855, %v2061
      %v2063 = vpop.f32.mrb[0].mxu0
      %2064 = vdwg.mxu0
      %vm2065 = vcmp.gt.f32.partialorder %v1939, 0.0
      %vm2066 = vcmp.gt.f32.partialorder %v1942, 0.0
      %vm2067 = vcmp.gt.f32.partialorder %v1947, 0.0
      %vm2068 = vcmp.gt.f32.partialorder %v1950, 0.0
      %vm2069 = vcmp.gt.f32.partialorder %v1955, 0.0
      %vm2070 = vcmp.gt.f32.partialorder %v1958, 0.0
      %vm2071 = vcmp.gt.f32.partialorder %v1963, 0.0
      %vm2072 = vcmp.gt.f32.partialorder %v1966, 0.0
      %vm2073 = vcmp.gt.f32.partialorder %v1971, 0.0
      %vm2074 = vcmp.gt.f32.partialorder %v1974, 0.0
      %vm2075 = vcmp.gt.f32.partialorder %v1979, 0.0
      %vm2076 = vcmp.gt.f32.partialorder %v1982, 0.0
      %vm2077 = vcmp.gt.f32.partialorder %v1987, 0.0
      %vm2078 = vcmp.gt.f32.partialorder %v1990, 0.0
      %vm2079 = vcmp.gt.f32.partialorder %v1995, 0.0
      %vm2080 = vcmp.gt.f32.partialorder %v1998, 0.0
      %vm2081 = vcmp.gt.f32.partialorder %v2003, 0.0
      %vm2082 = vcmp.gt.f32.partialorder %v2006, 0.0
      %vm2083 = vcmp.gt.f32.partialorder %v2011, 0.0
      %vm2084 = vcmp.gt.f32.partialorder %v2014, 0.0
      %vm2085 = vcmp.gt.f32.partialorder %v2019, 0.0
      %vm2086 = vcmp.gt.f32.partialorder %v2022, 0.0
      %vm2087 = vcmp.gt.f32.partialorder %v2027, 0.0
      %vm2088 = vcmp.gt.f32.partialorder %v2030, 0.0
      %vm2089 = vcmp.gt.f32.partialorder %v2035, 0.0
      %vm2090 = vcmp.gt.f32.partialorder %v2038, 0.0
      %vm2091 = vcmp.gt.f32.partialorder %v2043, 0.0
      %vm2092 = vcmp.gt.f32.partialorder %v2046, 0.0
      %vm2093 = vcmp.gt.f32.partialorder %v2051, 0.0
      %vm2094 = vcmp.gt.f32.partialorder %v2054, 0.0
      %vm2095 = vcmp.gt.f32.partialorder %v2059, 0.0
      %vm2096 = vcmp.gt.f32.partialorder %v2062, 0.0
      %v2097 = vmul.f32 %v1939, 0.01
      %v2098 = vmul.f32 %v1942, 0.01
      %v2099 = vmul.f32 %v1947, 0.01
      %v2100 = vmul.f32 %v1950, 0.01
      %v2101 = vmul.f32 %v1955, 0.01
      %v2102 = vmul.f32 %v1958, 0.01
      %v2103 = vmul.f32 %v1963, 0.01
      %v2104 = vmul.f32 %v1966, 0.01
      %v2105 = vmul.f32 %v1971, 0.01
      %v2106 = vmul.f32 %v1974, 0.01
      %v2107 = vmul.f32 %v1979, 0.01
      %v2108 = vmul.f32 %v1982, 0.01
      %v2109 = vmul.f32 %v1987, 0.01
      %v2110 = vmul.f32 %v1990, 0.01
      %v2111 = vmul.f32 %v1995, 0.01
      %v2112 = vmul.f32 %v1998, 0.01
      %v2113 = vmul.f32 %v2003, 0.01
      %v2114 = vmul.f32 %v2006, 0.01
      %v2115 = vmul.f32 %v2011, 0.01
      %v2116 = vmul.f32 %v2014, 0.01
      %v2117 = vmul.f32 %v2019, 0.01
      %v2118 = vmul.f32 %v2022, 0.01
      %v2119 = vmul.f32 %v2027, 0.01
      %v2120 = vmul.f32 %v2030, 0.01
      %v2121 = vmul.f32 %v2035, 0.01
      %v2122 = vmul.f32 %v2038, 0.01
      %v2123 = vmul.f32 %v2043, 0.01
      %v2124 = vmul.f32 %v2046, 0.01
      %v2125 = vmul.f32 %v2051, 0.01
      %v2126 = vmul.f32 %v2054, 0.01
      %v2127 = vmul.f32 %v2059, 0.01
      %v2128 = vmul.f32 %v2062, 0.01
      %v2129 = vsel %vm2065, %v1939, %v2097
      %v2130 = vsel %vm2066, %v1942, %v2098
      %v2131 = vsel %vm2067, %v1947, %v2099
      %v2132 = vsel %vm2068, %v1950, %v2100
      %v2133 = vsel %vm2069, %v1955, %v2101
      %v2134 = vsel %vm2070, %v1958, %v2102
      %v2135 = vsel %vm2071, %v1963, %v2103
      %v2136 = vsel %vm2072, %v1966, %v2104
      %v2137 = vsel %vm2073, %v1971, %v2105
      %v2138 = vsel %vm2074, %v1974, %v2106
      %v2139 = vsel %vm2075, %v1979, %v2107
      %v2140 = vsel %vm2076, %v1982, %v2108
      %v2141 = vsel %vm2077, %v1987, %v2109
      %v2142 = vsel %vm2078, %v1990, %v2110
      %v2143 = vsel %vm2079, %v1995, %v2111
      %v2144 = vsel %vm2080, %v1998, %v2112
      %v2145 = vsel %vm2081, %v2003, %v2113
      %v2146 = vsel %vm2082, %v2006, %v2114
      %v2147 = vsel %vm2083, %v2011, %v2115
      %v2148 = vsel %vm2084, %v2014, %v2116
      %v2149 = vsel %vm2085, %v2019, %v2117
      %v2150 = vsel %vm2086, %v2022, %v2118
      %v2151 = vsel %vm2087, %v2027, %v2119
      %v2152 = vsel %vm2088, %v2030, %v2120
      %v2153 = vsel %vm2089, %v2035, %v2121
      %v2154 = vsel %vm2090, %v2038, %v2122
      %v2155 = vsel %vm2091, %v2043, %v2123
      %v2156 = vsel %vm2092, %v2046, %v2124
      %v2157 = vsel %vm2093, %v2051, %v2125
      %v2158 = vsel %vm2094, %v2054, %v2126
      %v2159 = vsel %vm2095, %v2059, %v2127
      %v2160 = vsel %vm2096, %v2062, %v2128
      %2161 = vst [vmem:[%s283] sm:$0xff] %v2129
      %2162 = vst [vmem:[%s283 + $0x8] sm:$0xff] %v2130
      %2163 = vst [vmem:[%s283 + $0x10] sm:$0xff] %v2131
      %2164 = vst [vmem:[%s283 + $0x18] sm:$0xff] %v2132
      %2165 = vst [vmem:[%s283 + $0x20] sm:$0xff] %v2133
      %2166 = vst [vmem:[%s283 + $0x28] sm:$0xff] %v2134
      %2167 = vst [vmem:[%s283 + $0x30] sm:$0xff] %v2135
      %2168 = vst [vmem:[%s283 + $0x38] sm:$0xff] %v2136
      %2169 = vst [vmem:[%s283 + $0x40] sm:$0xff] %v2137
      %2170 = vst [vmem:[%s283 + $0x48] sm:$0xff] %v2138
      %2171 = vst [vmem:[%s283 + $0x50] sm:$0xff] %v2139
      %2172 = vst [vmem:[%s283 + $0x58] sm:$0xff] %v2140
      %2173 = vst [vmem:[%s283 + $0x60] sm:$0xff] %v2141
      %2174 = vst [vmem:[%s283 + $0x68] sm:$0xff] %v2142
      %2175 = vst [vmem:[%s283 + $0x70] sm:$0xff] %v2143
      %2176 = vst [vmem:[%s283 + $0x78] sm:$0xff] %v2144
      %2177 = vst [vmem:[%s283 + $0x80] sm:$0xff] %v2145
      %2178 = vst [vmem:[%s283 + $0x88] sm:$0xff] %v2146
      %2179 = vst [vmem:[%s283 + $0x90] sm:$0xff] %v2147
      %2180 = vst [vmem:[%s283 + $0x98] sm:$0xff] %v2148
      %2181 = vst [vmem:[%s283 + $0xa0] sm:$0xff] %v2149
      %2182 = vst [vmem:[%s283 + $0xa8] sm:$0xff] %v2150
      %2183 = vst [vmem:[%s283 + $0xb0] sm:$0xff] %v2151
      %2184 = vst [vmem:[%s283 + $0xb8] sm:$0xff] %v2152
      %2185 = vst [vmem:[%s283 + $0xc0] sm:$0xff] %v2153
      %2186 = vst [vmem:[%s283 + $0xc8] sm:$0xff] %v2154
      %2187 = vst [vmem:[%s283 + $0xd0] sm:$0xff] %v2155
      %2188 = vst [vmem:[%s283 + $0xd8] sm:$0xff] %v2156
      %2189 = vst [vmem:[%s283 + $0xe0] sm:$0xff] %v2157
      %2190 = vst [vmem:[%s283 + $0xe8] sm:$0xff] %v2158
      %2191 = vst [vmem:[%s283 + $0xf0] sm:$0xff] %v2159
      %2192 = vst [vmem:[%s283 + $0xf8] sm:$0xff] %v2160
      %s2193 = smul.u32 32, %s18
      %p2194 = scmp.lt.s32.totalorder %s2193, 63
      %s2195 = scalar_select %p2194, %s2193, 63
      %s2196 = smul.addr %s2195, 8
      %s2197 = scalar_lea.vmem %s7, %s2196
      // Predicated region
      $region49: #{baselinemlp_forward.1} parent=47 // pred_check
        %p2198 = pneg %p188
      $region50: #{baselinemlp_forward.1} parent=47 // pred_check_branch
        %2200 = sbr.rel (%p2198) target = $region52
      $region51: #{baselinemlp_forward.1} parent=47 // pred_region
        %s2201 = smul.u32 32, %s18
      $region52: #{baselinemlp_forward.1} parent=47 // pred_fallthru
        _
    $region48: #{baselinemlp_forward.1} parent=5 // pred_fallthru
      _
    %p2202 = scmp.le.s32.totalorder 2, %s13
    // Predicated region
    $region53: #{baselinemlp_forward.1} parent=5 // pred_check
      %p2203 = pneg %p2202
    $region54: #{baselinemlp_forward.1} parent=5 // pred_check_branch
      %2205 = sbr.rel (%p2203) target = $region56
    $region55: #{baselinemlp_forward.1} parent=5 // pred_region
      %s2206 = ssub.s32 %s13, 2
      // Predicated region
      $region57: #{baselinemlp_forward.1} parent=55 // pred_check
        %p2207 = pneg %p194
      $region58: #{baselinemlp_forward.1} parent=55 // pred_check_branch
        %2209 = sbr.rel (%p2207) target = $region60
      $region59: #{baselinemlp_forward.1} parent=55 // pred_region
        %s2210 = smul.u32 32, %s19
        %p2211 = scmp.lt.s32.totalorder %s2210, 63
        %s2212 = scalar_select %p2211, %s2210, 63
        %s2213 = smul.addr %s2212, 8
        %s2214 = scalar_lea.vmem %s7, %s2213
      $region60: #{baselinemlp_forward.1} parent=55 // pred_fallthru
        _
    $region56: #{baselinemlp_forward.1} parent=5 // pred_fallthru
      _
  $region6: #{baselinemlp_forward.1} parent=0 // loop_footer
    %s17 = sadd.s32 1, %s13
  $region7: #{baselinemlp_forward.1} parent=0 // loop_footer_branch
    %12 = sbr.rel target = $region3
  $region8: #{baselinemlp_forward.1} parent=0 // loop_exit
    _

</llo_original>
